<compile_context>
chip_gen: v7x
topology: tpu7x:2x2x1
jax: 0.10.0
libtpu: 0.0.40
codegen_flags: <defaults>
</compile_context>

<pallas_src>
import functools
import numpy as np
import jax
import jax.numpy as jnp
from jax.experimental import pallas as pl
from jax.experimental.pallas import tpu as pltpu

BN_EPS = 1e-5

# Single-buffer constant operands (their block never changes across the grid).
_BUFFERED_ONCE = (
    {"pipeline_mode": pl.Buffered(buffer_count=1)} if hasattr(pl, "Buffered") else {}
)


# ---------------------------------------------------------------------------
# Fused kernel: per-point MLP (chunked) + running max + classification head
# ---------------------------------------------------------------------------
def pointnet_kernel(x_ref,
                    w1_ref, t1_ref,
                    w2_ref, t2_ref,
                    w3_ref, t3_ref,
                    fw1_ref, ft1_ref,
                    fw2_ref, ft2_ref,
                    fw3_ref, fb3_ref,
                    o_ref,
                    g_ref,
                    *, bt, n_chunk, c, classes, apply_logsoftmax):
    j = pl.program_id(1)                       # point-chunk index (reduction axis)
    n_chunks = pl.num_programs(1)

    x = x_ref[...]                             # (bt*n_chunk, Cin) f32, flattened in wrapper

    # --- conv1 (1x1) + bn1 (scale folded into w1) + relu ---------------------
    if c <= 8:
        # K=Cin is tiny: explicit VPU FMAs instead of a padded K->128 MXU pass.
        h = x[:, 0:1] * w1_ref[0:1, :]
        for ci in range(1, c):
            h = h + x[:, ci:ci + 1] * w1_ref[ci:ci + 1, :]
    else:
        h = jnp.dot(x.astype(jnp.bfloat16), w1_ref[...],
                    preferred_element_type=jnp.float32)
    h = jnp.maximum(h + t1_ref[...], 0.0)      # (rows, 64)

    # --- conv2 (1x1) + bn2 (folded) + relu -----------------------------------
    h = jnp.dot(h.astype(jnp.bfloat16), w2_ref[...],
                preferred_element_type=jnp.float32)
    h = jnp.maximum(h + t2_ref[...], 0.0)      # (rows, 128)

    # --- conv3 (1x1); bn3 scale folded into w3, shift deferred past the max --
    h = jnp.dot(h.astype(jnp.bfloat16), w3_ref[...],
                preferred_element_type=jnp.float32)        # (rows, 1024)

    # --- fold this chunk into the running per-sample max ---------------------
    if bt == 1:
        cur = jnp.max(h, axis=0, keepdims=True)            # (1, 1024)
    else:
        cur = jnp.max(h.reshape(bt, n_chunk, 1024), axis=1)  # (bt, 1024)

    @pl.when(j == 0)
    def _():
        g_ref[...] = cur

    @pl.when(j > 0)
    def _():
        g_ref[...] = jnp.maximum(g_ref[...], cur)

    # --- head, once per batch tile on the last chunk step --------------------
    @pl.when(j == n_chunks - 1)
    def _():
        g = g_ref[...] + t3_ref[...]           # bn3 shift (scale>0 commutes with max)

        h1 = jnp.dot(g.astype(jnp.bfloat16), fw1_ref[...],
                     preferred_element_type=jnp.float32)
        h1 = jnp.maximum(h1 + ft1_ref[...], 0.0)           # (bt, 512)

        # dropout(p=0.3) is identity in eval mode
        h2 = jnp.dot(h1.astype(jnp.bfloat16), fw2_ref[...],
                     preferred_element_type=jnp.float32)
        h2 = jnp.maximum(h2 + ft2_ref[...], 0.0)           # (bt, 256)

        logits = jnp.dot(h2.astype(jnp.bfloat16), fw3_ref[...],
                         preferred_element_type=jnp.float32) + fb3_ref[...]
        cpad = logits.shape[-1]
        if cpad != classes:
            lane = jax.lax.broadcasted_iota(jnp.int32, logits.shape, 1)
            valid = lane < classes
        else:
            valid = None

        if apply_logsoftmax:
            masked = logits if valid is None else jnp.where(
                valid, logits, jnp.float32(-1e30))
            m = jnp.max(masked, axis=-1, keepdims=True)
            z = masked - m
            e = jnp.exp(z)
            if valid is not None:
                e = jnp.where(valid, e, 0.0)
            out = z - jnp.log(jnp.sum(e, axis=-1, keepdims=True))
        else:
            out = logits if valid is None else jnp.where(valid, logits, 0.0)

        o_ref[0] = out                                      # (bt, CPAD)


# ---------------------------------------------------------------------------
# Parameter initialization (deterministic, PyTorch-default-like)
# ---------------------------------------------------------------------------
def _linear_init(key, fan_in, fan_out):
    kw, kb = jax.random.split(key)
    bound = 1.0 / np.sqrt(fan_in)
    w = jax.random.uniform(kw, (fan_in, fan_out), jnp.float32, -bound, bound)
    b = jax.random.uniform(kb, (fan_out,), jnp.float32, -bound, bound)
    return w, b


def _fold_bn(bias):
    # BatchNorm with fresh running stats: gamma=1, beta=0, mean=0, var=1.
    # y = (x + b - mean)/sqrt(var+eps)*gamma + beta  ==>  y = x*scale + b*scale.
    # TODO(synk): folding arbitrary trained running stats would need mean/var/gamma/beta.
    scale = np.float32(1.0 / np.sqrt(1.0 + BN_EPS))
    s = jnp.full((1, bias.shape[0]), scale, jnp.float32)
    t = (bias * scale)[None, :]
    return s, t


def init_params(key, num_in_features, classes):
    ks = jax.random.split(key, 6)
    p = {}
    w, b = _linear_init(ks[0], num_in_features, 64)
    p["w1"], (p["s1"], p["t1"]) = w, _fold_bn(b)
    w, b = _linear_init(ks[1], 64, 128)
    p["w2"], (p["s2"], p["t2"]) = w, _fold_bn(b)
    w, b = _linear_init(ks[2], 128, 1024)
    p["w3"], (p["s3"], p["t3"]) = w, _fold_bn(b)
    w, b = _linear_init(ks[3], 1024, 512)
    p["fw1"], (p["fs1"], p["ft1"]) = w, _fold_bn(b)
    w, b = _linear_init(ks[4], 512, 256)
    p["fw2"], (p["fs2"], p["ft2"]) = w, _fold_bn(b)
    w, b = _linear_init(ks[5], 256, classes)
    p["fw3"], p["fb3"] = w, b[None, :]
    return p


# ---------------------------------------------------------------------------
# Fold BN scales into weights, cast MXU operands to bf16, pad fc3 lane-dense
# ---------------------------------------------------------------------------
def _fold_params(params, c, classes):
    cpad = ((classes + 127) // 128) * 128
    bf = jnp.bfloat16
    w1 = params["w1"] * params["s1"]                 # (C, 64); bn1 scale folded
    if c > 8:
        w1 = w1.astype(bf)                           # tiny-C path stays f32 (VPU FMAs)
    w2 = (params["w2"] * params["s2"]).astype(bf)
    w3 = (params["w3"] * params["s3"]).astype(bf)    # bn3 scale > 0 commutes with max
    fw1 = (params["fw1"] * params["fs1"]).astype(bf)
    fw2 = (params["fw2"] * params["fs2"]).astype(bf)
    fw3 = params["fw3"]
    fb3 = params["fb3"]
    if cpad != classes:
        fw3 = jnp.pad(fw3, ((0, 0), (0, cpad - classes)))
        fb3 = jnp.pad(fb3, ((0, 0), (0, cpad - classes)))
    fw3 = fw3.astype(bf)
    weight_args = (w1, params["t1"], w2, params["t2"], w3, params["t3"],
                   fw1, params["ft1"], fw2, params["ft2"], fw3, fb3)
    return weight_args, cpad


# ---------------------------------------------------------------------------
# Generation-aware row budget / VMEM limit and tiling selection
# ---------------------------------------------------------------------------
def _generation_defaults():
    """(rows_target, vmem_limit_bytes) per TPU generation."""
    kind = ""
    try:
        kind = jax.devices()[0].device_kind.lower()
    except Exception:
        pass
    if "v6" in kind:                 # 128 MiB physical VMEM: go big on M
        return 4096, 80 << 20
    if "v7" in kind:                 # 64 MiB physical: ~28 MiB use, 48 MiB scoped
        return 4096, 48 << 20
    if "v5" in kind:                 # v5e: lift above the 16 MiB default scoped VMEM
        return 2048, 40 << 20
    return 1024, None                # conservative default (fits 16 MiB scoped)


def _pick_tiling(B, N, rows_target):
    """Returns (bt, n_chunk, n_chunks, n_pad). rows per grid step = bt*n_chunk."""
    if N >= rows_target:
        # large point clouds: one sample per tile, chunk the point dim (running max)
        bt = 1
        n_chunks = -(-N // rows_target)
        per = -(-N // n_chunks)
        n_chunk = -(-per // 8) * 8                 # sublane-aligned chunk
    else:
        # small point clouds: fuse batch samples into the MXU M dimension
        n_chunks = 1
        n_chunk = -(-N // 8) * 8
        bt = max(1, min(B, rows_target // n_chunk))
        while bt > 1 and -(-B // bt) < 2:          # keep >=2 parallel steps (2 TCs)
            bt //= 2
        while B % bt != 0:                         # exact batch tiling
            bt -= 1
    return bt, n_chunk, n_chunks, n_chunk * n_chunks


# ---------------------------------------------------------------------------
# Forward wrapper (single pallas_call)
# ---------------------------------------------------------------------------
def classification_pointnet_forward(x_bcn, params, num_in_features, classes,
                                    softmax=True, rows_target=None):
    B, C, N = x_bcn.shape
    assert C == num_in_features

    auto_rows, vmem_limit = _generation_defaults()
    if rows_target is None:
        rows_target = auto_rows

    bt, n_chunk, n_chunks, n_pad = _pick_tiling(B, N, rows_target)
    rows = bt * n_chunk
    nbt = B // bt

    # (B, C, N) -> (B, N, C); replicate the last point (max-pool unchanged) so the
    # point dim tiles exactly; flatten wrapper-side so the kernel never reshapes
    # the sublane dim of its input block.
    x = jnp.transpose(x_bcn, (0, 2, 1)).astype(jnp.float32)
    if n_pad != N:
        x = jnp.pad(x, ((0, 0), (0, n_pad - N), (0, 0)), mode="edge")
    x2d = x.reshape(B * n_pad, C)

    weight_args, cpad = _fold_params(params, C, classes)

    def const_spec(a):
        nd = a.ndim
        return pl.BlockSpec(a.shape, lambda i, j, _nd=nd: (0,) * _nd,
                            **_BUFFERED_ONCE)

    x_spec = pl.BlockSpec((rows, C), lambda i, j, _nc=n_chunks: (i * _nc + j, 0))
    out_spec = pl.BlockSpec((1, bt, cpad), lambda i, j: (i, 0, 0))

    def _nbytes(a):
        return int(np.prod(a.shape)) * jnp.dtype(a.dtype).itemsize

    flops = (2 * B * n_pad * (C * 64 + 64 * 128 + 128 * 1024)
             + 2 * B * (1024 * 512 + 512 * 256 + 256 * cpad))
    cost = pl.CostEstimate(
        flops=int(flops),
        transcendentals=int(B * cpad),
        bytes_accessed=int(_nbytes(x2d) + sum(_nbytes(a) for a in weight_args)
                           + B * cpad * 4))

    kern = functools.partial(pointnet_kernel, bt=bt, n_chunk=n_chunk, c=C,
                             classes=classes, apply_logsoftmax=softmax)

    cp_kwargs = dict(dimension_semantics=("parallel", "arbitrary"))
    if vmem_limit is not None:
        cp_kwargs["vmem_limit_bytes"] = int(vmem_limit)

    out_pad = pl.pallas_call(
        kern,
        out_shape=jax.ShapeDtypeStruct((nbt, bt, cpad), jnp.float32),
        grid=(nbt, n_chunks),
        in_specs=[x_spec] + [const_spec(a) for a in weight_args],
        out_specs=out_spec,
        scratch_shapes=[pltpu.VMEM((bt, 1024), jnp.float32)],   # running max
        compiler_params=pltpu.CompilerParams(**cp_kwargs),
        cost_estimate=cost,
    )(x2d, *weight_args)

    out = out_pad.reshape(B, cpad)[:, :classes]

    matrix3x3 = jnp.broadcast_to(
        jnp.eye(num_in_features, dtype=jnp.float32),
        (B, num_in_features, num_in_features))
    matrix64x64 = jnp.broadcast_to(jnp.eye(64, dtype=jnp.float32), (B, 64, 64))
    return out, matrix3x3, matrix64x64


# ---------------------------------------------------------------------------
# Pure-JAX reference (same folded weights / bf16 matmul operands as the kernel)
# ---------------------------------------------------------------------------
def reference_forward(x_bcn, params, num_in_features, classes, softmax=True):
    (w1, t1, w2, t2, w3, t3, fw1, ft1, fw2, ft2, fw3, fb3), _ = _fold_params(
        params, num_in_features, classes)
    B, C, N = x_bcn.shape
    x = jnp.transpose(x_bcn, (0, 2, 1)).astype(jnp.float32).reshape(B * N, C)

    def mm(a, w):
        return jnp.dot(a.astype(jnp.bfloat16), w, preferred_element_type=jnp.float32)

    h = jnp.dot(x, w1) if C <= 8 else mm(x, w1)
    h = jnp.maximum(h + t1, 0.0)
    h = jnp.maximum(mm(h, w2) + t2, 0.0)
    h = mm(h, w3)
    g = jnp.max(h.reshape(B, N, 1024), axis=1) + t3
    h = jnp.maximum(mm(g, fw1) + ft1, 0.0)
    h = jnp.maximum(mm(h, fw2) + ft2, 0.0)
    logits = (mm(h, fw3) + fb3)[:, :classes]
    out = jax.nn.log_softmax(logits, axis=-1) if softmax else logits
    m3 = jnp.broadcast_to(jnp.eye(num_in_features, dtype=jnp.float32),
                          (B, num_in_features, num_in_features))
    m64 = jnp.broadcast_to(jnp.eye(64, dtype=jnp.float32), (B, 64, 64))
    return out, m3, m64


if __name__ == "__main__":
    key = jax.random.PRNGKey(0)
    k_x, k_p, k_x2 = jax.random.split(key, 3)

    B, C_IN, N_POINTS, CLASSES = 2, 3, 32, 10
    x = jax.random.normal(k_x, (B, C_IN, N_POINTS), jnp.float32)   # (B, C, N) like Conv1d
    params = init_params(k_p, C_IN, CLASSES)

    fwd_lp = jax.jit(lambda xx, pp: classification_pointnet_forward(
        xx, pp, num_in_features=C_IN, classes=CLASSES, softmax=True))
    fwd_logits = jax.jit(lambda xx, pp: classification_pointnet_forward(
        xx, pp, num_in_features=C_IN, classes=CLASSES, softmax=False))
    fwd_lp_chunked = jax.jit(lambda xx, pp: classification_pointnet_forward(
        xx, pp, num_in_features=C_IN, classes=CLASSES, softmax=True, rows_target=16))

    log_probs, m3, m64 = fwd_lp(x, params)
    logits, _, _ = fwd_logits(x, params)
    lp_chunked, _, _ = fwd_lp_chunked(x, params)
    jax.block_until_ready((log_probs, logits, lp_chunked, m3, m64))

    assert log_probs.shape == (B, CLASSES)
    assert logits.shape == (B, CLASSES)
    assert m3.shape == (B, C_IN, C_IN)
    assert m64.shape == (B, 64, 64)
    # log_softmax rows must exp-sum to 1
    assert np.allclose(np.exp(np.asarray(log_probs)).sum(-1), 1.0, atol=1e-4)

    # compare against the pure-JAX reference (identical folded weights / bf16 dots)
    ref_lp, _, _ = reference_forward(x, params, C_IN, CLASSES, softmax=True)
    ref_logits, _, _ = reference_forward(x, params, C_IN, CLASSES, softmax=False)
    assert np.allclose(np.asarray(log_probs), np.asarray(ref_lp), atol=5e-3)
    assert np.allclose(np.asarray(logits), np.asarray(ref_logits), atol=5e-3)
    # chunked running-max path must match the single-chunk path
    assert np.allclose(np.asarray(lp_chunked), np.asarray(log_probs), atol=1e-4)

    # batch-tiled (bt>1) + edge-padded point dim (N not a multiple of 8), plus a
    # chunked + padded variant of the same input
    B2, N2 = 4, 20
    x2 = jax.random.normal(k_x2, (B2, C_IN, N2), jnp.float32)
    lp2, _, _ = fwd_lp(x2, params)
    lp2_chunked, _, _ = jax.jit(lambda xx, pp: classification_pointnet_forward(
        xx, pp, num_in_features=C_IN, classes=CLASSES, softmax=True,
        rows_target=8))(x2, params)
    jax.block_until_ready((lp2, lp2_chunked))
    ref2, _, _ = reference_forward(x2, params, C_IN, CLASSES, softmax=True)
    assert np.allclose(np.asarray(lp2), np.asarray(ref2), atol=5e-3)
    assert np.allclose(np.asarray(lp2_chunked), np.asarray(ref2), atol=5e-3)

    print("KERNEL_OK")
</pallas_src>

<mosaic_0001>
module attributes {stable_mosaic.version = 11 : i64} {
  func.func @pointnet_kernel(%arg0: i32, %arg1: i32, %arg2: memref<32x3xf32, #tpu.memory_space<vmem>>, %arg3: memref<3x64xf32, #tpu.memory_space<vmem>>, %arg4: memref<1x64xf32, #tpu.memory_space<vmem>>, %arg5: memref<64x128xbf16, #tpu.memory_space<vmem>>, %arg6: memref<1x128xf32, #tpu.memory_space<vmem>>, %arg7: memref<128x1024xbf16, #tpu.memory_space<vmem>>, %arg8: memref<1x1024xf32, #tpu.memory_space<vmem>>, %arg9: memref<1024x512xbf16, #tpu.memory_space<vmem>>, %arg10: memref<1x512xf32, #tpu.memory_space<vmem>>, %arg11: memref<512x256xbf16, #tpu.memory_space<vmem>>, %arg12: memref<1x256xf32, #tpu.memory_space<vmem>>, %arg13: memref<256x128xbf16, #tpu.memory_space<vmem>>, %arg14: memref<1x128xf32, #tpu.memory_space<vmem>>, %arg15: memref<1x1x128xf32, #tpu.memory_space<vmem>>, %arg16: memref<1x1024xf32, #tpu.memory_space<vmem>>) attributes {dimension_semantics = [#tpu.dimension_semantics<parallel>, #tpu.dimension_semantics<arbitrary>], iteration_bounds = array<i64: 2, 1>, scalar_prefetch = 0 : i64, scratch_operands = 1 : i64, tpu.core_type = #tpu.core_type<tc>, window_params = [{transform_indices = @transform_0, window_bounds = array<i64: 32, 3>}, {pipeline_mode = #tpu.pipeline_mode<synchronous>, transform_indices = @transform_1, window_bounds = array<i64: 3, 64>}, {pipeline_mode = #tpu.pipeline_mode<synchronous>, transform_indices = @transform_2, window_bounds = array<i64: 1, 64>}, {pipeline_mode = #tpu.pipeline_mode<synchronous>, transform_indices = @transform_3, window_bounds = array<i64: 64, 128>}, {pipeline_mode = #tpu.pipeline_mode<synchronous>, transform_indices = @transform_4, window_bounds = array<i64: 1, 128>}, {pipeline_mode = #tpu.pipeline_mode<synchronous>, transform_indices = @transform_5, window_bounds = array<i64: 128, 1024>}, {pipeline_mode = #tpu.pipeline_mode<synchronous>, transform_indices = @transform_6, window_bounds = array<i64: 1, 1024>}, {pipeline_mode = #tpu.pipeline_mode<synchronous>, transform_indices = @transform_7, window_bounds = array<i64: 1024, 512>}, {pipeline_mode = #tpu.pipeline_mode<synchronous>, transform_indices = @transform_8, window_bounds = array<i64: 1, 512>}, {pipeline_mode = #tpu.pipeline_mode<synchronous>, transform_indices = @transform_9, window_bounds = array<i64: 512, 256>}, {pipeline_mode = #tpu.pipeline_mode<synchronous>, transform_indices = @transform_10, window_bounds = array<i64: 1, 256>}, {pipeline_mode = #tpu.pipeline_mode<synchronous>, transform_indices = @transform_11, window_bounds = array<i64: 256, 128>}, {pipeline_mode = #tpu.pipeline_mode<synchronous>, transform_indices = @transform_12, window_bounds = array<i64: 1, 128>}, {transform_indices = @transform_13, window_bounds = array<i64: 1, 1, 128>}]} {
    %c0 = arith.constant 0 : index
    %c0_0 = arith.constant 0 : index
    %0 = vector.load %arg2[%c0, %c0_0] : memref<32x3xf32, #tpu.memory_space<vmem>>, vector<32x3xf32>
    %1 = vector.extract_strided_slice %0 {offsets = [0, 0], sizes = [32, 1], strides = [1, 1]} : vector<32x3xf32> to vector<32x1xf32>
    %c0_1 = arith.constant 0 : index
    %c0_2 = arith.constant 0 : index
    %2 = vector.load %arg3[%c0_1, %c0_2] : memref<3x64xf32, #tpu.memory_space<vmem>>, vector<1x64xf32>
    %3 = vector.broadcast %1 : vector<32x1xf32> to vector<32x64xf32>
    %4 = vector.broadcast %2 : vector<1x64xf32> to vector<32x64xf32>
    %5 = arith.mulf %3, %4 : vector<32x64xf32>
    %6 = vector.extract_strided_slice %0 {offsets = [0, 1], sizes = [32, 1], strides = [1, 1]} : vector<32x3xf32> to vector<32x1xf32>
    %c1 = arith.constant 1 : index
    %c0_3 = arith.constant 0 : index
    %7 = vector.load %arg3[%c1, %c0_3] : memref<3x64xf32, #tpu.memory_space<vmem>>, vector<1x64xf32>
    %8 = vector.broadcast %6 : vector<32x1xf32> to vector<32x64xf32>
    %9 = vector.broadcast %7 : vector<1x64xf32> to vector<32x64xf32>
    %10 = arith.mulf %8, %9 : vector<32x64xf32>
    %11 = arith.addf %5, %10 : vector<32x64xf32>
    %12 = vector.extract_strided_slice %0 {offsets = [0, 2], sizes = [32, 1], strides = [1, 1]} : vector<32x3xf32> to vector<32x1xf32>
    %c2 = arith.constant 2 : index
    %c0_4 = arith.constant 0 : index
    %13 = vector.load %arg3[%c2, %c0_4] : memref<3x64xf32, #tpu.memory_space<vmem>>, vector<1x64xf32>
    %14 = vector.broadcast %12 : vector<32x1xf32> to vector<32x64xf32>
    %15 = vector.broadcast %13 : vector<1x64xf32> to vector<32x64xf32>
    %16 = arith.mulf %14, %15 : vector<32x64xf32>
    %17 = arith.addf %11, %16 : vector<32x64xf32>
    %c0_5 = arith.constant 0 : index
    %c0_6 = arith.constant 0 : index
    %18 = vector.load %arg4[%c0_5, %c0_6] : memref<1x64xf32, #tpu.memory_space<vmem>>, vector<1x64xf32>
    %19 = vector.broadcast %18 : vector<1x64xf32> to vector<32x64xf32>
    %20 = arith.addf %17, %19 : vector<32x64xf32>
    %cst = arith.constant 0.000000e+00 : f32
    %21 = vector.broadcast %cst : f32 to vector<32x64xf32>
    %22 = arith.maximumf %20, %21 : vector<32x64xf32>
    %23 = arith.truncf %22 : vector<32x64xf32> to vector<32x64xbf16>
    %c0_7 = arith.constant 0 : index
    %c0_8 = arith.constant 0 : index
    %24 = vector.load %arg5[%c0_7, %c0_8] : memref<64x128xbf16, #tpu.memory_space<vmem>>, vector<64x128xbf16>
    %cst_9 = arith.constant dense<0.000000e+00> : vector<32x128xf32>
    %25 = tpu.matmul %23, %24, %cst_9 {dimension_numbers = #tpu.dot_dimension_numbers<[1], [0], [0], [1], [0, 0, 1, 1], [], []>} : vector<32x64xbf16>, vector<64x128xbf16>, vector<32x128xf32> -> vector<32x128xf32>
    %c0_10 = arith.constant 0 : index
    %c0_11 = arith.constant 0 : index
    %26 = vector.load %arg6[%c0_10, %c0_11] : memref<1x128xf32, #tpu.memory_space<vmem>>, vector<1x128xf32>
    %27 = vector.broadcast %26 : vector<1x128xf32> to vector<32x128xf32>
    %28 = arith.addf %25, %27 : vector<32x128xf32>
    %cst_12 = arith.constant 0.000000e+00 : f32
    %29 = vector.broadcast %cst_12 : f32 to vector<32x128xf32>
    %30 = arith.maximumf %28, %29 : vector<32x128xf32>
    %31 = arith.truncf %30 : vector<32x128xf32> to vector<32x128xbf16>
    %c0_13 = arith.constant 0 : index
    %c0_14 = arith.constant 0 : index
    %32 = vector.load %arg7[%c0_13, %c0_14] : memref<128x1024xbf16, #tpu.memory_space<vmem>>, vector<128x1024xbf16>
    %cst_15 = arith.constant dense<0.000000e+00> : vector<32x1024xf32>
    %33 = tpu.matmul %31, %32, %cst_15 {dimension_numbers = #tpu.dot_dimension_numbers<[1], [0], [0], [1], [0, 0, 1, 1], [], []>} : vector<32x128xbf16>, vector<128x1024xbf16>, vector<32x1024xf32> -> vector<32x1024xf32>
    %cst_16 = arith.constant dense<0xFF800000> : vector<1024xf32>
    %34 = vector.multi_reduction <maximumf>, %33, %cst_16 [0] : vector<32x1024xf32> to vector<1024xf32>
    %35 = vector.shape_cast %34 : vector<1024xf32> to vector<1x1024xf32>
    %c0_i32 = arith.constant 0 : i32
    %36 = arith.cmpi eq, %arg1, %c0_i32 : i32
    %37 = arith.extui %36 : i1 to i32
    %c0_i32_17 = arith.constant 0 : i32
    %38 = arith.cmpi ne, %37, %c0_i32_17 : i32
    scf.if %38 {
      %c0_22 = arith.constant 0 : index
      %c0_23 = arith.constant 0 : index
      %45 = vector.load %arg16[%c0_22, %c0_23] : memref<1x1024xf32, #tpu.memory_space<vmem>>, vector<1x1024xf32>
      tpu.vector_store %arg16[%c0_22, %c0_23], %35 {strides = array<i32>} : memref<1x1024xf32, #tpu.memory_space<vmem>>, vector<1x1024xf32>,
    } else {
    }
    %c0_i32_18 = arith.constant 0 : i32
    %39 = arith.cmpi sgt, %arg1, %c0_i32_18 : i32
    %40 = arith.extui %39 : i1 to i32
    %c0_i32_19 = arith.constant 0 : i32
    %41 = arith.cmpi ne, %40, %c0_i32_19 : i32
    scf.if %41 {
      %c0_22 = arith.constant 0 : index
      %c0_23 = arith.constant 0 : index
      %45 = vector.load %arg16[%c0_22, %c0_23] : memref<1x1024xf32, #tpu.memory_space<vmem>>, vector<1x1024xf32>
      %46 = arith.maximumf %45, %35 : vector<1x1024xf32>
      %c0_24 = arith.constant 0 : index
      %c0_25 = arith.constant 0 : index
      %47 = vector.load %arg16[%c0_24, %c0_25] : memref<1x1024xf32, #tpu.memory_space<vmem>>, vector<1x1024xf32>
      tpu.vector_store %arg16[%c0_24, %c0_25], %46 {strides = array<i32>} : memref<1x1024xf32, #tpu.memory_space<vmem>>, vector<1x1024xf32>,
    } else {
    }
    %c0_i32_20 = arith.constant 0 : i32
    %42 = arith.cmpi eq, %arg1, %c0_i32_20 : i32
    %43 = arith.extui %42 : i1 to i32
    %c0_i32_21 = arith.constant 0 : i32
    %44 = arith.cmpi ne, %43, %c0_i32_21 : i32
    scf.if %44 {
      %c0_22 = arith.constant 0 : index
      %c0_23 = arith.constant 0 : index
      %45 = vector.load %arg16[%c0_22, %c0_23] : memref<1x1024xf32, #tpu.memory_space<vmem>>, vector<1x1024xf32>
      %c0_24 = arith.constant 0 : index
      %c0_25 = arith.constant 0 : index
      %46 = vector.load %arg8[%c0_24, %c0_25] : memref<1x1024xf32, #tpu.memory_space<vmem>>, vector<1x1024xf32>
      %47 = arith.addf %45, %46 : vector<1x1024xf32>
      %48 = arith.truncf %47 : vector<1x1024xf32> to vector<1x1024xbf16>
      %c0_26 = arith.constant 0 : index
      %c0_27 = arith.constant 0 : index
      %49 = vector.load %arg9[%c0_26, %c0_27] : memref<1024x512xbf16, #tpu.memory_space<vmem>>, vector<1024x512xbf16>
      %cst_28 = arith.constant dense<0.000000e+00> : vector<1x512xf32>
      %50 = tpu.matmul %48, %49, %cst_28 {dimension_numbers = #tpu.dot_dimension_numbers<[1], [0], [0], [1], [0, 0, 1, 1], [], []>} : vector<1x1024xbf16>, vector<1024x512xbf16>, vector<1x512xf32> -> vector<1x512xf32>
      %c0_29 = arith.constant 0 : index
      %c0_30 = arith.constant 0 : index
      %51 = vector.load %arg10[%c0_29, %c0_30] : memref<1x512xf32, #tpu.memory_space<vmem>>, vector<1x512xf32>
      %52 = arith.addf %50, %51 : vector<1x512xf32>
      %cst_31 = arith.constant 0.000000e+00 : f32
      %53 = vector.broadcast %cst_31 : f32 to vector<1x512xf32>
      %54 = arith.maximumf %52, %53 : vector<1x512xf32>
      %55 = arith.truncf %54 : vector<1x512xf32> to vector<1x512xbf16>
      %c0_32 = arith.constant 0 : index
      %c0_33 = arith.constant 0 : index
      %56 = vector.load %arg11[%c0_32, %c0_33] : memref<512x256xbf16, #tpu.memory_space<vmem>>, vector<512x256xbf16>
      %cst_34 = arith.constant dense<0.000000e+00> : vector<1x256xf32>
      %57 = tpu.matmul %55, %56, %cst_34 {dimension_numbers = #tpu.dot_dimension_numbers<[1], [0], [0], [1], [0, 0, 1, 1], [], []>} : vector<1x512xbf16>, vector<512x256xbf16>, vector<1x256xf32> -> vector<1x256xf32>
      %c0_35 = arith.constant 0 : index
      %c0_36 = arith.constant 0 : index
      %58 = vector.load %arg12[%c0_35, %c0_36] : memref<1x256xf32, #tpu.memory_space<vmem>>, vector<1x256xf32>
      %59 = arith.addf %57, %58 : vector<1x256xf32>
      %cst_37 = arith.constant 0.000000e+00 : f32
      %60 = vector.broadcast %cst_37 : f32 to vector<1x256xf32>
      %61 = arith.maximumf %59, %60 : vector<1x256xf32>
      %62 = arith.truncf %61 : vector<1x256xf32> to vector<1x256xbf16>
      %c0_38 = arith.constant 0 : index
      %c0_39 = arith.constant 0 : index
      %63 = vector.load %arg13[%c0_38, %c0_39] : memref<256x128xbf16, #tpu.memory_space<vmem>>, vector<256x128xbf16>
      %cst_40 = arith.constant dense<0.000000e+00> : vector<1x128xf32>
      %64 = tpu.matmul %62, %63, %cst_40 {dimension_numbers = #tpu.dot_dimension_numbers<[1], [0], [0], [1], [0, 0, 1, 1], [], []>} : vector<1x256xbf16>, vector<256x128xbf16>, vector<1x128xf32> -> vector<1x128xf32>
      %c0_41 = arith.constant 0 : index
      %c0_42 = arith.constant 0 : index
      %65 = vector.load %arg14[%c0_41, %c0_42] : memref<1x128xf32, #tpu.memory_space<vmem>>, vector<1x128xf32>
      %66 = arith.addf %64, %65 : vector<1x128xf32>
      %67 = tpu.iota {dimensions = array<i32: 1>} : vector<1x128xi32>
      %c10_i32 = arith.constant 10 : i32
      %68 = vector.broadcast %c10_i32 : i32 to vector<1x128xi32>
      %69 = arith.cmpi slt, %67, %68 : vector<1x128xi32>
      %cst_43 = arith.constant -1.000000e+30 : f32
      %70 = vector.broadcast %cst_43 : f32 to vector<1x128xf32>
      %71 = arith.select %69, %66, %70 : vector<1x128xi1>, vector<1x128xf32>
      %cst_44 = arith.constant dense<0xFF800000> : vector<1xf32>
      %72 = vector.multi_reduction <maximumf>, %71, %cst_44 [1] : vector<1x128xf32> to vector<1xf32>
      %73 = vector.shape_cast %72 : vector<1xf32> to vector<1x1xf32>
      %74 = vector.broadcast %73 : vector<1x1xf32> to vector<1x128xf32>
      %75 = arith.subf %71, %74 : vector<1x128xf32>
      %76 = math.exp %75 : vector<1x128xf32>
      %cst_45 = arith.constant 0.000000e+00 : f32
      %77 = vector.broadcast %cst_45 : f32 to vector<1x128xf32>
      %78 = arith.select %69, %76, %77 : vector<1x128xi1>, vector<1x128xf32>
      %cst_46 = arith.constant dense<0.000000e+00> : vector<1xf32>
      %79 = vector.multi_reduction <add>, %78, %cst_46 [1] : vector<1x128xf32> to vector<1xf32>
      %80 = vector.shape_cast %79 : vector<1xf32> to vector<1x1xf32>
      %81 = math.log %80 : vector<1x1xf32>
      %82 = vector.broadcast %81 : vector<1x1xf32> to vector<1x128xf32>
      %83 = arith.subf %75, %82 : vector<1x128xf32>
      %c0_47 = arith.constant 0 : index
      %c0_48 = arith.constant 0 : index
      %c0_49 = arith.constant 0 : index
      %84 = vector.load %arg15[%c0_47, %c0_48, %c0_49] : memref<1x1x128xf32, #tpu.memory_space<vmem>>, vector<1x1x128xf32>
      %85 = vector.shape_cast %84 : vector<1x1x128xf32> to vector<1x128xf32>
      %86 = vector.shape_cast %83 : vector<1x128xf32> to vector<1x1x128xf32>
      tpu.vector_store %arg15[%c0_47, %c0_48, %c0_49], %86 {strides = array<i32>} : memref<1x1x128xf32, #tpu.memory_space<vmem>>, vector<1x1x128xf32>,
    } else {
    }
    return
  }
  func.func @transform_0(%arg0: i32, %arg1: i32) -> (i32, i32) {
    %c1_i32 = arith.constant 1 : i32
    %0 = arith.muli %arg0, %c1_i32 : i32
    %1 = arith.addi %0, %arg1 : i32
    %c0_i32 = arith.constant 0 : i32
    %c0_i32_0 = arith.constant 0 : i32
    return %1, %c0_i32 : i32, i32
  }
  func.func @transform_1(%arg0: i32, %arg1: i32) -> (i32, i32) {
    %c0_i32 = arith.constant 0 : i32
    %c0_i32_0 = arith.constant 0 : i32
    %c0_i32_1 = arith.constant 0 : i32
    return %c0_i32, %c0_i32_0 : i32, i32
  }
  func.func @transform_2(%arg0: i32, %arg1: i32) -> (i32, i32) {
    %c0_i32 = arith.constant 0 : i32
    %c0_i32_0 = arith.constant 0 : i32
    %c0_i32_1 = arith.constant 0 : i32
    return %c0_i32, %c0_i32_0 : i32, i32
  }
  func.func @transform_3(%arg0: i32, %arg1: i32) -> (i32, i32) {
    %c0_i32 = arith.constant 0 : i32
    %c0_i32_0 = arith.constant 0 : i32
    %c0_i32_1 = arith.constant 0 : i32
    return %c0_i32, %c0_i32_0 : i32, i32
  }
  func.func @transform_4(%arg0: i32, %arg1: i32) -> (i32, i32) {
    %c0_i32 = arith.constant 0 : i32
    %c0_i32_0 = arith.constant 0 : i32
    %c0_i32_1 = arith.constant 0 : i32
    return %c0_i32, %c0_i32_0 : i32, i32
  }
  func.func @transform_5(%arg0: i32, %arg1: i32) -> (i32, i32) {
    %c0_i32 = arith.constant 0 : i32
    %c0_i32_0 = arith.constant 0 : i32
    %c0_i32_1 = arith.constant 0 : i32
    return %c0_i32, %c0_i32_0 : i32, i32
  }
  func.func @transform_6(%arg0: i32, %arg1: i32) -> (i32, i32) {
    %c0_i32 = arith.constant 0 : i32
    %c0_i32_0 = arith.constant 0 : i32
    %c0_i32_1 = arith.constant 0 : i32
    return %c0_i32, %c0_i32_0 : i32, i32
  }
  func.func @transform_7(%arg0: i32, %arg1: i32) -> (i32, i32) {
    %c0_i32 = arith.constant 0 : i32
    %c0_i32_0 = arith.constant 0 : i32
    %c0_i32_1 = arith.constant 0 : i32
    return %c0_i32, %c0_i32_0 : i32, i32
  }
  func.func @transform_8(%arg0: i32, %arg1: i32) -> (i32, i32) {
    %c0_i32 = arith.constant 0 : i32
    %c0_i32_0 = arith.constant 0 : i32
    %c0_i32_1 = arith.constant 0 : i32
    return %c0_i32, %c0_i32_0 : i32, i32
  }
  func.func @transform_9(%arg0: i32, %arg1: i32) -> (i32, i32) {
    %c0_i32 = arith.constant 0 : i32
    %c0_i32_0 = arith.constant 0 : i32
    %c0_i32_1 = arith.constant 0 : i32
    return %c0_i32, %c0_i32_0 : i32, i32
  }
  func.func @transform_10(%arg0: i32, %arg1: i32) -> (i32, i32) {
    %c0_i32 = arith.constant 0 : i32
    %c0_i32_0 = arith.constant 0 : i32
    %c0_i32_1 = arith.constant 0 : i32
    return %c0_i32, %c0_i32_0 : i32, i32
  }
  func.func @transform_11(%arg0: i32, %arg1: i32) -> (i32, i32) {
    %c0_i32 = arith.constant 0 : i32
    %c0_i32_0 = arith.constant 0 : i32
    %c0_i32_1 = arith.constant 0 : i32
    return %c0_i32, %c0_i32_0 : i32, i32
  }
  func.func @transform_12(%arg0: i32, %arg1: i32) -> (i32, i32) {
    %c0_i32 = arith.constant 0 : i32
    %c0_i32_0 = arith.constant 0 : i32
    %c0_i32_1 = arith.constant 0 : i32
    return %c0_i32, %c0_i32_0 : i32, i32
  }
  func.func @transform_13(%arg0: i32, %arg1: i32) -> (i32, i32, i32) {
    %c0_i32 = arith.constant 0 : i32
    %c0_i32_0 = arith.constant 0 : i32
    %c0_i32_1 = arith.constant 0 : i32
    return %arg0, %c0_i32, %c0_i32_0 : i32, i32, i32
  }
}

</mosaic_0001>

<llo_original>
// kernel: _lambda_.1
$region0: #{_lambda_.1}
  #allocation0 [shape = 'u32[]', space=smem, size = 0x4, offset = 0x4, fixed_abs, tag = 'smem constant byte address 0x4 - core index']
  #allocation1 [shape = 'u32[144,128]{1,0:T(1,128)}', space=vmem, size = 0x12000, scoped, tag = 'internal scratch']
  #allocation2 [shape = 'f32[1,1024]{1,0:T(1,128)}', space=vmem, size = 0x1000, scoped, tag = 'scratch operand']
  %s0 = inlined_call_operand.vmem [shape: f32[64,3], index: 0, kind: input, shape index: {}]
  %s1 = inlined_call_operand.vmem [shape: f32[3,64], index: 1, kind: input, shape index: {}]
  %s2 = inlined_call_operand.vmem [shape: f32[1,64], index: 2, kind: input, shape index: {}]
  %s3 = inlined_call_operand.vmem [shape: bf16[64,128], index: 3, kind: input, shape index: {}]
  %s4 = inlined_call_operand.vmem [shape: f32[1,128], index: 4, kind: input, shape index: {}]
  %s5 = inlined_call_operand.vmem [shape: bf16[128,1024], index: 5, kind: input, shape index: {}]
  %s6 = inlined_call_operand.vmem [shape: f32[1,1024], index: 6, kind: input, shape index: {}]
  %s7 = inlined_call_operand.vmem [shape: bf16[1024,512], index: 7, kind: input, shape index: {}]
  %s8 = inlined_call_operand.vmem [shape: f32[1,512], index: 8, kind: input, shape index: {}]
  %s9 = inlined_call_operand.vmem [shape: bf16[512,256], index: 9, kind: input, shape index: {}]
  %s10 = inlined_call_operand.vmem [shape: f32[1,256], index: 10, kind: input, shape index: {}]
  %s11 = inlined_call_operand.vmem [shape: bf16[256,128], index: 11, kind: input, shape index: {}]
  %s12 = inlined_call_operand.vmem [shape: f32[1,128], index: 12, kind: input, shape index: {}]
  %s13 = inlined_call_operand.hbm [shape: f32[2,1,128], index: 13, kind: output, shape index: {}]
  %s14 = sld [smem:[#allocation0]]
  $region97: #{_lambda_.1} parent=0
    _
  %s16 = ssub.s32 1, %s14
  %s17 = scalar_select 0, %s16, %s14
  $region1: #{_lambda_.1} parent=0
    #allocation3 [shape = 'u8[1024]{0}', space=vmem, size = 0x400, scoped, tag = 'output window, operand 0']
    #allocation4 [shape = 's32[2]{0}', space=sflag, size = 0x8, scoped, tag = 'scoped memory for _lambda_.1']
    %18 = vsyncpa [#allocation4], 0
    %s19 = scalar_lea.sflag [#allocation4], 1
    %20 = vsyncpa %s19, 0
    loop: start=0, step=1, limit=4
    $region2: #{_lambda_.1} parent=1 // loop_pre_header
      _
    $region3: #{_lambda_.1} parent=1 // loop_header
      %s22 = sphi 0, %s26
      %p23 = scmp.ge.s32.totalorder %s22, 4
      %s29 = sphi 0, %s41
      %s30 = sphi 0, %s37
      %s31 = sphi 0, %s29
      %s32 = sphi 0, %s30
      %s33 = sphi 0, %s31
      %s34 = sphi 0, %s32
      %s46 = sphi 0, %s48
      %s49 = sphi 0, %s46
      %s50 = sphi 0, %s49
      %s66 = sphi 0, %s50
      %s70 = sphi 0, %s70
      %s72 = sphi 0, %s70
      %s73 = sphi 0, %s72
      %s87 = sphi 0, %s73
      %s91 = sphi 0, %s91
      %s93 = sphi 0, %s91
      %s94 = sphi 0, %s93
      %s108 = sphi 0, %s94
      %s112 = sphi 0, %s112
      %s114 = sphi 0, %s112
      %s115 = sphi 0, %s114
      %s129 = sphi 0, %s115
      %s133 = sphi 0, %s133
      %s135 = sphi 0, %s133
      %s136 = sphi 0, %s135
      %s150 = sphi 0, %s136
      %s154 = sphi 0, %s154
      %s156 = sphi 0, %s154
      %s157 = sphi 0, %s156
      %s171 = sphi 0, %s157
      %s175 = sphi 0, %s175
      %s177 = sphi 0, %s175
      %s178 = sphi 0, %s177
      %s192 = sphi 0, %s178
      %s196 = sphi 0, %s196
      %s198 = sphi 0, %s196
      %s199 = sphi 0, %s198
      %s213 = sphi 0, %s199
      %s217 = sphi 0, %s217
      %s219 = sphi 0, %s217
      %s220 = sphi 0, %s219
      %s234 = sphi 0, %s220
      %s238 = sphi 0, %s238
      %s240 = sphi 0, %s238
      %s241 = sphi 0, %s240
      %s255 = sphi 0, %s241
      %s259 = sphi 0, %s259
      %s261 = sphi 0, %s259
      %s262 = sphi 0, %s261
      %s276 = sphi 0, %s262
      %s280 = sphi 0, %s280
      %s282 = sphi 0, %s280
      %s283 = sphi 0, %s282
      %s297 = sphi 0, %s283
      %s301 = sphi 0, %s301
      %s303 = sphi 0, %s301
      %s304 = sphi 0, %s303
      %s318 = sphi 0, %s304
      %s324 = sphi 0, %s326
      %s327 = sphi 0, %s324
      %s328 = sphi 0, %s327
      %s344 = sphi 0, %s328
    $region4: #{_lambda_.1} parent=1 // loop_header_branch
      %25 = sbr.rel (%p23) target = $region8
    $region5: #{_lambda_.1} parent=1 // loop_body
      %s27 = ssub.s32 %s22, 1
      %s28 = ssub.s32 %s22, 2
      %s35 = sadd.s32 1, %s30
      %p36 = scmp.ge.s32.totalorder %s35, 1
      %s37 = scalar_select %p36, 0, %s35
      %s38 = sadd.s32 1, %s29
      %s39 = scalar_select %p36, %s38, %s29
      %p40 = scmp.ge.s32.totalorder %s39, 2
      %s41 = scalar_select %p40, 0, %s39
      %s42 = sadd.s32 %s29, %s30
      %s43 = sadd.s32 %s41, %s37
      %s44 = ssub.s32 %s42, %s43
      %p45 = scmp.eq.s32.totalorder %s44, 0
      %s47 = sadd.s32 %s46, 1
      %s48 = scalar_select %p45, %s46, %s47
      %p51 = pneg %p45
      %p52 = scmp.eq.s32.totalorder %s22, 1
      %p53 = por %p51, %p52
      %p54 = scmp.ne.s32.totalorder %s46, %s49
      %p55 = scmp.eq.s32.totalorder %s22, 0
      %p56 = por %p54, %p55
      %p57 = scmp.ne.s32.totalorder %s46, %s49
      %p58 = scmp.eq.s32.totalorder %s27, 1
      %p59 = por %p57, %p58
      %p60 = scmp.ne.s32.totalorder %s49, %s50
      %p61 = scmp.eq.s32.totalorder %s27, 0
      %p62 = por %p60, %p61
      %p63 = scmp.ne.s32.totalorder %s49, %s50
      %p64 = scmp.eq.s32.totalorder %s28, 1
      %p65 = por %p63, %p64
      %p67 = scmp.ne.s32.totalorder %s50, %s66
      %p68 = scmp.eq.s32.totalorder %s28, 0
      %p69 = por %p67, %p68
      %s71 = sadd.s32 %s70, 1
      %p74 = scmp.eq.s32.totalorder %s22, 1
      %p75 = scmp.ne.s32.totalorder %s70, %s72
      %p76 = scmp.eq.s32.totalorder %s22, 0
      %p77 = por %p75, %p76
      %p78 = scmp.ne.s32.totalorder %s70, %s72
      %p79 = scmp.eq.s32.totalorder %s27, 1
      %p80 = por %p78, %p79
      %p81 = scmp.ne.s32.totalorder %s72, %s73
      %p82 = scmp.eq.s32.totalorder %s27, 0
      %p83 = por %p81, %p82
      %p84 = scmp.ne.s32.totalorder %s72, %s73
      %p85 = scmp.eq.s32.totalorder %s28, 1
      %p86 = por %p84, %p85
      %p88 = scmp.ne.s32.totalorder %s73, %s87
      %p89 = scmp.eq.s32.totalorder %s28, 0
      %p90 = por %p88, %p89
      %s92 = sadd.s32 %s91, 1
      %p95 = scmp.eq.s32.totalorder %s22, 1
      %p96 = scmp.ne.s32.totalorder %s91, %s93
      %p97 = scmp.eq.s32.totalorder %s22, 0
      %p98 = por %p96, %p97
      %p99 = scmp.ne.s32.totalorder %s91, %s93
      %p100 = scmp.eq.s32.totalorder %s27, 1
      %p101 = por %p99, %p100
      %p102 = scmp.ne.s32.totalorder %s93, %s94
      %p103 = scmp.eq.s32.totalorder %s27, 0
      %p104 = por %p102, %p103
      %p105 = scmp.ne.s32.totalorder %s93, %s94
      %p106 = scmp.eq.s32.totalorder %s28, 1
      %p107 = por %p105, %p106
      %p109 = scmp.ne.s32.totalorder %s94, %s108
      %p110 = scmp.eq.s32.totalorder %s28, 0
      %p111 = por %p109, %p110
      %s113 = sadd.s32 %s112, 1
      %p116 = scmp.eq.s32.totalorder %s22, 1
      %p117 = scmp.ne.s32.totalorder %s112, %s114
      %p118 = scmp.eq.s32.totalorder %s22, 0
      %p119 = por %p117, %p118
      %p120 = scmp.ne.s32.totalorder %s112, %s114
      %p121 = scmp.eq.s32.totalorder %s27, 1
      %p122 = por %p120, %p121
      %p123 = scmp.ne.s32.totalorder %s114, %s115
      %p124 = scmp.eq.s32.totalorder %s27, 0
      %p125 = por %p123, %p124
      %p126 = scmp.ne.s32.totalorder %s114, %s115
      %p127 = scmp.eq.s32.totalorder %s28, 1
      %p128 = por %p126, %p127
      %p130 = scmp.ne.s32.totalorder %s115, %s129
      %p131 = scmp.eq.s32.totalorder %s28, 0
      %p132 = por %p130, %p131
      %s134 = sadd.s32 %s133, 1
      %p137 = scmp.eq.s32.totalorder %s22, 1
      %p138 = scmp.ne.s32.totalorder %s133, %s135
      %p139 = scmp.eq.s32.totalorder %s22, 0
      %p140 = por %p138, %p139
      %p141 = scmp.ne.s32.totalorder %s133, %s135
      %p142 = scmp.eq.s32.totalorder %s27, 1
      %p143 = por %p141, %p142
      %p144 = scmp.ne.s32.totalorder %s135, %s136
      %p145 = scmp.eq.s32.totalorder %s27, 0
      %p146 = por %p144, %p145
      %p147 = scmp.ne.s32.totalorder %s135, %s136
      %p148 = scmp.eq.s32.totalorder %s28, 1
      %p149 = por %p147, %p148
      %p151 = scmp.ne.s32.totalorder %s136, %s150
      %p152 = scmp.eq.s32.totalorder %s28, 0
      %p153 = por %p151, %p152
      %s155 = sadd.s32 %s154, 1
      %p158 = scmp.eq.s32.totalorder %s22, 1
      %p159 = scmp.ne.s32.totalorder %s154, %s156
      %p160 = scmp.eq.s32.totalorder %s22, 0
      %p161 = por %p159, %p160
      %p162 = scmp.ne.s32.totalorder %s154, %s156
      %p163 = scmp.eq.s32.totalorder %s27, 1
      %p164 = por %p162, %p163
      %p165 = scmp.ne.s32.totalorder %s156, %s157
      %p166 = scmp.eq.s32.totalorder %s27, 0
      %p167 = por %p165, %p166
      %p168 = scmp.ne.s32.totalorder %s156, %s157
      %p169 = scmp.eq.s32.totalorder %s28, 1
      %p170 = por %p168, %p169
      %p172 = scmp.ne.s32.totalorder %s157, %s171
      %p173 = scmp.eq.s32.totalorder %s28, 0
      %p174 = por %p172, %p173
      %s176 = sadd.s32 %s175, 1
      %p179 = scmp.eq.s32.totalorder %s22, 1
      %p180 = scmp.ne.s32.totalorder %s175, %s177
      %p181 = scmp.eq.s32.totalorder %s22, 0
      %p182 = por %p180, %p181
      %p183 = scmp.ne.s32.totalorder %s175, %s177
      %p184 = scmp.eq.s32.totalorder %s27, 1
      %p185 = por %p183, %p184
      %p186 = scmp.ne.s32.totalorder %s177, %s178
      %p187 = scmp.eq.s32.totalorder %s27, 0
      %p188 = por %p186, %p187
      %p189 = scmp.ne.s32.totalorder %s177, %s178
      %p190 = scmp.eq.s32.totalorder %s28, 1
      %p191 = por %p189, %p190
      %p193 = scmp.ne.s32.totalorder %s178, %s192
      %p194 = scmp.eq.s32.totalorder %s28, 0
      %p195 = por %p193, %p194
      %s197 = sadd.s32 %s196, 1
      %p200 = scmp.eq.s32.totalorder %s22, 1
      %p201 = scmp.ne.s32.totalorder %s196, %s198
      %p202 = scmp.eq.s32.totalorder %s22, 0
      %p203 = por %p201, %p202
      %p204 = scmp.ne.s32.totalorder %s196, %s198
      %p205 = scmp.eq.s32.totalorder %s27, 1
      %p206 = por %p204, %p205
      %p207 = scmp.ne.s32.totalorder %s198, %s199
      %p208 = scmp.eq.s32.totalorder %s27, 0
      %p209 = por %p207, %p208
      %p210 = scmp.ne.s32.totalorder %s198, %s199
      %p211 = scmp.eq.s32.totalorder %s28, 1
      %p212 = por %p210, %p211
      %p214 = scmp.ne.s32.totalorder %s199, %s213
      %p215 = scmp.eq.s32.totalorder %s28, 0
      %p216 = por %p214, %p215
      %s218 = sadd.s32 %s217, 1
      %p221 = scmp.eq.s32.totalorder %s22, 1
      %p222 = scmp.ne.s32.totalorder %s217, %s219
      %p223 = scmp.eq.s32.totalorder %s22, 0
      %p224 = por %p222, %p223
      %p225 = scmp.ne.s32.totalorder %s217, %s219
      %p226 = scmp.eq.s32.totalorder %s27, 1
      %p227 = por %p225, %p226
      %p228 = scmp.ne.s32.totalorder %s219, %s220
      %p229 = scmp.eq.s32.totalorder %s27, 0
      %p230 = por %p228, %p229
      %p231 = scmp.ne.s32.totalorder %s219, %s220
      %p232 = scmp.eq.s32.totalorder %s28, 1
      %p233 = por %p231, %p232
      %p235 = scmp.ne.s32.totalorder %s220, %s234
      %p236 = scmp.eq.s32.totalorder %s28, 0
      %p237 = por %p235, %p236
      %s239 = sadd.s32 %s238, 1
      %p242 = scmp.eq.s32.totalorder %s22, 1
      %p243 = scmp.ne.s32.totalorder %s238, %s240
      %p244 = scmp.eq.s32.totalorder %s22, 0
      %p245 = por %p243, %p244
      %p246 = scmp.ne.s32.totalorder %s238, %s240
      %p247 = scmp.eq.s32.totalorder %s27, 1
      %p248 = por %p246, %p247
      %p249 = scmp.ne.s32.totalorder %s240, %s241
      %p250 = scmp.eq.s32.totalorder %s27, 0
      %p251 = por %p249, %p250
      %p252 = scmp.ne.s32.totalorder %s240, %s241
      %p253 = scmp.eq.s32.totalorder %s28, 1
      %p254 = por %p252, %p253
      %p256 = scmp.ne.s32.totalorder %s241, %s255
      %p257 = scmp.eq.s32.totalorder %s28, 0
      %p258 = por %p256, %p257
      %s260 = sadd.s32 %s259, 1
      %p263 = scmp.eq.s32.totalorder %s22, 1
      %p264 = scmp.ne.s32.totalorder %s259, %s261
      %p265 = scmp.eq.s32.totalorder %s22, 0
      %p266 = por %p264, %p265
      %p267 = scmp.ne.s32.totalorder %s259, %s261
      %p268 = scmp.eq.s32.totalorder %s27, 1
      %p269 = por %p267, %p268
      %p270 = scmp.ne.s32.totalorder %s261, %s262
      %p271 = scmp.eq.s32.totalorder %s27, 0
      %p272 = por %p270, %p271
      %p273 = scmp.ne.s32.totalorder %s261, %s262
      %p274 = scmp.eq.s32.totalorder %s28, 1
      %p275 = por %p273, %p274
      %p277 = scmp.ne.s32.totalorder %s262, %s276
      %p278 = scmp.eq.s32.totalorder %s28, 0
      %p279 = por %p277, %p278
      %s281 = sadd.s32 %s280, 1
      %p284 = scmp.eq.s32.totalorder %s22, 1
      %p285 = scmp.ne.s32.totalorder %s280, %s282
      %p286 = scmp.eq.s32.totalorder %s22, 0
      %p287 = por %p285, %p286
      %p288 = scmp.ne.s32.totalorder %s280, %s282
      %p289 = scmp.eq.s32.totalorder %s27, 1
      %p290 = por %p288, %p289
      %p291 = scmp.ne.s32.totalorder %s282, %s283
      %p292 = scmp.eq.s32.totalorder %s27, 0
      %p293 = por %p291, %p292
      %p294 = scmp.ne.s32.totalorder %s282, %s283
      %p295 = scmp.eq.s32.totalorder %s28, 1
      %p296 = por %p294, %p295
      %p298 = scmp.ne.s32.totalorder %s283, %s297
      %p299 = scmp.eq.s32.totalorder %s28, 0
      %p300 = por %p298, %p299
      %s302 = sadd.s32 %s301, 1
      %p305 = scmp.eq.s32.totalorder %s22, 1
      %p306 = scmp.ne.s32.totalorder %s301, %s303
      %p307 = scmp.eq.s32.totalorder %s22, 0
      %p308 = por %p306, %p307
      %p309 = scmp.ne.s32.totalorder %s301, %s303
      %p310 = scmp.eq.s32.totalorder %s27, 1
      %p311 = por %p309, %p310
      %p312 = scmp.ne.s32.totalorder %s303, %s304
      %p313 = scmp.eq.s32.totalorder %s27, 0
      %p314 = por %p312, %p313
      %p315 = scmp.ne.s32.totalorder %s303, %s304
      %p316 = scmp.eq.s32.totalorder %s28, 1
      %p317 = por %p315, %p316
      %p319 = scmp.ne.s32.totalorder %s304, %s318
      %p320 = scmp.eq.s32.totalorder %s28, 0
      %p321 = por %p319, %p320
      %s322 = ssub.s32 %s29, %s41
      %p323 = scmp.eq.s32.totalorder %s322, 0
      %s325 = sadd.s32 %s324, 1
      %s326 = scalar_select %p323, %s324, %s325
      %p329 = pneg %p323
      %p330 = scmp.eq.s32.totalorder %s22, 1
      %p331 = por %p329, %p330
      %p332 = scmp.ne.s32.totalorder %s324, %s327
      %p333 = scmp.eq.s32.totalorder %s22, 0
      %p334 = por %p332, %p333
      %p335 = scmp.ne.s32.totalorder %s324, %s327
      %p336 = scmp.eq.s32.totalorder %s27, 1
      %p337 = por %p335, %p336
      %p338 = scmp.ne.s32.totalorder %s327, %s328
      %p339 = scmp.eq.s32.totalorder %s27, 0
      %p340 = por %p338, %p339
      %p341 = scmp.ne.s32.totalorder %s327, %s328
      %p342 = scmp.eq.s32.totalorder %s28, 1
      %p343 = por %p341, %p342
      %p345 = scmp.ne.s32.totalorder %s328, %s344
      %p346 = scmp.eq.s32.totalorder %s28, 0
      %p347 = por %p345, %p346
      %p348 = scmp.le.s32.totalorder 1, %s22
      %p349 = scmp.lt.s32.totalorder %s22, 3
      %p350 = pnand %p348, %p349
      %p351 = pneg %p350
      // Predicated region
      $region9: #{_lambda_.1} parent=5 // pred_check
        _
      $region10: #{_lambda_.1} parent=5 // pred_check_branch
        %353 = sbr.rel (%p350) target = $region12
      $region11: #{_lambda_.1} parent=5 // pred_region
        %s354 = ssub.s32 %s22, 1
        // Predicated region
        $region13: #{_lambda_.1} parent=11 // pred_check
          %p355 = pneg %p83
        $region14: #{_lambda_.1} parent=11 // pred_check_branch
          %357 = sbr.rel (%p355) target = $region16
        $region15: #{_lambda_.1} parent=11 // pred_region
          _
        $region16: #{_lambda_.1} parent=11 // pred_fallthru
          _
        // Predicated region
        $region17: #{_lambda_.1} parent=11 // pred_check
          %p358 = pneg %p104
        $region18: #{_lambda_.1} parent=11 // pred_check_branch
          %360 = sbr.rel (%p358) target = $region20
        $region19: #{_lambda_.1} parent=11 // pred_region
          _
        $region20: #{_lambda_.1} parent=11 // pred_fallthru
          _
        // Predicated region
        $region21: #{_lambda_.1} parent=11 // pred_check
          %p361 = pneg %p125
        $region22: #{_lambda_.1} parent=11 // pred_check_branch
          %363 = sbr.rel (%p361) target = $region24
        $region23: #{_lambda_.1} parent=11 // pred_region
          _
        $region24: #{_lambda_.1} parent=11 // pred_fallthru
          _
        // Predicated region
        $region25: #{_lambda_.1} parent=11 // pred_check
          %p364 = pneg %p146
        $region26: #{_lambda_.1} parent=11 // pred_check_branch
          %366 = sbr.rel (%p364) target = $region28
        $region27: #{_lambda_.1} parent=11 // pred_region
          _
        $region28: #{_lambda_.1} parent=11 // pred_fallthru
          _
        // Predicated region
        $region29: #{_lambda_.1} parent=11 // pred_check
          %p367 = pneg %p167
        $region30: #{_lambda_.1} parent=11 // pred_check_branch
          %369 = sbr.rel (%p367) target = $region32
        $region31: #{_lambda_.1} parent=11 // pred_region
          _
        $region32: #{_lambda_.1} parent=11 // pred_fallthru
          _
        // Predicated region
        $region33: #{_lambda_.1} parent=11 // pred_check
          %p370 = pneg %p188
        $region34: #{_lambda_.1} parent=11 // pred_check_branch
          %372 = sbr.rel (%p370) target = $region36
        $region35: #{_lambda_.1} parent=11 // pred_region
          _
        $region36: #{_lambda_.1} parent=11 // pred_fallthru
          _
        // Predicated region
        $region37: #{_lambda_.1} parent=11 // pred_check
          %p373 = pneg %p209
        $region38: #{_lambda_.1} parent=11 // pred_check_branch
          %375 = sbr.rel (%p373) target = $region40
        $region39: #{_lambda_.1} parent=11 // pred_region
          _
        $region40: #{_lambda_.1} parent=11 // pred_fallthru
          _
        // Predicated region
        $region41: #{_lambda_.1} parent=11 // pred_check
          %p376 = pneg %p230
        $region42: #{_lambda_.1} parent=11 // pred_check_branch
          %378 = sbr.rel (%p376) target = $region44
        $region43: #{_lambda_.1} parent=11 // pred_region
          _
        $region44: #{_lambda_.1} parent=11 // pred_fallthru
          _
        // Predicated region
        $region45: #{_lambda_.1} parent=11 // pred_check
          %p379 = pneg %p251
        $region46: #{_lambda_.1} parent=11 // pred_check_branch
          %381 = sbr.rel (%p379) target = $region48
        $region47: #{_lambda_.1} parent=11 // pred_region
          _
        $region48: #{_lambda_.1} parent=11 // pred_fallthru
          _
        // Predicated region
        $region49: #{_lambda_.1} parent=11 // pred_check
          %p382 = pneg %p272
        $region50: #{_lambda_.1} parent=11 // pred_check_branch
          %384 = sbr.rel (%p382) target = $region52
        $region51: #{_lambda_.1} parent=11 // pred_region
          _
        $region52: #{_lambda_.1} parent=11 // pred_fallthru
          _
        // Predicated region
        $region53: #{_lambda_.1} parent=11 // pred_check
          %p385 = pneg %p293
        $region54: #{_lambda_.1} parent=11 // pred_check_branch
          %387 = sbr.rel (%p385) target = $region56
        $region55: #{_lambda_.1} parent=11 // pred_region
          _
        $region56: #{_lambda_.1} parent=11 // pred_fallthru
          _
        // Predicated region
        $region57: #{_lambda_.1} parent=11 // pred_check
          %p388 = pneg %p314
        $region58: #{_lambda_.1} parent=11 // pred_check_branch
          %390 = sbr.rel (%p388) target = $region60
        $region59: #{_lambda_.1} parent=11 // pred_region
          _
        $region60: #{_lambda_.1} parent=11 // pred_fallthru
          _
      $region12: #{_lambda_.1} parent=5 // pred_fallthru
        _
      %p391 = scmp.lt.s32.totalorder %s22, 2
      // Predicated region
      $region61: #{_lambda_.1} parent=5 // pred_check
        %p392 = pneg %p391
      $region62: #{_lambda_.1} parent=5 // pred_check_branch
        %394 = sbr.rel (%p392) target = $region64
      $region63: #{_lambda_.1} parent=5 // pred_region
        // Predicated region
        $region65: #{_lambda_.1} parent=63 // pred_check
          %p395 = pneg %p56
        $region66: #{_lambda_.1} parent=63 // pred_check_branch
          %397 = sbr.rel (%p395) target = $region68
        $region67: #{_lambda_.1} parent=63 // pred_region
          %s398 = sadd.s32 %s29, %s30
          %s399 = smul.u32 4, %s398
          %p400 = scmp.lt.s32.totalorder %s399, 7
          %s401 = scalar_select %p400, %s399, 7
          %s402 = smul.addr %s401, 8
          %s403 = scalar_lea.vmem %s0, %s402
          %s404 = sadd.s32 %s29, %s30
          %s405 = smul.u32 4, %s404
        $region68: #{_lambda_.1} parent=63 // pred_fallthru
          _
      $region64: #{_lambda_.1} parent=5 // pred_fallthru
        _
      %p406 = scmp.le.s32.totalorder 1, %s22
      %p407 = scmp.lt.s32.totalorder %s22, 3
      %p408 = pnand %p406, %p407
      %p409 = pneg %p408
      // Predicated region
      $region69: #{_lambda_.1} parent=5 // pred_check
        _
      $region70: #{_lambda_.1} parent=5 // pred_check_branch
        %411 = sbr.rel (%p408) target = $region72
      $region71: #{_lambda_.1} parent=5 // pred_region
        %s412 = ssub.s32 %s22, 1
        %s413 = sadd.s32 %s31, %s32
        %s414 = smul.u32 4, %s413
        %p415 = scmp.lt.s32.totalorder %s414, 7
        %s416 = scalar_select %p415, %s414, 7
        %s417 = smul.addr %s416, 8
        %s418 = scalar_lea.vmem %s0, %s417
        %p419 = pneg %p62
        %p420 = pneg %p59
        %p421 = pneg %p83
        %p422 = pneg %p80
        %p423 = pneg %p104
        %p424 = pneg %p101
        %p425 = pneg %p125
        %p426 = pneg %p122
        %p427 = pneg %p146
        %p428 = pneg %p143
        %p429 = pneg %p167
        %p430 = pneg %p164
        %p431 = pneg %p188
        %p432 = pneg %p185
        %p433 = pneg %p209
        %p434 = pneg %p206
        %p435 = pneg %p230
        %p436 = pneg %p227
        %p437 = pneg %p251
        %p438 = pneg %p248
        %p439 = pneg %p272
        %p440 = pneg %p269
        %p441 = pneg %p293
        %p442 = pneg %p290
        %p443 = pneg %p314
        %p444 = pneg %p311
        %p445 = pneg %p340
        %p446 = pneg %p337
        %s447 = sand.u32 %s327, 1
        %s448 = scalar_lea.sflag [#allocation4], %s447
        %s449 = sand.u32 %s327, 1
        %s450 = scalar_lea.vmem [#allocation3], %s449
        %s451 = sadd.s32 %s31, %s32
        %s452 = smul.u32 4, %s451
        %p453 = scmp.lt.s32.totalorder %s452, 7
        %s454 = scalar_select %p453, %s452, 7
        %s455 = smul.addr %s454, 8
        %s456 = scalar_lea.vmem %s0, %s455
        %s457 = sadd.s32 %s31, %s32
        %s458 = smul.u32 4, %s457
        %v460 = vld [vmem:[%s456] sm:$0xff]
        %v461 = vld [vmem:[%s456 + $0x8] sm:$0xff]
        %v462 = vld [vmem:[%s456 + $0x10] sm:$0xff]
        %v463 = vld [vmem:[%s456 + $0x18] sm:$0xff]
        %v464 = vld [vmem:[%s1] sm:$0x1]
        %466 = vset.pattern.permute.xlu0 0
        %467 = vperm.xlu0 %466, %v460
        %v468 = vpop.permute.xlu0 %467
        %471 = vset.pattern.permute.xlu0 0
        %472 = vperm.xlu0 %471, %v461
        %v473 = vpop.permute.xlu0 %472
        %476 = vset.pattern.permute.xlu0 0
        %477 = vperm.xlu0 %476, %v462
        %v478 = vpop.permute.xlu0 %477
        %481 = vset.pattern.permute.xlu0 0
        %482 = vperm.xlu0 %481, %v463
        %v483 = vpop.permute.xlu0 %482
        %v485 = vlaneseq
        %v486 = vshrl.u32 %v485, 7
        %v487 = vsub.s32 0, %v486
        %v488 = vrot.slane %v464, %v487
        %v489 = vmul.f32 %v468, %v488
        %v490 = vmul.f32 %v473, %v488
        %v491 = vmul.f32 %v478, %v488
        %v492 = vmul.f32 %v483, %v488
        %v493 = vld [vmem:[%s1 + $0x1] sm:$0x1]
        %494 = vset.pattern.permute.xlu0 1
        %495 = vperm.xlu0 %494, %v460
        %v496 = vpop.permute.xlu0 %495
        %498 = vset.pattern.permute.xlu0 1
        %499 = vperm.xlu0 %498, %v461
        %v500 = vpop.permute.xlu0 %499
        %502 = vset.pattern.permute.xlu0 1
        %503 = vperm.xlu0 %502, %v462
        %v504 = vpop.permute.xlu0 %503
        %506 = vset.pattern.permute.xlu0 1
        %507 = vperm.xlu0 %506, %v463
        %v508 = vpop.permute.xlu0 %507
        %v510 = vlaneseq
        %v511 = vshrl.u32 %v510, 7
        %v512 = vsub.s32 0, %v511
        %v513 = vrot.slane %v493, %v512
        %v514 = vmul.f32 %v496, %v513
        %v515 = vmul.f32 %v500, %v513
        %v516 = vmul.f32 %v504, %v513
        %v517 = vmul.f32 %v508, %v513
        %v518 = vadd.f32 %v489, %v514
        %v519 = vadd.f32 %v490, %v515
        %v520 = vadd.f32 %v491, %v516
        %v521 = vadd.f32 %v492, %v517
        %v522 = vld [vmem:[%s1 + $0x2] sm:$0x1]
        %523 = vset.pattern.permute.xlu0 2
        %524 = vperm.xlu0 %523, %v460
        %v525 = vpop.permute.xlu0 %524
        %527 = vset.pattern.permute.xlu0 2
        %528 = vperm.xlu0 %527, %v461
        %v529 = vpop.permute.xlu0 %528
        %531 = vset.pattern.permute.xlu0 2
        %532 = vperm.xlu0 %531, %v462
        %v533 = vpop.permute.xlu0 %532
        %535 = vset.pattern.permute.xlu0 2
        %536 = vperm.xlu0 %535, %v463
        %v537 = vpop.permute.xlu0 %536
        %v539 = vlaneseq
        %v540 = vshrl.u32 %v539, 7
        %v541 = vsub.s32 0, %v540
        %v542 = vrot.slane %v522, %v541
        %v543 = vmul.f32 %v525, %v542
        %v544 = vmul.f32 %v529, %v542
        %v545 = vmul.f32 %v533, %v542
        %v546 = vmul.f32 %v537, %v542
        %v547 = vadd.f32 %v518, %v543
        %v548 = vadd.f32 %v519, %v544
        %v549 = vadd.f32 %v520, %v545
        %v550 = vadd.f32 %v521, %v546
        %v551 = vld [vmem:[%s2] sm:$0x1]
        %v553 = vlaneseq
        %v554 = vshrl.u32 %v553, 7
        %v555 = vsub.s32 0, %v554
        %v556 = vrot.slane %v551, %v555
        %v558 = vadd.f32 %v547, %v556
        %v559 = vadd.f32 %v548, %v556
        %v560 = vadd.f32 %v549, %v556
        %v561 = vadd.f32 %v550, %v556
        %v562 = vmax.f32 %v558, 0.0
        %v563 = vmax.f32 %v559, 0.0
        %v564 = vmax.f32 %v560, 0.0
        %v565 = vmax.f32 %v561, 0.0
        %v566 = vpack.c.bf16 %v563, %v562
        %v567 = vpack.c.bf16 %v565, %v564
        %v568 = vld [vmem:[%s3] sm:$0xf]
        %v569 = vld [vmem:[%s3 + $0x4] sm:$0xf]
        %v570 = vld [vmem:[%s3 + $0x8] sm:$0xf]
        %v571 = vld [vmem:[%s3 + $0xc] sm:$0xf]
        %v572 = vld [vmem:[%s3 + $0x10] sm:$0xf]
        %v573 = vld [vmem:[%s3 + $0x14] sm:$0xf]
        %v574 = vld [vmem:[%s3 + $0x18] sm:$0xf]
        %v575 = vld [vmem:[%s3 + $0x1c] sm:$0xf]
        %v576 = vld [vmem:[%s4] sm:$0x1]
        %v578 = vlaneseq
        %v579 = vshrl.u32 %v578, 7
        %v580 = vsub.s32 0, %v579
        %v581 = vrot.slane %v576, %v580
        %v591 = vunpack.c.l.b16 %v568
        %v592 = vunpack.c.l.b16 %v569
        %v593 = vunpack.c.l.b16 %v570
        %v594 = vunpack.c.l.b16 %v571
        %v595 = vunpack.c.l.b16 %v572
        %v596 = vunpack.c.l.b16 %v573
        %v597 = vunpack.c.l.b16 %v574
        %v598 = vunpack.c.l.b16 %v575
        %v599 = vpack.c.b16 %v592, %v591
        %v600 = vpack.c.b16 %v594, %v593
        %v601 = vpack.c.b16 %v596, %v595
        %v602 = vpack.c.b16 %v598, %v597
        %vm607 = vcmask 523264
        %v609 = vsel %vm607, %v566, 0
        %v612 = vsel %vm607, %v567, 0
        %614 = vmatprep.subr.bf16.mxu0 0
        %615 = vmatpush1.bf16.msra.mxu0 %v599
        %616 = vmatprep.subr.bf16.mxu0 0
        %617 = vmatpush1.bf16.msra.mxu0 %v600
        %618 = vmatprep.subr.bf16.mxu0 0
        %619 = vmatpush1.bf16.msra.mxu0 %v601
        %620 = vmatprep.subr.bf16.mxu0 0
        %621 = vmatpush1.bf16.msra.mxu0 %v602
        %622 = vmatprep.subr.bf16.mxu0 0
        %623 = vmatpush1.bf16.msra.mxu0 0
        %624 = vmatprep.subr.bf16.mxu0 0
        %625 = vmatpush1.bf16.msra.mxu0 0
        %626 = vmatprep.subr.bf16.mxu0 0
        %627 = vmatpush1.bf16.msra.mxu0 0
        %628 = vmatprep.subr.bf16.mxu0 0
        %629 = vmatpush1.bf16.msra.mxu0 0
        %630 = vmatprep.subr.bf16.mxu0 0
        %631 = vmatpush1.bf16.msra.mxu0 0
        %632 = vmatprep.subr.bf16.mxu0 0
        %633 = vmatpush1.bf16.msra.mxu0 0
        %634 = vmatprep.subr.bf16.mxu0 0
        %635 = vmatpush1.bf16.msra.mxu0 0
        %636 = vmatprep.subr.bf16.mxu0 0
        %637 = vmatpush1.bf16.msra.mxu0 0
        %638 = vmatprep.subr.bf16.mxu0 0
        %639 = vmatpush1.bf16.msra.mxu0 0
        %640 = vmatprep.subr.bf16.mxu0 0
        %641 = vmatpush1.bf16.msra.mxu0 0
        %642 = vmatprep.subr.bf16.mxu0 0
        %643 = vmatpush1.bf16.msra.mxu0 0
        %644 = vmatprep.subr.bf16.mxu0 0
        %645 = vmatpush1.bf16.msra.mxu0 0
        %646 = vmatprep.mubr.bf16.mxu0 0
        %647 = vmatmul.mubr.bf16.gmra.mrb[0].mxu0 %v609
        %v648 = vpop.f32.mrb[0].mxu0
        %v649 = vadd.f32 %v581, %v648
        %v650 = vpop.f32.mrb[0].mxu0
        %v651 = vpop.f32.mrb[0].mxu0
        %v652 = vadd.f32 %v581, %v651
        %v653 = vpop.f32.mrb[0].mxu0
        %654 = vmatprep.mubr.bf16.mxu0 0
        %655 = vmatmul.mubr.bf16.gmra.mrb[0].mxu0 %v612
        %v656 = vpop.f32.mrb[0].mxu0
        %v657 = vadd.f32 %v581, %v656
        %v658 = vpop.f32.mrb[0].mxu0
        %v659 = vpop.f32.mrb[0].mxu0
        %v660 = vadd.f32 %v581, %v659
        %v661 = vpop.f32.mrb[0].mxu0
        %662 = vdwg.mxu0
        %v663 = vmax.f32 %v649, 0.0
        %v664 = vmax.f32 %v652, 0.0
        %v665 = vmax.f32 %v657, 0.0
        %v666 = vmax.f32 %v660, 0.0
        %v667 = vpack.c.bf16 %v664, %v663
        %v668 = vpack.c.bf16 %v666, %v665
        %v669 = vld [vmem:[%s5] sm:$0xff]
        %v670 = vld [vmem:[%s5 + $0x8] sm:$0xff]
        %v671 = vld [vmem:[%s5 + $0x10] sm:$0xff]
        %v672 = vld [vmem:[%s5 + $0x18] sm:$0xff]
        %v673 = vld [vmem:[%s5 + $0x20] sm:$0xff]
        %v674 = vld [vmem:[%s5 + $0x28] sm:$0xff]
        %v675 = vld [vmem:[%s5 + $0x30] sm:$0xff]
        %v676 = vld [vmem:[%s5 + $0x38] sm:$0xff]
        %v677 = vld [vmem:[%s5 + $0x40] sm:$0xff]
        %v678 = vld [vmem:[%s5 + $0x48] sm:$0xff]
        %v679 = vld [vmem:[%s5 + $0x50] sm:$0xff]
        %v680 = vld [vmem:[%s5 + $0x58] sm:$0xff]
        %v681 = vld [vmem:[%s5 + $0x60] sm:$0xff]
        %v682 = vld [vmem:[%s5 + $0x68] sm:$0xff]
        %v683 = vld [vmem:[%s5 + $0x70] sm:$0xff]
        %v684 = vld [vmem:[%s5 + $0x78] sm:$0xff]
        %v685 = vld [vmem:[%s5 + $0x80] sm:$0xff]
        %v686 = vld [vmem:[%s5 + $0x88] sm:$0xff]
        %v687 = vld [vmem:[%s5 + $0x90] sm:$0xff]
        %v688 = vld [vmem:[%s5 + $0x98] sm:$0xff]
        %v689 = vld [vmem:[%s5 + $0xa0] sm:$0xff]
        %v690 = vld [vmem:[%s5 + $0xa8] sm:$0xff]
        %v691 = vld [vmem:[%s5 + $0xb0] sm:$0xff]
        %v692 = vld [vmem:[%s5 + $0xb8] sm:$0xff]
        %v693 = vld [vmem:[%s5 + $0xc0] sm:$0xff]
        %v694 = vld [vmem:[%s5 + $0xc8] sm:$0xff]
        %v695 = vld [vmem:[%s5 + $0xd0] sm:$0xff]
        %v696 = vld [vmem:[%s5 + $0xd8] sm:$0xff]
        %v697 = vld [vmem:[%s5 + $0xe0] sm:$0xff]
        %v698 = vld [vmem:[%s5 + $0xe8] sm:$0xff]
        %v699 = vld [vmem:[%s5 + $0xf0] sm:$0xff]
        %v700 = vld [vmem:[%s5 + $0xf8] sm:$0xff]
        %v701 = vld [vmem:[%s5 + $0x100] sm:$0xff]
        %v702 = vld [vmem:[%s5 + $0x108] sm:$0xff]
        %v703 = vld [vmem:[%s5 + $0x110] sm:$0xff]
        %v704 = vld [vmem:[%s5 + $0x118] sm:$0xff]
        %v705 = vld [vmem:[%s5 + $0x120] sm:$0xff]
        %v706 = vld [vmem:[%s5 + $0x128] sm:$0xff]
        %v707 = vld [vmem:[%s5 + $0x130] sm:$0xff]
        %v708 = vld [vmem:[%s5 + $0x138] sm:$0xff]
        %v709 = vld [vmem:[%s5 + $0x140] sm:$0xff]
        %v710 = vld [vmem:[%s5 + $0x148] sm:$0xff]
        %v711 = vld [vmem:[%s5 + $0x150] sm:$0xff]
        %v712 = vld [vmem:[%s5 + $0x158] sm:$0xff]
        %v713 = vld [vmem:[%s5 + $0x160] sm:$0xff]
        %v714 = vld [vmem:[%s5 + $0x168] sm:$0xff]
        %v715 = vld [vmem:[%s5 + $0x170] sm:$0xff]
        %v716 = vld [vmem:[%s5 + $0x178] sm:$0xff]
        %v717 = vld [vmem:[%s5 + $0x180] sm:$0xff]
        %v718 = vld [vmem:[%s5 + $0x188] sm:$0xff]
        %v719 = vld [vmem:[%s5 + $0x190] sm:$0xff]
        %v720 = vld [vmem:[%s5 + $0x198] sm:$0xff]
        %v721 = vld [vmem:[%s5 + $0x1a0] sm:$0xff]
        %v722 = vld [vmem:[%s5 + $0x1a8] sm:$0xff]
        %v723 = vld [vmem:[%s5 + $0x1b0] sm:$0xff]
        %v724 = vld [vmem:[%s5 + $0x1b8] sm:$0xff]
        %v725 = vld [vmem:[%s5 + $0x1c0] sm:$0xff]
        %v726 = vld [vmem:[%s5 + $0x1c8] sm:$0xff]
        %v727 = vld [vmem:[%s5 + $0x1d0] sm:$0xff]
        %v728 = vld [vmem:[%s5 + $0x1d8] sm:$0xff]
        %v729 = vld [vmem:[%s5 + $0x1e0] sm:$0xff]
        %v730 = vld [vmem:[%s5 + $0x1e8] sm:$0xff]
        %v731 = vld [vmem:[%s5 + $0x1f0] sm:$0xff]
        %v732 = vld [vmem:[%s5 + $0x1f8] sm:$0xff]
        %v797 = vunpack.c.l.b16 %v669
        %v798 = vunpack.c.h.b16 %v669
        %v799 = vunpack.c.l.b16 %v670
        %v800 = vunpack.c.h.b16 %v670
        %v801 = vunpack.c.l.b16 %v671
        %v802 = vunpack.c.h.b16 %v671
        %v803 = vunpack.c.l.b16 %v672
        %v804 = vunpack.c.h.b16 %v672
        %v805 = vunpack.c.l.b16 %v673
        %v806 = vunpack.c.h.b16 %v673
        %v807 = vunpack.c.l.b16 %v674
        %v808 = vunpack.c.h.b16 %v674
        %v809 = vunpack.c.l.b16 %v675
        %v810 = vunpack.c.h.b16 %v675
        %v811 = vunpack.c.l.b16 %v676
        %v812 = vunpack.c.h.b16 %v676
        %v813 = vunpack.c.l.b16 %v677
        %v814 = vunpack.c.h.b16 %v677
        %v815 = vunpack.c.l.b16 %v678
        %v816 = vunpack.c.h.b16 %v678
        %v817 = vunpack.c.l.b16 %v679
        %v818 = vunpack.c.h.b16 %v679
        %v819 = vunpack.c.l.b16 %v680
        %v820 = vunpack.c.h.b16 %v680
        %v821 = vunpack.c.l.b16 %v681
        %v822 = vunpack.c.h.b16 %v681
        %v823 = vunpack.c.l.b16 %v682
        %v824 = vunpack.c.h.b16 %v682
        %v825 = vunpack.c.l.b16 %v683
        %v826 = vunpack.c.h.b16 %v683
        %v827 = vunpack.c.l.b16 %v684
        %v828 = vunpack.c.h.b16 %v684
        %v829 = vunpack.c.l.b16 %v685
        %v830 = vunpack.c.h.b16 %v685
        %v831 = vunpack.c.l.b16 %v686
        %v832 = vunpack.c.h.b16 %v686
        %v833 = vunpack.c.l.b16 %v687
        %v834 = vunpack.c.h.b16 %v687
        %v835 = vunpack.c.l.b16 %v688
        %v836 = vunpack.c.h.b16 %v688
        %v837 = vunpack.c.l.b16 %v689
        %v838 = vunpack.c.h.b16 %v689
        %v839 = vunpack.c.l.b16 %v690
        %v840 = vunpack.c.h.b16 %v690
        %v841 = vunpack.c.l.b16 %v691
        %v842 = vunpack.c.h.b16 %v691
        %v843 = vunpack.c.l.b16 %v692
        %v844 = vunpack.c.h.b16 %v692
        %v845 = vunpack.c.l.b16 %v693
        %v846 = vunpack.c.h.b16 %v693
        %v847 = vunpack.c.l.b16 %v694
        %v848 = vunpack.c.h.b16 %v694
        %v849 = vunpack.c.l.b16 %v695
        %v850 = vunpack.c.h.b16 %v695
        %v851 = vunpack.c.l.b16 %v696
        %v852 = vunpack.c.h.b16 %v696
        %v853 = vunpack.c.l.b16 %v697
        %v854 = vunpack.c.h.b16 %v697
        %v855 = vunpack.c.l.b16 %v698
        %v856 = vunpack.c.h.b16 %v698
        %v857 = vunpack.c.l.b16 %v699
        %v858 = vunpack.c.h.b16 %v699
        %v859 = vunpack.c.l.b16 %v700
        %v860 = vunpack.c.h.b16 %v700
        %v861 = vunpack.c.l.b16 %v701
        %v862 = vunpack.c.h.b16 %v701
        %v863 = vunpack.c.l.b16 %v702
        %v864 = vunpack.c.h.b16 %v702
        %v865 = vunpack.c.l.b16 %v703
        %v866 = vunpack.c.h.b16 %v703
        %v867 = vunpack.c.l.b16 %v704
        %v868 = vunpack.c.h.b16 %v704
        %v869 = vunpack.c.l.b16 %v705
        %v870 = vunpack.c.h.b16 %v705
        %v871 = vunpack.c.l.b16 %v706
        %v872 = vunpack.c.h.b16 %v706
        %v873 = vunpack.c.l.b16 %v707
        %v874 = vunpack.c.h.b16 %v707
        %v875 = vunpack.c.l.b16 %v708
        %v876 = vunpack.c.h.b16 %v708
        %v877 = vunpack.c.l.b16 %v709
        %v878 = vunpack.c.h.b16 %v709
        %v879 = vunpack.c.l.b16 %v710
        %v880 = vunpack.c.h.b16 %v710
        %v881 = vunpack.c.l.b16 %v711
        %v882 = vunpack.c.h.b16 %v711
        %v883 = vunpack.c.l.b16 %v712
        %v884 = vunpack.c.h.b16 %v712
        %v885 = vunpack.c.l.b16 %v713
        %v886 = vunpack.c.h.b16 %v713
        %v887 = vunpack.c.l.b16 %v714
        %v888 = vunpack.c.h.b16 %v714
        %v889 = vunpack.c.l.b16 %v715
        %v890 = vunpack.c.h.b16 %v715
        %v891 = vunpack.c.l.b16 %v716
        %v892 = vunpack.c.h.b16 %v716
        %v893 = vunpack.c.l.b16 %v717
        %v894 = vunpack.c.h.b16 %v717
        %v895 = vunpack.c.l.b16 %v718
        %v896 = vunpack.c.h.b16 %v718
        %v897 = vunpack.c.l.b16 %v719
        %v898 = vunpack.c.h.b16 %v719
        %v899 = vunpack.c.l.b16 %v720
        %v900 = vunpack.c.h.b16 %v720
        %v901 = vunpack.c.l.b16 %v721
        %v902 = vunpack.c.h.b16 %v721
        %v903 = vunpack.c.l.b16 %v722
        %v904 = vunpack.c.h.b16 %v722
        %v905 = vunpack.c.l.b16 %v723
        %v906 = vunpack.c.h.b16 %v723
        %v907 = vunpack.c.l.b16 %v724
        %v908 = vunpack.c.h.b16 %v724
        %v909 = vunpack.c.l.b16 %v725
        %v910 = vunpack.c.h.b16 %v725
        %v911 = vunpack.c.l.b16 %v726
        %v912 = vunpack.c.h.b16 %v726
        %v913 = vunpack.c.l.b16 %v727
        %v914 = vunpack.c.h.b16 %v727
        %v915 = vunpack.c.l.b16 %v728
        %v916 = vunpack.c.h.b16 %v728
        %v917 = vunpack.c.l.b16 %v729
        %v918 = vunpack.c.h.b16 %v729
        %v919 = vunpack.c.l.b16 %v730
        %v920 = vunpack.c.h.b16 %v730
        %v921 = vunpack.c.l.b16 %v731
        %v922 = vunpack.c.h.b16 %v731
        %v923 = vunpack.c.l.b16 %v732
        %v924 = vunpack.c.h.b16 %v732
        %v925 = vpack.c.b16 %v805, %v797
        %v926 = vpack.c.b16 %v806, %v798
        %v927 = vpack.c.b16 %v807, %v799
        %v928 = vpack.c.b16 %v808, %v800
        %v929 = vpack.c.b16 %v809, %v801
        %v930 = vpack.c.b16 %v810, %v802
        %v931 = vpack.c.b16 %v811, %v803
        %v932 = vpack.c.b16 %v812, %v804
        %v933 = vpack.c.b16 %v821, %v813
        %v934 = vpack.c.b16 %v822, %v814
        %v935 = vpack.c.b16 %v823, %v815
        %v936 = vpack.c.b16 %v824, %v816
        %v937 = vpack.c.b16 %v825, %v817
        %v938 = vpack.c.b16 %v826, %v818
        %v939 = vpack.c.b16 %v827, %v819
        %v940 = vpack.c.b16 %v828, %v820
        %v941 = vpack.c.b16 %v837, %v829
        %v942 = vpack.c.b16 %v838, %v830
        %v943 = vpack.c.b16 %v839, %v831
        %v944 = vpack.c.b16 %v840, %v832
        %v945 = vpack.c.b16 %v841, %v833
        %v946 = vpack.c.b16 %v842, %v834
        %v947 = vpack.c.b16 %v843, %v835
        %v948 = vpack.c.b16 %v844, %v836
        %v949 = vpack.c.b16 %v853, %v845
        %v950 = vpack.c.b16 %v854, %v846
        %v951 = vpack.c.b16 %v855, %v847
        %v952 = vpack.c.b16 %v856, %v848
        %v953 = vpack.c.b16 %v857, %v849
        %v954 = vpack.c.b16 %v858, %v850
        %v955 = vpack.c.b16 %v859, %v851
        %v956 = vpack.c.b16 %v860, %v852
        %v957 = vpack.c.b16 %v869, %v861
        %v958 = vpack.c.b16 %v870, %v862
        %v959 = vpack.c.b16 %v871, %v863
        %v960 = vpack.c.b16 %v872, %v864
        %v961 = vpack.c.b16 %v873, %v865
        %v962 = vpack.c.b16 %v874, %v866
        %v963 = vpack.c.b16 %v875, %v867
        %v964 = vpack.c.b16 %v876, %v868
        %v965 = vpack.c.b16 %v885, %v877
        %v966 = vpack.c.b16 %v886, %v878
        %v967 = vpack.c.b16 %v887, %v879
        %v968 = vpack.c.b16 %v888, %v880
        %v969 = vpack.c.b16 %v889, %v881
        %v970 = vpack.c.b16 %v890, %v882
        %v971 = vpack.c.b16 %v891, %v883
        %v972 = vpack.c.b16 %v892, %v884
        %v973 = vpack.c.b16 %v901, %v893
        %v974 = vpack.c.b16 %v902, %v894
        %v975 = vpack.c.b16 %v903, %v895
        %v976 = vpack.c.b16 %v904, %v896
        %v977 = vpack.c.b16 %v905, %v897
        %v978 = vpack.c.b16 %v906, %v898
        %v979 = vpack.c.b16 %v907, %v899
        %v980 = vpack.c.b16 %v908, %v900
        %v981 = vpack.c.b16 %v917, %v909
        %v982 = vpack.c.b16 %v918, %v910
        %v983 = vpack.c.b16 %v919, %v911
        %v984 = vpack.c.b16 %v920, %v912
        %v985 = vpack.c.b16 %v921, %v913
        %v986 = vpack.c.b16 %v922, %v914
        %v987 = vpack.c.b16 %v923, %v915
        %v988 = vpack.c.b16 %v924, %v916
        %1053 = vmatprep.subr.bf16.mxu0 %v926
        %1054 = vmatpush1.bf16.msra.mxu0 %v925
        %1055 = vmatprep.subr.bf16.mxu0 %v934
        %1056 = vmatpush1.bf16.msra.mxu0 %v933
        %1057 = vmatprep.subr.bf16.mxu0 %v942
        %1058 = vmatpush1.bf16.msra.mxu0 %v941
        %1059 = vmatprep.subr.bf16.mxu0 %v950
        %1060 = vmatpush1.bf16.msra.mxu0 %v949
        %1061 = vmatprep.subr.bf16.mxu0 %v958
        %1062 = vmatpush1.bf16.msra.mxu0 %v957
        %1063 = vmatprep.subr.bf16.mxu0 %v966
        %1064 = vmatpush1.bf16.msra.mxu0 %v965
        %1065 = vmatprep.subr.bf16.mxu0 %v974
        %1066 = vmatpush1.bf16.msra.mxu0 %v973
        %1067 = vmatprep.subr.bf16.mxu0 %v982
        %1068 = vmatpush1.bf16.msra.mxu0 %v981
        %1069 = vmatprep.subr.bf16.mxu0 0
        %1070 = vmatpush1.bf16.msra.mxu0 0
        %1071 = vmatprep.subr.bf16.mxu0 0
        %1072 = vmatpush1.bf16.msra.mxu0 0
        %1073 = vmatprep.subr.bf16.mxu0 0
        %1074 = vmatpush1.bf16.msra.mxu0 0
        %1075 = vmatprep.subr.bf16.mxu0 0
        %1076 = vmatpush1.bf16.msra.mxu0 0
        %1077 = vmatprep.subr.bf16.mxu0 0
        %1078 = vmatpush1.bf16.msra.mxu0 0
        %1079 = vmatprep.subr.bf16.mxu0 0
        %1080 = vmatpush1.bf16.msra.mxu0 0
        %1081 = vmatprep.subr.bf16.mxu0 0
        %1082 = vmatpush1.bf16.msra.mxu0 0
        %1083 = vmatprep.subr.bf16.mxu0 0
        %1084 = vmatpush1.bf16.msra.mxu0 0
        %1085 = vmatprep.mubr.bf16.mxu0 0
        %1086 = vmatmul.mubr.bf16.gmra.mrb[0].mxu0 %v667
        %v1087 = vpop.f32.mrb[0].mxu0
        %v1088 = vadd.f32 0.0, %v1087
        %v1089 = vpop.f32.mrb[0].mxu0
        %v1090 = vadd.f32 0.0, %v1089
        %v1091 = vpop.f32.mrb[0].mxu0
        %v1092 = vadd.f32 0.0, %v1091
        %v1093 = vpop.f32.mrb[0].mxu0
        %v1094 = vadd.f32 0.0, %v1093
        %1095 = vmatprep.mubr.bf16.mxu0 0
        %1096 = vmatmul.mubr.bf16.gmra.mrb[0].mxu0 %v668
        %v1097 = vpop.f32.mrb[0].mxu0
        %v1098 = vadd.f32 0.0, %v1097
        %v1099 = vpop.f32.mrb[0].mxu0
        %v1100 = vadd.f32 0.0, %v1099
        %v1101 = vpop.f32.mrb[0].mxu0
        %v1102 = vadd.f32 0.0, %v1101
        %v1103 = vpop.f32.mrb[0].mxu0
        %v1104 = vadd.f32 0.0, %v1103
        %1105 = vdwg.mxu0
        %1106 = vmatprep.subr.bf16.mxu0 %v928
        %1107 = vmatpush1.bf16.msra.mxu0 %v927
        %1108 = vmatprep.subr.bf16.mxu0 %v936
        %1109 = vmatpush1.bf16.msra.mxu0 %v935
        %1110 = vmatprep.subr.bf16.mxu0 %v944
        %1111 = vmatpush1.bf16.msra.mxu0 %v943
        %1112 = vmatprep.subr.bf16.mxu0 %v952
        %1113 = vmatpush1.bf16.msra.mxu0 %v951
        %1114 = vmatprep.subr.bf16.mxu0 %v960
        %1115 = vmatpush1.bf16.msra.mxu0 %v959
        %1116 = vmatprep.subr.bf16.mxu0 %v968
        %1117 = vmatpush1.bf16.msra.mxu0 %v967
        %1118 = vmatprep.subr.bf16.mxu0 %v976
        %1119 = vmatpush1.bf16.msra.mxu0 %v975
        %1120 = vmatprep.subr.bf16.mxu0 %v984
        %1121 = vmatpush1.bf16.msra.mxu0 %v983
        %1122 = vmatprep.subr.bf16.mxu0 0
        %1123 = vmatpush1.bf16.msra.mxu0 0
        %1124 = vmatprep.subr.bf16.mxu0 0
        %1125 = vmatpush1.bf16.msra.mxu0 0
        %1126 = vmatprep.subr.bf16.mxu0 0
        %1127 = vmatpush1.bf16.msra.mxu0 0
        %1128 = vmatprep.subr.bf16.mxu0 0
        %1129 = vmatpush1.bf16.msra.mxu0 0
        %1130 = vmatprep.subr.bf16.mxu0 0
        %1131 = vmatpush1.bf16.msra.mxu0 0
        %1132 = vmatprep.subr.bf16.mxu0 0
        %1133 = vmatpush1.bf16.msra.mxu0 0
        %1134 = vmatprep.subr.bf16.mxu0 0
        %1135 = vmatpush1.bf16.msra.mxu0 0
        %1136 = vmatprep.subr.bf16.mxu0 0
        %1137 = vmatpush1.bf16.msra.mxu0 0
        %1138 = vmatprep.mubr.bf16.mxu0 0
        %1139 = vmatmul.mubr.bf16.gmra.mrb[0].mxu0 %v667
        %v1140 = vpop.f32.mrb[0].mxu0
        %v1141 = vadd.f32 0.0, %v1140
        %v1142 = vpop.f32.mrb[0].mxu0
        %v1143 = vadd.f32 0.0, %v1142
        %v1144 = vpop.f32.mrb[0].mxu0
        %v1145 = vadd.f32 0.0, %v1144
        %v1146 = vpop.f32.mrb[0].mxu0
        %v1147 = vadd.f32 0.0, %v1146
        %1148 = vmatprep.mubr.bf16.mxu0 0
        %1149 = vmatmul.mubr.bf16.gmra.mrb[0].mxu0 %v668
        %v1150 = vpop.f32.mrb[0].mxu0
        %v1151 = vadd.f32 0.0, %v1150
        %v1152 = vpop.f32.mrb[0].mxu0
        %v1153 = vadd.f32 0.0, %v1152
        %v1154 = vpop.f32.mrb[0].mxu0
        %v1155 = vadd.f32 0.0, %v1154
        %v1156 = vpop.f32.mrb[0].mxu0
        %v1157 = vadd.f32 0.0, %v1156
        %1158 = vdwg.mxu0
        %1159 = vmatprep.subr.bf16.mxu0 %v930
        %1160 = vmatpush1.bf16.msra.mxu0 %v929
        %1161 = vmatprep.subr.bf16.mxu0 %v938
        %1162 = vmatpush1.bf16.msra.mxu0 %v937
        %1163 = vmatprep.subr.bf16.mxu0 %v946
        %1164 = vmatpush1.bf16.msra.mxu0 %v945
        %1165 = vmatprep.subr.bf16.mxu0 %v954
        %1166 = vmatpush1.bf16.msra.mxu0 %v953
        %1167 = vmatprep.subr.bf16.mxu0 %v962
        %1168 = vmatpush1.bf16.msra.mxu0 %v961
        %1169 = vmatprep.subr.bf16.mxu0 %v970
        %1170 = vmatpush1.bf16.msra.mxu0 %v969
        %1171 = vmatprep.subr.bf16.mxu0 %v978
        %1172 = vmatpush1.bf16.msra.mxu0 %v977
        %1173 = vmatprep.subr.bf16.mxu0 %v986
        %1174 = vmatpush1.bf16.msra.mxu0 %v985
        %1175 = vmatprep.subr.bf16.mxu0 0
        %1176 = vmatpush1.bf16.msra.mxu0 0
        %1177 = vmatprep.subr.bf16.mxu0 0
        %1178 = vmatpush1.bf16.msra.mxu0 0
        %1179 = vmatprep.subr.bf16.mxu0 0
        %1180 = vmatpush1.bf16.msra.mxu0 0
        %1181 = vmatprep.subr.bf16.mxu0 0
        %1182 = vmatpush1.bf16.msra.mxu0 0
        %1183 = vmatprep.subr.bf16.mxu0 0
        %1184 = vmatpush1.bf16.msra.mxu0 0
        %1185 = vmatprep.subr.bf16.mxu0 0
        %1186 = vmatpush1.bf16.msra.mxu0 0
        %1187 = vmatprep.subr.bf16.mxu0 0
        %1188 = vmatpush1.bf16.msra.mxu0 0
        %1189 = vmatprep.subr.bf16.mxu0 0
        %1190 = vmatpush1.bf16.msra.mxu0 0
        %1191 = vmatprep.mubr.bf16.mxu0 0
        %1192 = vmatmul.mubr.bf16.gmra.mrb[0].mxu0 %v667
        %v1193 = vpop.f32.mrb[0].mxu0
        %v1194 = vadd.f32 0.0, %v1193
        %v1195 = vpop.f32.mrb[0].mxu0
        %v1196 = vadd.f32 0.0, %v1195
        %v1197 = vpop.f32.mrb[0].mxu0
        %v1198 = vadd.f32 0.0, %v1197
        %v1199 = vpop.f32.mrb[0].mxu0
        %v1200 = vadd.f32 0.0, %v1199
        %1201 = vmatprep.mubr.bf16.mxu0 0
        %1202 = vmatmul.mubr.bf16.gmra.mrb[0].mxu0 %v668
        %v1203 = vpop.f32.mrb[0].mxu0
        %v1204 = vadd.f32 0.0, %v1203
        %v1205 = vpop.f32.mrb[0].mxu0
        %v1206 = vadd.f32 0.0, %v1205
        %v1207 = vpop.f32.mrb[0].mxu0
        %v1208 = vadd.f32 0.0, %v1207
        %v1209 = vpop.f32.mrb[0].mxu0
        %v1210 = vadd.f32 0.0, %v1209
        %1211 = vdwg.mxu0
        %1212 = vmatprep.subr.bf16.mxu0 %v932
        %1213 = vmatpush1.bf16.msra.mxu0 %v931
        %1214 = vmatprep.subr.bf16.mxu0 %v940
        %1215 = vmatpush1.bf16.msra.mxu0 %v939
        %1216 = vmatprep.subr.bf16.mxu0 %v948
        %1217 = vmatpush1.bf16.msra.mxu0 %v947
        %1218 = vmatprep.subr.bf16.mxu0 %v956
        %1219 = vmatpush1.bf16.msra.mxu0 %v955
        %1220 = vmatprep.subr.bf16.mxu0 %v964
        %1221 = vmatpush1.bf16.msra.mxu0 %v963
        %1222 = vmatprep.subr.bf16.mxu0 %v972
        %1223 = vmatpush1.bf16.msra.mxu0 %v971
        %1224 = vmatprep.subr.bf16.mxu0 %v980
        %1225 = vmatpush1.bf16.msra.mxu0 %v979
        %1226 = vmatprep.subr.bf16.mxu0 %v988
        %1227 = vmatpush1.bf16.msra.mxu0 %v987
        %1228 = vmatprep.subr.bf16.mxu0 0
        %1229 = vmatpush1.bf16.msra.mxu0 0
        %1230 = vmatprep.subr.bf16.mxu0 0
        %1231 = vmatpush1.bf16.msra.mxu0 0
        %1232 = vmatprep.subr.bf16.mxu0 0
        %1233 = vmatpush1.bf16.msra.mxu0 0
        %1234 = vmatprep.subr.bf16.mxu0 0
        %1235 = vmatpush1.bf16.msra.mxu0 0
        %1236 = vmatprep.subr.bf16.mxu0 0
        %1237 = vmatpush1.bf16.msra.mxu0 0
        %1238 = vmatprep.subr.bf16.mxu0 0
        %1239 = vmatpush1.bf16.msra.mxu0 0
        %1240 = vmatprep.subr.bf16.mxu0 0
        %1241 = vmatpush1.bf16.msra.mxu0 0
        %1242 = vmatprep.subr.bf16.mxu0 0
        %1243 = vmatpush1.bf16.msra.mxu0 0
        %1244 = vmatprep.mubr.bf16.mxu0 0
        %1245 = vmatmul.mubr.bf16.gmra.mrb[0].mxu0 %v667
        %v1246 = vpop.f32.mrb[0].mxu0
        %v1247 = vadd.f32 0.0, %v1246
        %v1248 = vpop.f32.mrb[0].mxu0
        %v1249 = vadd.f32 0.0, %v1248
        %v1250 = vpop.f32.mrb[0].mxu0
        %v1251 = vadd.f32 0.0, %v1250
        %v1252 = vpop.f32.mrb[0].mxu0
        %v1253 = vadd.f32 0.0, %v1252
        %1254 = vmatprep.mubr.bf16.mxu0 0
        %1255 = vmatmul.mubr.bf16.gmra.mrb[0].mxu0 %v668
        %v1256 = vpop.f32.mrb[0].mxu0
        %v1257 = vadd.f32 0.0, %v1256
        %v1258 = vpop.f32.mrb[0].mxu0
        %v1259 = vadd.f32 0.0, %v1258
        %v1260 = vpop.f32.mrb[0].mxu0
        %v1261 = vadd.f32 0.0, %v1260
        %v1262 = vpop.f32.mrb[0].mxu0
        %v1263 = vadd.f32 0.0, %v1262
        %1264 = vdwg.mxu0
        %v1265 = vmax.f32 %v1088, %v1092
        %v1266 = vmax.f32 %v1265, %v1098
        %v1267 = vmax.f32 %v1266, %v1102
        %v1268 = vrot.slane %v1267, 4
        %v1269 = vmax.f32 %v1267, %v1268
        %v1270 = vrot.slane %v1269, 2
        %v1271 = vmax.f32 %v1269, %v1270
        %v1272 = vrot.slane %v1271, 1
        %v1273 = vmax.f32 %v1271, %v1272
        %v1274 = vmax.f32 %v1090, %v1094
        %v1275 = vmax.f32 %v1274, %v1100
        %v1276 = vmax.f32 %v1275, %v1104
        %v1277 = vrot.slane %v1276, 4
        %v1278 = vmax.f32 %v1276, %v1277
        %v1279 = vrot.slane %v1278, 2
        %v1280 = vmax.f32 %v1278, %v1279
        %v1281 = vrot.slane %v1280, 1
        %v1282 = vmax.f32 %v1280, %v1281
        %v1283 = vmax.f32 %v1141, %v1145
        %v1284 = vmax.f32 %v1283, %v1151
        %v1285 = vmax.f32 %v1284, %v1155
        %v1286 = vrot.slane %v1285, 4
        %v1287 = vmax.f32 %v1285, %v1286
        %v1288 = vrot.slane %v1287, 2
        %v1289 = vmax.f32 %v1287, %v1288
        %v1290 = vrot.slane %v1289, 1
        %v1291 = vmax.f32 %v1289, %v1290
        %v1292 = vmax.f32 %v1143, %v1147
        %v1293 = vmax.f32 %v1292, %v1153
        %v1294 = vmax.f32 %v1293, %v1157
        %v1295 = vrot.slane %v1294, 4
        %v1296 = vmax.f32 %v1294, %v1295
        %v1297 = vrot.slane %v1296, 2
        %v1298 = vmax.f32 %v1296, %v1297
        %v1299 = vrot.slane %v1298, 1
        %v1300 = vmax.f32 %v1298, %v1299
        %v1301 = vmax.f32 %v1194, %v1198
        %v1302 = vmax.f32 %v1301, %v1204
        %v1303 = vmax.f32 %v1302, %v1208
        %v1304 = vrot.slane %v1303, 4
        %v1305 = vmax.f32 %v1303, %v1304
        %v1306 = vrot.slane %v1305, 2
        %v1307 = vmax.f32 %v1305, %v1306
        %v1308 = vrot.slane %v1307, 1
        %v1309 = vmax.f32 %v1307, %v1308
        %v1310 = vmax.f32 %v1196, %v1200
        %v1311 = vmax.f32 %v1310, %v1206
        %v1312 = vmax.f32 %v1311, %v1210
        %v1313 = vrot.slane %v1312, 4
        %v1314 = vmax.f32 %v1312, %v1313
        %v1315 = vrot.slane %v1314, 2
        %v1316 = vmax.f32 %v1314, %v1315
        %v1317 = vrot.slane %v1316, 1
        %v1318 = vmax.f32 %v1316, %v1317
        %v1319 = vmax.f32 %v1247, %v1251
        %v1320 = vmax.f32 %v1319, %v1257
        %v1321 = vmax.f32 %v1320, %v1261
        %v1322 = vrot.slane %v1321, 4
        %v1323 = vmax.f32 %v1321, %v1322
        %v1324 = vrot.slane %v1323, 2
        %v1325 = vmax.f32 %v1323, %v1324
        %v1326 = vrot.slane %v1325, 1
        %v1327 = vmax.f32 %v1325, %v1326
        %v1328 = vmax.f32 %v1249, %v1253
        %v1329 = vmax.f32 %v1328, %v1259
        %v1330 = vmax.f32 %v1329, %v1263
        %v1331 = vrot.slane %v1330, 4
        %v1332 = vmax.f32 %v1330, %v1331
        %v1333 = vrot.slane %v1332, 2
        %v1334 = vmax.f32 %v1332, %v1333
        %v1335 = vrot.slane %v1334, 1
        %v1336 = vmax.f32 %v1334, %v1335
        %p1337 = scmp.eq.s32.totalorder %s32, 0
        // Predicated region
        $region73: #{_lambda_.1} parent=71 // pred_check
          %p1338 = pneg %p1337
        $region74: #{_lambda_.1} parent=71 // pred_check_branch
          %1340 = sbr.rel (%p1338) target = $region76
        $region75: #{_lambda_.1} parent=71 // pred_region
          %v1349 = vcombine.low %v1273, %v1282
          %v1350 = vcombine.low %v1291, %v1300
          %v1351 = vcombine.low %v1309, %v1318
          %v1352 = vcombine.low %v1327, %v1336
          %v1354 = vunpack.c.l.s4 1966171168
          %v1355 = vunpack.c.0.s8 %v1354
          %v1356 = vlaneseq
          %v1357 = vshrl.u32 %v1356, 7
          %v1358 = vsub.s32 %v1355, %v1357
          %v1359 = vrot.slane %v1349, %v1358
          %v1361 = vunpack.c.l.s4 1966171168
          %v1362 = vunpack.c.0.s8 %v1361
          %v1363 = vlaneseq
          %v1364 = vshrl.u32 %v1363, 7
          %v1365 = vsub.s32 %v1362, %v1364
          %v1366 = vrot.slane %v1350, %v1365
          %v1368 = vunpack.c.l.s4 1966171168
          %v1369 = vunpack.c.0.s8 %v1368
          %v1370 = vlaneseq
          %v1371 = vshrl.u32 %v1370, 7
          %v1372 = vsub.s32 %v1369, %v1371
          %v1373 = vrot.slane %v1351, %v1372
          %v1375 = vunpack.c.l.s4 1966171168
          %v1376 = vunpack.c.0.s8 %v1375
          %v1377 = vlaneseq
          %v1378 = vshrl.u32 %v1377, 7
          %v1379 = vsub.s32 %v1376, %v1378
          %v1380 = vrot.slane %v1352, %v1379
          %v1381 = vcombine.low %v1359, %v1366
          %v1382 = vcombine.low %v1373, %v1380
          %v1384 = vunpack.c.l.s4 1966171168
          %v1385 = vunpack.c.0.s8 %v1384
          %v1386 = vlaneseq
          %v1387 = vshrl.u32 %v1386, 7
          %v1388 = vsub.s32 %v1385, %v1387
          %v1389 = vrot.slane %v1381, %v1388
          %v1391 = vunpack.c.l.s4 1966171168
          %v1392 = vunpack.c.0.s8 %v1391
          %v1393 = vlaneseq
          %v1394 = vshrl.u32 %v1393, 7
          %v1395 = vsub.s32 %v1392, %v1394
          %v1396 = vrot.slane %v1382, %v1395
          %v1397 = vcombine.low %v1389, %v1396
          %1399 = vst [vmem:[#allocation2] sm:$0xff] %v1397
        $region76: #{_lambda_.1} parent=71 // pred_fallthru
          _
        %p1400 = scmp.gt.s32.totalorder %s32, 0
        // Predicated region
        $region77: #{_lambda_.1} parent=71 // pred_check
          %p1401 = pneg %p1400
        $region78: #{_lambda_.1} parent=71 // pred_check_branch
          %1403 = sbr.rel (%p1401) target = $region80
        $region79: #{_lambda_.1} parent=71 // pred_region
          %v1404 = vld [vmem:[#allocation2] sm:$0xff]
          %v1413 = vcombine.low %v1273, %v1282
          %v1414 = vcombine.low %v1291, %v1300
          %v1415 = vcombine.low %v1309, %v1318
          %v1416 = vcombine.low %v1327, %v1336
          %v1418 = vunpack.c.l.s4 1966171168
          %v1419 = vunpack.c.0.s8 %v1418
          %v1420 = vlaneseq
          %v1421 = vshrl.u32 %v1420, 7
          %v1422 = vsub.s32 %v1419, %v1421
          %v1423 = vrot.slane %v1413, %v1422
          %v1425 = vunpack.c.l.s4 1966171168
          %v1426 = vunpack.c.0.s8 %v1425
          %v1427 = vlaneseq
          %v1428 = vshrl.u32 %v1427, 7
          %v1429 = vsub.s32 %v1426, %v1428
          %v1430 = vrot.slane %v1414, %v1429
          %v1432 = vunpack.c.l.s4 1966171168
          %v1433 = vunpack.c.0.s8 %v1432
          %v1434 = vlaneseq
          %v1435 = vshrl.u32 %v1434, 7
          %v1436 = vsub.s32 %v1433, %v1435
          %v1437 = vrot.slane %v1415, %v1436
          %v1439 = vunpack.c.l.s4 1966171168
          %v1440 = vunpack.c.0.s8 %v1439
          %v1441 = vlaneseq
          %v1442 = vshrl.u32 %v1441, 7
          %v1443 = vsub.s32 %v1440, %v1442
          %v1444 = vrot.slane %v1416, %v1443
          %v1445 = vcombine.low %v1423, %v1430
          %v1446 = vcombine.low %v1437, %v1444
          %v1448 = vunpack.c.l.s4 1966171168
          %v1449 = vunpack.c.0.s8 %v1448
          %v1450 = vlaneseq
          %v1451 = vshrl.u32 %v1450, 7
          %v1452 = vsub.s32 %v1449, %v1451
          %v1453 = vrot.slane %v1445, %v1452
          %v1455 = vunpack.c.l.s4 1966171168
          %v1456 = vunpack.c.0.s8 %v1455
          %v1457 = vlaneseq
          %v1458 = vshrl.u32 %v1457, 7
          %v1459 = vsub.s32 %v1456, %v1458
          %v1460 = vrot.slane %v1446, %v1459
          %v1461 = vcombine.low %v1453, %v1460
          %v1463 = vmax.f32 %v1404, %v1461
          %1464 = vst [vmem:[#allocation2] sm:$0xff] %v1463
        $region80: #{_lambda_.1} parent=71 // pred_fallthru
          _
        // Predicated region
        $region81: #{_lambda_.1} parent=71 // pred_check
          %p1465 = pneg %p1337
        $region82: #{_lambda_.1} parent=71 // pred_check_branch
          %1467 = sbr.rel (%p1465) target = $region84
        $region83: #{_lambda_.1} parent=71 // pred_region
          %v1468 = vld [vmem:[#allocation2] sm:$0xff]
          %v1469 = vld [vmem:[%s6] sm:$0xff]
          %v1470 = vadd.f32 %v1468, %v1469
          %v1472 = vlaneseq
          %v1473 = vshrl.u32 %v1472, 7
          %v1474 = vsub.s32 0, %v1473
          %v1475 = vrot.slane %v1470, %v1474
          %v1476 = vlaneseq
          %v1477 = vshrl.u32 %v1476, 7
          %v1478 = vsub.s32 1, %v1477
          %v1479 = vrot.slane %v1470, %v1478
          %v1480 = vlaneseq
          %v1481 = vshrl.u32 %v1480, 7
          %v1482 = vsub.s32 2, %v1481
          %v1483 = vrot.slane %v1470, %v1482
          %v1484 = vlaneseq
          %v1485 = vshrl.u32 %v1484, 7
          %v1486 = vsub.s32 3, %v1485
          %v1487 = vrot.slane %v1470, %v1486
          %v1488 = vlaneseq
          %v1489 = vshrl.u32 %v1488, 7
          %v1490 = vsub.s32 4, %v1489
          %v1491 = vrot.slane %v1470, %v1490
          %v1492 = vlaneseq
          %v1493 = vshrl.u32 %v1492, 7
          %v1494 = vsub.s32 5, %v1493
          %v1495 = vrot.slane %v1470, %v1494
          %v1496 = vlaneseq
          %v1497 = vshrl.u32 %v1496, 7
          %v1498 = vsub.s32 6, %v1497
          %v1499 = vrot.slane %v1470, %v1498
          %v1500 = vlaneseq
          %v1501 = vshrl.u32 %v1500, 7
          %v1502 = vsub.s32 7, %v1501
          %v1503 = vrot.slane %v1470, %v1502
          %v1512 = vpack.c.bf16 %v1475, %v1475
          %v1513 = vpack.c.bf16 %v1479, %v1479
          %v1514 = vpack.c.bf16 %v1483, %v1483
          %v1515 = vpack.c.bf16 %v1487, %v1487
          %v1516 = vpack.c.bf16 %v1491, %v1491
          %v1517 = vpack.c.bf16 %v1495, %v1495
          %v1518 = vpack.c.bf16 %v1499, %v1499
          %v1519 = vpack.c.bf16 %v1503, %v1503
          %v1520 = vld [vmem:[%s7] sm:$0xff]
          %v1521 = vld [vmem:[%s7 + $0x8] sm:$0xff]
          %v1522 = vld [vmem:[%s7 + $0x10] sm:$0xff]
          %v1523 = vld [vmem:[%s7 + $0x18] sm:$0xff]
          %v1524 = vld [vmem:[%s7 + $0x20] sm:$0xff]
          %v1525 = vld [vmem:[%s7 + $0x28] sm:$0xff]
          %v1526 = vld [vmem:[%s7 + $0x30] sm:$0xff]
          %v1527 = vld [vmem:[%s7 + $0x38] sm:$0xff]
          %v1528 = vld [vmem:[%s7 + $0x40] sm:$0xff]
          %v1529 = vld [vmem:[%s7 + $0x48] sm:$0xff]
          %v1530 = vld [vmem:[%s7 + $0x50] sm:$0xff]
          %v1531 = vld [vmem:[%s7 + $0x58] sm:$0xff]
          %v1532 = vld [vmem:[%s7 + $0x60] sm:$0xff]
          %v1533 = vld [vmem:[%s7 + $0x68] sm:$0xff]
          %v1534 = vld [vmem:[%s7 + $0x70] sm:$0xff]
          %v1535 = vld [vmem:[%s7 + $0x78] sm:$0xff]
          %v1536 = vld [vmem:[%s7 + $0x80] sm:$0xff]
          %v1537 = vld [vmem:[%s7 + $0x88] sm:$0xff]
          %v1538 = vld [vmem:[%s7 + $0x90] sm:$0xff]
          %v1539 = vld [vmem:[%s7 + $0x98] sm:$0xff]
          %v1540 = vld [vmem:[%s7 + $0xa0] sm:$0xff]
          %v1541 = vld [vmem:[%s7 + $0xa8] sm:$0xff]
          %v1542 = vld [vmem:[%s7 + $0xb0] sm:$0xff]
          %v1543 = vld [vmem:[%s7 + $0xb8] sm:$0xff]
          %v1544 = vld [vmem:[%s7 + $0xc0] sm:$0xff]
          %v1545 = vld [vmem:[%s7 + $0xc8] sm:$0xff]
          %v1546 = vld [vmem:[%s7 + $0xd0] sm:$0xff]
          %v1547 = vld [vmem:[%s7 + $0xd8] sm:$0xff]
          %v1548 = vld [vmem:[%s7 + $0xe0] sm:$0xff]
          %v1549 = vld [vmem:[%s7 + $0xe8] sm:$0xff]
          %v1550 = vld [vmem:[%s7 + $0xf0] sm:$0xff]
          %v1551 = vld [vmem:[%s7 + $0xf8] sm:$0xff]
          %v1552 = vld [vmem:[%s7 + $0x100] sm:$0xff]
          %v1553 = vld [vmem:[%s7 + $0x108] sm:$0xff]
          %v1554 = vld [vmem:[%s7 + $0x110] sm:$0xff]
          %v1555 = vld [vmem:[%s7 + $0x118] sm:$0xff]
          %v1556 = vld [vmem:[%s7 + $0x120] sm:$0xff]
          %v1557 = vld [vmem:[%s7 + $0x128] sm:$0xff]
          %v1558 = vld [vmem:[%s7 + $0x130] sm:$0xff]
          %v1559 = vld [vmem:[%s7 + $0x138] sm:$0xff]
          %v1560 = vld [vmem:[%s7 + $0x140] sm:$0xff]
          %v1561 = vld [vmem:[%s7 + $0x148] sm:$0xff]
          %v1562 = vld [vmem:[%s7 + $0x150] sm:$0xff]
          %v1563 = vld [vmem:[%s7 + $0x158] sm:$0xff]
          %v1564 = vld [vmem:[%s7 + $0x160] sm:$0xff]
          %v1565 = vld [vmem:[%s7 + $0x168] sm:$0xff]
          %v1566 = vld [vmem:[%s7 + $0x170] sm:$0xff]
          %v1567 = vld [vmem:[%s7 + $0x178] sm:$0xff]
          %v1568 = vld [vmem:[%s7 + $0x180] sm:$0xff]
          %v1569 = vld [vmem:[%s7 + $0x188] sm:$0xff]
          %v1570 = vld [vmem:[%s7 + $0x190] sm:$0xff]
          %v1571 = vld [vmem:[%s7 + $0x198] sm:$0xff]
          %v1572 = vld [vmem:[%s7 + $0x1a0] sm:$0xff]
          %v1573 = vld [vmem:[%s7 + $0x1a8] sm:$0xff]
          %v1574 = vld [vmem:[%s7 + $0x1b0] sm:$0xff]
          %v1575 = vld [vmem:[%s7 + $0x1b8] sm:$0xff]
          %v1576 = vld [vmem:[%s7 + $0x1c0] sm:$0xff]
          %v1577 = vld [vmem:[%s7 + $0x1c8] sm:$0xff]
          %v1578 = vld [vmem:[%s7 + $0x1d0] sm:$0xff]
          %v1579 = vld [vmem:[%s7 + $0x1d8] sm:$0xff]
          %v1580 = vld [vmem:[%s7 + $0x1e0] sm:$0xff]
          %v1581 = vld [vmem:[%s7 + $0x1e8] sm:$0xff]
          %v1582 = vld [vmem:[%s7 + $0x1f0] sm:$0xff]
          %v1583 = vld [vmem:[%s7 + $0x1f8] sm:$0xff]
          %v1584 = vld [vmem:[%s7 + $0x200] sm:$0xff]
          %v1585 = vld [vmem:[%s7 + $0x208] sm:$0xff]
          %v1586 = vld [vmem:[%s7 + $0x210] sm:$0xff]
          %v1587 = vld [vmem:[%s7 + $0x218] sm:$0xff]
          %v1588 = vld [vmem:[%s7 + $0x220] sm:$0xff]
          %v1589 = vld [vmem:[%s7 + $0x228] sm:$0xff]
          %v1590 = vld [vmem:[%s7 + $0x230] sm:$0xff]
          %v1591 = vld [vmem:[%s7 + $0x238] sm:$0xff]
          %v1592 = vld [vmem:[%s7 + $0x240] sm:$0xff]
          %v1593 = vld [vmem:[%s7 + $0x248] sm:$0xff]
          %v1594 = vld [vmem:[%s7 + $0x250] sm:$0xff]
          %v1595 = vld [vmem:[%s7 + $0x258] sm:$0xff]
          %v1596 = vld [vmem:[%s7 + $0x260] sm:$0xff]
          %v1597 = vld [vmem:[%s7 + $0x268] sm:$0xff]
          %v1598 = vld [vmem:[%s7 + $0x270] sm:$0xff]
          %v1599 = vld [vmem:[%s7 + $0x278] sm:$0xff]
          %v1600 = vld [vmem:[%s7 + $0x280] sm:$0xff]
          %v1601 = vld [vmem:[%s7 + $0x288] sm:$0xff]
          %v1602 = vld [vmem:[%s7 + $0x290] sm:$0xff]
          %v1603 = vld [vmem:[%s7 + $0x298] sm:$0xff]
          %v1604 = vld [vmem:[%s7 + $0x2a0] sm:$0xff]
          %v1605 = vld [vmem:[%s7 + $0x2a8] sm:$0xff]
          %v1606 = vld [vmem:[%s7 + $0x2b0] sm:$0xff]
          %v1607 = vld [vmem:[%s7 + $0x2b8] sm:$0xff]
          %v1608 = vld [vmem:[%s7 + $0x2c0] sm:$0xff]
          %v1609 = vld [vmem:[%s7 + $0x2c8] sm:$0xff]
          %v1610 = vld [vmem:[%s7 + $0x2d0] sm:$0xff]
          %v1611 = vld [vmem:[%s7 + $0x2d8] sm:$0xff]
          %v1612 = vld [vmem:[%s7 + $0x2e0] sm:$0xff]
          %v1613 = vld [vmem:[%s7 + $0x2e8] sm:$0xff]
          %v1614 = vld [vmem:[%s7 + $0x2f0] sm:$0xff]
          %v1615 = vld [vmem:[%s7 + $0x2f8] sm:$0xff]
          %v1616 = vld [vmem:[%s7 + $0x300] sm:$0xff]
          %v1617 = vld [vmem:[%s7 + $0x308] sm:$0xff]
          %v1618 = vld [vmem:[%s7 + $0x310] sm:$0xff]
          %v1619 = vld [vmem:[%s7 + $0x318] sm:$0xff]
          %v1620 = vld [vmem:[%s7 + $0x320] sm:$0xff]
          %v1621 = vld [vmem:[%s7 + $0x328] sm:$0xff]
          %v1622 = vld [vmem:[%s7 + $0x330] sm:$0xff]
          %v1623 = vld [vmem:[%s7 + $0x338] sm:$0xff]
          %v1624 = vld [vmem:[%s7 + $0x340] sm:$0xff]
          %v1625 = vld [vmem:[%s7 + $0x348] sm:$0xff]
          %v1626 = vld [vmem:[%s7 + $0x350] sm:$0xff]
          %v1627 = vld [vmem:[%s7 + $0x358] sm:$0xff]
          %v1628 = vld [vmem:[%s7 + $0x360] sm:$0xff]
          %v1629 = vld [vmem:[%s7 + $0x368] sm:$0xff]
          %v1630 = vld [vmem:[%s7 + $0x370] sm:$0xff]
          %v1631 = vld [vmem:[%s7 + $0x378] sm:$0xff]
          %v1632 = vld [vmem:[%s7 + $0x380] sm:$0xff]
          %v1633 = vld [vmem:[%s7 + $0x388] sm:$0xff]
          %v1634 = vld [vmem:[%s7 + $0x390] sm:$0xff]
          %v1635 = vld [vmem:[%s7 + $0x398] sm:$0xff]
          %v1636 = vld [vmem:[%s7 + $0x3a0] sm:$0xff]
          %v1637 = vld [vmem:[%s7 + $0x3a8] sm:$0xff]
          %v1638 = vld [vmem:[%s7 + $0x3b0] sm:$0xff]
          %v1639 = vld [vmem:[%s7 + $0x3b8] sm:$0xff]
          %v1640 = vld [vmem:[%s7 + $0x3c0] sm:$0xff]
          %v1641 = vld [vmem:[%s7 + $0x3c8] sm:$0xff]
          %v1642 = vld [vmem:[%s7 + $0x3d0] sm:$0xff]
          %v1643 = vld [vmem:[%s7 + $0x3d8] sm:$0xff]
          %v1644 = vld [vmem:[%s7 + $0x3e0] sm:$0xff]
          %v1645 = vld [vmem:[%s7 + $0x3e8] sm:$0xff]
          %v1646 = vld [vmem:[%s7 + $0x3f0] sm:$0xff]
          %v1647 = vld [vmem:[%s7 + $0x3f8] sm:$0xff]
          %v1648 = vld [vmem:[%s7 + $0x400] sm:$0xff]
          %v1649 = vld [vmem:[%s7 + $0x408] sm:$0xff]
          %v1650 = vld [vmem:[%s7 + $0x410] sm:$0xff]
          %v1651 = vld [vmem:[%s7 + $0x418] sm:$0xff]
          %v1652 = vld [vmem:[%s7 + $0x420] sm:$0xff]
          %v1653 = vld [vmem:[%s7 + $0x428] sm:$0xff]
          %v1654 = vld [vmem:[%s7 + $0x430] sm:$0xff]
          %v1655 = vld [vmem:[%s7 + $0x438] sm:$0xff]
          %v1656 = vld [vmem:[%s7 + $0x440] sm:$0xff]
          %v1657 = vld [vmem:[%s7 + $0x448] sm:$0xff]
          %v1658 = vld [vmem:[%s7 + $0x450] sm:$0xff]
          %v1659 = vld [vmem:[%s7 + $0x458] sm:$0xff]
          %v1660 = vld [vmem:[%s7 + $0x460] sm:$0xff]
          %v1661 = vld [vmem:[%s7 + $0x468] sm:$0xff]
          %v1662 = vld [vmem:[%s7 + $0x470] sm:$0xff]
          %v1663 = vld [vmem:[%s7 + $0x478] sm:$0xff]
          %v1664 = vld [vmem:[%s7 + $0x480] sm:$0xff]
          %v1665 = vld [vmem:[%s7 + $0x488] sm:$0xff]
          %v1666 = vld [vmem:[%s7 + $0x490] sm:$0xff]
          %v1667 = vld [vmem:[%s7 + $0x498] sm:$0xff]
          %v1668 = vld [vmem:[%s7 + $0x4a0] sm:$0xff]
          %v1669 = vld [vmem:[%s7 + $0x4a8] sm:$0xff]
          %v1670 = vld [vmem:[%s7 + $0x4b0] sm:$0xff]
          %v1671 = vld [vmem:[%s7 + $0x4b8] sm:$0xff]
          %v1672 = vld [vmem:[%s7 + $0x4c0] sm:$0xff]
          %v1673 = vld [vmem:[%s7 + $0x4c8] sm:$0xff]
          %v1674 = vld [vmem:[%s7 + $0x4d0] sm:$0xff]
          %v1675 = vld [vmem:[%s7 + $0x4d8] sm:$0xff]
          %v1676 = vld [vmem:[%s7 + $0x4e0] sm:$0xff]
          %v1677 = vld [vmem:[%s7 + $0x4e8] sm:$0xff]
          %v1678 = vld [vmem:[%s7 + $0x4f0] sm:$0xff]
          %v1679 = vld [vmem:[%s7 + $0x4f8] sm:$0xff]
          %v1680 = vld [vmem:[%s7 + $0x500] sm:$0xff]
          %v1681 = vld [vmem:[%s7 + $0x508] sm:$0xff]
          %v1682 = vld [vmem:[%s7 + $0x510] sm:$0xff]
          %v1683 = vld [vmem:[%s7 + $0x518] sm:$0xff]
          %v1684 = vld [vmem:[%s7 + $0x520] sm:$0xff]
          %v1685 = vld [vmem:[%s7 + $0x528] sm:$0xff]
          %v1686 = vld [vmem:[%s7 + $0x530] sm:$0xff]
          %v1687 = vld [vmem:[%s7 + $0x538] sm:$0xff]
          %v1688 = vld [vmem:[%s7 + $0x540] sm:$0xff]
          %v1689 = vld [vmem:[%s7 + $0x548] sm:$0xff]
          %v1690 = vld [vmem:[%s7 + $0x550] sm:$0xff]
          %v1691 = vld [vmem:[%s7 + $0x558] sm:$0xff]
          %v1692 = vld [vmem:[%s7 + $0x560] sm:$0xff]
          %v1693 = vld [vmem:[%s7 + $0x568] sm:$0xff]
          %v1694 = vld [vmem:[%s7 + $0x570] sm:$0xff]
          %v1695 = vld [vmem:[%s7 + $0x578] sm:$0xff]
          %v1696 = vld [vmem:[%s7 + $0x580] sm:$0xff]
          %v1697 = vld [vmem:[%s7 + $0x588] sm:$0xff]
          %v1698 = vld [vmem:[%s7 + $0x590] sm:$0xff]
          %v1699 = vld [vmem:[%s7 + $0x598] sm:$0xff]
          %v1700 = vld [vmem:[%s7 + $0x5a0] sm:$0xff]
          %v1701 = vld [vmem:[%s7 + $0x5a8] sm:$0xff]
          %v1702 = vld [vmem:[%s7 + $0x5b0] sm:$0xff]
          %v1703 = vld [vmem:[%s7 + $0x5b8] sm:$0xff]
          %v1704 = vld [vmem:[%s7 + $0x5c0] sm:$0xff]
          %v1705 = vld [vmem:[%s7 + $0x5c8] sm:$0xff]
          %v1706 = vld [vmem:[%s7 + $0x5d0] sm:$0xff]
          %v1707 = vld [vmem:[%s7 + $0x5d8] sm:$0xff]
          %v1708 = vld [vmem:[%s7 + $0x5e0] sm:$0xff]
          %v1709 = vld [vmem:[%s7 + $0x5e8] sm:$0xff]
          %v1710 = vld [vmem:[%s7 + $0x5f0] sm:$0xff]
          %v1711 = vld [vmem:[%s7 + $0x5f8] sm:$0xff]
          %v1712 = vld [vmem:[%s7 + $0x600] sm:$0xff]
          %v1713 = vld [vmem:[%s7 + $0x608] sm:$0xff]
          %v1714 = vld [vmem:[%s7 + $0x610] sm:$0xff]
          %v1715 = vld [vmem:[%s7 + $0x618] sm:$0xff]
          %v1716 = vld [vmem:[%s7 + $0x620] sm:$0xff]
          %v1717 = vld [vmem:[%s7 + $0x628] sm:$0xff]
          %v1718 = vld [vmem:[%s7 + $0x630] sm:$0xff]
          %v1719 = vld [vmem:[%s7 + $0x638] sm:$0xff]
          %v1720 = vld [vmem:[%s7 + $0x640] sm:$0xff]
          %v1721 = vld [vmem:[%s7 + $0x648] sm:$0xff]
          %v1722 = vld [vmem:[%s7 + $0x650] sm:$0xff]
          %v1723 = vld [vmem:[%s7 + $0x658] sm:$0xff]
          %v1724 = vld [vmem:[%s7 + $0x660] sm:$0xff]
          %v1725 = vld [vmem:[%s7 + $0x668] sm:$0xff]
          %v1726 = vld [vmem:[%s7 + $0x670] sm:$0xff]
          %v1727 = vld [vmem:[%s7 + $0x678] sm:$0xff]
          %v1728 = vld [vmem:[%s7 + $0x680] sm:$0xff]
          %v1729 = vld [vmem:[%s7 + $0x688] sm:$0xff]
          %v1730 = vld [vmem:[%s7 + $0x690] sm:$0xff]
          %v1731 = vld [vmem:[%s7 + $0x698] sm:$0xff]
          %v1732 = vld [vmem:[%s7 + $0x6a0] sm:$0xff]
          %v1733 = vld [vmem:[%s7 + $0x6a8] sm:$0xff]
          %v1734 = vld [vmem:[%s7 + $0x6b0] sm:$0xff]
          %v1735 = vld [vmem:[%s7 + $0x6b8] sm:$0xff]
          %v1736 = vld [vmem:[%s7 + $0x6c0] sm:$0xff]
          %v1737 = vld [vmem:[%s7 + $0x6c8] sm:$0xff]
          %v1738 = vld [vmem:[%s7 + $0x6d0] sm:$0xff]
          %v1739 = vld [vmem:[%s7 + $0x6d8] sm:$0xff]
          %v1740 = vld [vmem:[%s7 + $0x6e0] sm:$0xff]
          %v1741 = vld [vmem:[%s7 + $0x6e8] sm:$0xff]
          %v1742 = vld [vmem:[%s7 + $0x6f0] sm:$0xff]
          %v1743 = vld [vmem:[%s7 + $0x6f8] sm:$0xff]
          %v1744 = vld [vmem:[%s7 + $0x700] sm:$0xff]
          %v1745 = vld [vmem:[%s7 + $0x708] sm:$0xff]
          %v1746 = vld [vmem:[%s7 + $0x710] sm:$0xff]
          %v1747 = vld [vmem:[%s7 + $0x718] sm:$0xff]
          %v1748 = vld [vmem:[%s7 + $0x720] sm:$0xff]
          %v1749 = vld [vmem:[%s7 + $0x728] sm:$0xff]
          %v1750 = vld [vmem:[%s7 + $0x730] sm:$0xff]
          %v1751 = vld [vmem:[%s7 + $0x738] sm:$0xff]
          %v1752 = vld [vmem:[%s7 + $0x740] sm:$0xff]
          %v1753 = vld [vmem:[%s7 + $0x748] sm:$0xff]
          %v1754 = vld [vmem:[%s7 + $0x750] sm:$0xff]
          %v1755 = vld [vmem:[%s7 + $0x758] sm:$0xff]
          %v1756 = vld [vmem:[%s7 + $0x760] sm:$0xff]
          %v1757 = vld [vmem:[%s7 + $0x768] sm:$0xff]
          %v1758 = vld [vmem:[%s7 + $0x770] sm:$0xff]
          %v1759 = vld [vmem:[%s7 + $0x778] sm:$0xff]
          %v1760 = vld [vmem:[%s7 + $0x780] sm:$0xff]
          %v1761 = vld [vmem:[%s7 + $0x788] sm:$0xff]
          %v1762 = vld [vmem:[%s7 + $0x790] sm:$0xff]
          %v1763 = vld [vmem:[%s7 + $0x798] sm:$0xff]
          %v1764 = vld [vmem:[%s7 + $0x7a0] sm:$0xff]
          %v1765 = vld [vmem:[%s7 + $0x7a8] sm:$0xff]
          %v1766 = vld [vmem:[%s7 + $0x7b0] sm:$0xff]
          %v1767 = vld [vmem:[%s7 + $0x7b8] sm:$0xff]
          %v1768 = vld [vmem:[%s7 + $0x7c0] sm:$0xff]
          %v1769 = vld [vmem:[%s7 + $0x7c8] sm:$0xff]
          %v1770 = vld [vmem:[%s7 + $0x7d0] sm:$0xff]
          %v1771 = vld [vmem:[%s7 + $0x7d8] sm:$0xff]
          %v1772 = vld [vmem:[%s7 + $0x7e0] sm:$0xff]
          %v1773 = vld [vmem:[%s7 + $0x7e8] sm:$0xff]
          %v1774 = vld [vmem:[%s7 + $0x7f0] sm:$0xff]
          %v1775 = vld [vmem:[%s7 + $0x7f8] sm:$0xff]
          %v1776 = vld [vmem:[%s8] sm:$0xf]
          %v2033 = vunpack.c.l.b16 %v1520
          %v2034 = vunpack.c.h.b16 %v1520
          %v2035 = vunpack.c.l.b16 %v1521
          %v2036 = vunpack.c.h.b16 %v1521
          %v2037 = vunpack.c.l.b16 %v1522
          %v2038 = vunpack.c.h.b16 %v1522
          %v2039 = vunpack.c.l.b16 %v1523
          %v2040 = vunpack.c.h.b16 %v1523
          %v2041 = vunpack.c.l.b16 %v1524
          %v2042 = vunpack.c.h.b16 %v1524
          %v2043 = vunpack.c.l.b16 %v1525
          %v2044 = vunpack.c.h.b16 %v1525
          %v2045 = vunpack.c.l.b16 %v1526
          %v2046 = vunpack.c.h.b16 %v1526
          %v2047 = vunpack.c.l.b16 %v1527
          %v2048 = vunpack.c.h.b16 %v1527
          %v2049 = vunpack.c.l.b16 %v1528
          %v2050 = vunpack.c.h.b16 %v1528
          %v2051 = vunpack.c.l.b16 %v1529
          %v2052 = vunpack.c.h.b16 %v1529
          %v2053 = vunpack.c.l.b16 %v1530
          %v2054 = vunpack.c.h.b16 %v1530
          %v2055 = vunpack.c.l.b16 %v1531
          %v2056 = vunpack.c.h.b16 %v1531
          %v2057 = vunpack.c.l.b16 %v1532
          %v2058 = vunpack.c.h.b16 %v1532
          %v2059 = vunpack.c.l.b16 %v1533
          %v2060 = vunpack.c.h.b16 %v1533
          %v2061 = vunpack.c.l.b16 %v1534
          %v2062 = vunpack.c.h.b16 %v1534
          %v2063 = vunpack.c.l.b16 %v1535
          %v2064 = vunpack.c.h.b16 %v1535
          %v2065 = vunpack.c.l.b16 %v1536
          %v2066 = vunpack.c.h.b16 %v1536
          %v2067 = vunpack.c.l.b16 %v1537
          %v2068 = vunpack.c.h.b16 %v1537
          %v2069 = vunpack.c.l.b16 %v1538
          %v2070 = vunpack.c.h.b16 %v1538
          %v2071 = vunpack.c.l.b16 %v1539
          %v2072 = vunpack.c.h.b16 %v1539
          %v2073 = vunpack.c.l.b16 %v1540
          %v2074 = vunpack.c.h.b16 %v1540
          %v2075 = vunpack.c.l.b16 %v1541
          %v2076 = vunpack.c.h.b16 %v1541
          %v2077 = vunpack.c.l.b16 %v1542
          %v2078 = vunpack.c.h.b16 %v1542
          %v2079 = vunpack.c.l.b16 %v1543
          %v2080 = vunpack.c.h.b16 %v1543
          %v2081 = vunpack.c.l.b16 %v1544
          %v2082 = vunpack.c.h.b16 %v1544
          %v2083 = vunpack.c.l.b16 %v1545
          %v2084 = vunpack.c.h.b16 %v1545
          %v2085 = vunpack.c.l.b16 %v1546
          %v2086 = vunpack.c.h.b16 %v1546
          %v2087 = vunpack.c.l.b16 %v1547
          %v2088 = vunpack.c.h.b16 %v1547
          %v2089 = vunpack.c.l.b16 %v1548
          %v2090 = vunpack.c.h.b16 %v1548
          %v2091 = vunpack.c.l.b16 %v1549
          %v2092 = vunpack.c.h.b16 %v1549
          %v2093 = vunpack.c.l.b16 %v1550
          %v2094 = vunpack.c.h.b16 %v1550
          %v2095 = vunpack.c.l.b16 %v1551
          %v2096 = vunpack.c.h.b16 %v1551
          %v2097 = vunpack.c.l.b16 %v1552
          %v2098 = vunpack.c.h.b16 %v1552
          %v2099 = vunpack.c.l.b16 %v1553
          %v2100 = vunpack.c.h.b16 %v1553
          %v2101 = vunpack.c.l.b16 %v1554
          %v2102 = vunpack.c.h.b16 %v1554
          %v2103 = vunpack.c.l.b16 %v1555
          %v2104 = vunpack.c.h.b16 %v1555
          %v2105 = vunpack.c.l.b16 %v1556
          %v2106 = vunpack.c.h.b16 %v1556
          %v2107 = vunpack.c.l.b16 %v1557
          %v2108 = vunpack.c.h.b16 %v1557
          %v2109 = vunpack.c.l.b16 %v1558
          %v2110 = vunpack.c.h.b16 %v1558
          %v2111 = vunpack.c.l.b16 %v1559
          %v2112 = vunpack.c.h.b16 %v1559
          %v2113 = vunpack.c.l.b16 %v1560
          %v2114 = vunpack.c.h.b16 %v1560
          %v2115 = vunpack.c.l.b16 %v1561
          %v2116 = vunpack.c.h.b16 %v1561
          %v2117 = vunpack.c.l.b16 %v1562
          %v2118 = vunpack.c.h.b16 %v1562
          %v2119 = vunpack.c.l.b16 %v1563
          %v2120 = vunpack.c.h.b16 %v1563
          %v2121 = vunpack.c.l.b16 %v1564
          %v2122 = vunpack.c.h.b16 %v1564
          %v2123 = vunpack.c.l.b16 %v1565
          %v2124 = vunpack.c.h.b16 %v1565
          %v2125 = vunpack.c.l.b16 %v1566
          %v2126 = vunpack.c.h.b16 %v1566
          %v2127 = vunpack.c.l.b16 %v1567
          %v2128 = vunpack.c.h.b16 %v1567
          %v2129 = vunpack.c.l.b16 %v1568
          %v2130 = vunpack.c.h.b16 %v1568
          %v2131 = vunpack.c.l.b16 %v1569
          %v2132 = vunpack.c.h.b16 %v1569
          %v2133 = vunpack.c.l.b16 %v1570
          %v2134 = vunpack.c.h.b16 %v1570
          %v2135 = vunpack.c.l.b16 %v1571
          %v2136 = vunpack.c.h.b16 %v1571
          %v2137 = vunpack.c.l.b16 %v1572
          %v2138 = vunpack.c.h.b16 %v1572
          %v2139 = vunpack.c.l.b16 %v1573
          %v2140 = vunpack.c.h.b16 %v1573
          %v2141 = vunpack.c.l.b16 %v1574
          %v2142 = vunpack.c.h.b16 %v1574
          %v2143 = vunpack.c.l.b16 %v1575
          %v2144 = vunpack.c.h.b16 %v1575
          %v2145 = vunpack.c.l.b16 %v1576
          %v2146 = vunpack.c.h.b16 %v1576
          %v2147 = vunpack.c.l.b16 %v1577
          %v2148 = vunpack.c.h.b16 %v1577
          %v2149 = vunpack.c.l.b16 %v1578
          %v2150 = vunpack.c.h.b16 %v1578
          %v2151 = vunpack.c.l.b16 %v1579
          %v2152 = vunpack.c.h.b16 %v1579
          %v2153 = vunpack.c.l.b16 %v1580
          %v2154 = vunpack.c.h.b16 %v1580
          %v2155 = vunpack.c.l.b16 %v1581
          %v2156 = vunpack.c.h.b16 %v1581
          %v2157 = vunpack.c.l.b16 %v1582
          %v2158 = vunpack.c.h.b16 %v1582
          %v2159 = vunpack.c.l.b16 %v1583
          %v2160 = vunpack.c.h.b16 %v1583
          %v2161 = vunpack.c.l.b16 %v1584
          %v2162 = vunpack.c.h.b16 %v1584
          %v2163 = vunpack.c.l.b16 %v1585
          %v2164 = vunpack.c.h.b16 %v1585
          %v2165 = vunpack.c.l.b16 %v1586
          %v2166 = vunpack.c.h.b16 %v1586
          %v2167 = vunpack.c.l.b16 %v1587
          %v2168 = vunpack.c.h.b16 %v1587
          %v2169 = vunpack.c.l.b16 %v1588
          %v2170 = vunpack.c.h.b16 %v1588
          %v2171 = vunpack.c.l.b16 %v1589
          %v2172 = vunpack.c.h.b16 %v1589
          %v2173 = vunpack.c.l.b16 %v1590
          %v2174 = vunpack.c.h.b16 %v1590
          %v2175 = vunpack.c.l.b16 %v1591
          %v2176 = vunpack.c.h.b16 %v1591
          %v2177 = vunpack.c.l.b16 %v1592
          %v2178 = vunpack.c.h.b16 %v1592
          %v2179 = vunpack.c.l.b16 %v1593
          %v2180 = vunpack.c.h.b16 %v1593
          %v2181 = vunpack.c.l.b16 %v1594
          %v2182 = vunpack.c.h.b16 %v1594
          %v2183 = vunpack.c.l.b16 %v1595
          %v2184 = vunpack.c.h.b16 %v1595
          %v2185 = vunpack.c.l.b16 %v1596
          %v2186 = vunpack.c.h.b16 %v1596
          %v2187 = vunpack.c.l.b16 %v1597
          %v2188 = vunpack.c.h.b16 %v1597
          %v2189 = vunpack.c.l.b16 %v1598
          %v2190 = vunpack.c.h.b16 %v1598
          %v2191 = vunpack.c.l.b16 %v1599
          %v2192 = vunpack.c.h.b16 %v1599
          %v2193 = vunpack.c.l.b16 %v1600
          %v2194 = vunpack.c.h.b16 %v1600
          %v2195 = vunpack.c.l.b16 %v1601
          %v2196 = vunpack.c.h.b16 %v1601
          %v2197 = vunpack.c.l.b16 %v1602
          %v2198 = vunpack.c.h.b16 %v1602
          %v2199 = vunpack.c.l.b16 %v1603
          %v2200 = vunpack.c.h.b16 %v1603
          %v2201 = vunpack.c.l.b16 %v1604
          %v2202 = vunpack.c.h.b16 %v1604
          %v2203 = vunpack.c.l.b16 %v1605
          %v2204 = vunpack.c.h.b16 %v1605
          %v2205 = vunpack.c.l.b16 %v1606
          %v2206 = vunpack.c.h.b16 %v1606
          %v2207 = vunpack.c.l.b16 %v1607
          %v2208 = vunpack.c.h.b16 %v1607
          %v2209 = vunpack.c.l.b16 %v1608
          %v2210 = vunpack.c.h.b16 %v1608
          %v2211 = vunpack.c.l.b16 %v1609
          %v2212 = vunpack.c.h.b16 %v1609
          %v2213 = vunpack.c.l.b16 %v1610
          %v2214 = vunpack.c.h.b16 %v1610
          %v2215 = vunpack.c.l.b16 %v1611
          %v2216 = vunpack.c.h.b16 %v1611
          %v2217 = vunpack.c.l.b16 %v1612
          %v2218 = vunpack.c.h.b16 %v1612
          %v2219 = vunpack.c.l.b16 %v1613
          %v2220 = vunpack.c.h.b16 %v1613
          %v2221 = vunpack.c.l.b16 %v1614
          %v2222 = vunpack.c.h.b16 %v1614
          %v2223 = vunpack.c.l.b16 %v1615
          %v2224 = vunpack.c.h.b16 %v1615
          %v2225 = vunpack.c.l.b16 %v1616
          %v2226 = vunpack.c.h.b16 %v1616
          %v2227 = vunpack.c.l.b16 %v1617
          %v2228 = vunpack.c.h.b16 %v1617
          %v2229 = vunpack.c.l.b16 %v1618
          %v2230 = vunpack.c.h.b16 %v1618
          %v2231 = vunpack.c.l.b16 %v1619
          %v2232 = vunpack.c.h.b16 %v1619
          %v2233 = vunpack.c.l.b16 %v1620
          %v2234 = vunpack.c.h.b16 %v1620
          %v2235 = vunpack.c.l.b16 %v1621
          %v2236 = vunpack.c.h.b16 %v1621
          %v2237 = vunpack.c.l.b16 %v1622
          %v2238 = vunpack.c.h.b16 %v1622
          %v2239 = vunpack.c.l.b16 %v1623
          %v2240 = vunpack.c.h.b16 %v1623
          %v2241 = vunpack.c.l.b16 %v1624
          %v2242 = vunpack.c.h.b16 %v1624
          %v2243 = vunpack.c.l.b16 %v1625
          %v2244 = vunpack.c.h.b16 %v1625
          %v2245 = vunpack.c.l.b16 %v1626
          %v2246 = vunpack.c.h.b16 %v1626
          %v2247 = vunpack.c.l.b16 %v1627
          %v2248 = vunpack.c.h.b16 %v1627
          %v2249 = vunpack.c.l.b16 %v1628
          %v2250 = vunpack.c.h.b16 %v1628
          %v2251 = vunpack.c.l.b16 %v1629
          %v2252 = vunpack.c.h.b16 %v1629
          %v2253 = vunpack.c.l.b16 %v1630
          %v2254 = vunpack.c.h.b16 %v1630
          %v2255 = vunpack.c.l.b16 %v1631
          %v2256 = vunpack.c.h.b16 %v1631
          %v2257 = vunpack.c.l.b16 %v1632
          %v2258 = vunpack.c.h.b16 %v1632
          %v2259 = vunpack.c.l.b16 %v1633
          %v2260 = vunpack.c.h.b16 %v1633
          %v2261 = vunpack.c.l.b16 %v1634
          %v2262 = vunpack.c.h.b16 %v1634
          %v2263 = vunpack.c.l.b16 %v1635
          %v2264 = vunpack.c.h.b16 %v1635
          %v2265 = vunpack.c.l.b16 %v1636
          %v2266 = vunpack.c.h.b16 %v1636
          %v2267 = vunpack.c.l.b16 %v1637
          %v2268 = vunpack.c.h.b16 %v1637
          %v2269 = vunpack.c.l.b16 %v1638
          %v2270 = vunpack.c.h.b16 %v1638
          %v2271 = vunpack.c.l.b16 %v1639
          %v2272 = vunpack.c.h.b16 %v1639
          %v2273 = vunpack.c.l.b16 %v1640
          %v2274 = vunpack.c.h.b16 %v1640
          %v2275 = vunpack.c.l.b16 %v1641
          %v2276 = vunpack.c.h.b16 %v1641
          %v2277 = vunpack.c.l.b16 %v1642
          %v2278 = vunpack.c.h.b16 %v1642
          %v2279 = vunpack.c.l.b16 %v1643
          %v2280 = vunpack.c.h.b16 %v1643
          %v2281 = vunpack.c.l.b16 %v1644
          %v2282 = vunpack.c.h.b16 %v1644
          %v2283 = vunpack.c.l.b16 %v1645
          %v2284 = vunpack.c.h.b16 %v1645
          %v2285 = vunpack.c.l.b16 %v1646
          %v2286 = vunpack.c.h.b16 %v1646
          %v2287 = vunpack.c.l.b16 %v1647
          %v2288 = vunpack.c.h.b16 %v1647
          %v2289 = vunpack.c.l.b16 %v1648
          %v2290 = vunpack.c.h.b16 %v1648
          %v2291 = vunpack.c.l.b16 %v1649
          %v2292 = vunpack.c.h.b16 %v1649
          %v2293 = vunpack.c.l.b16 %v1650
          %v2294 = vunpack.c.h.b16 %v1650
          %v2295 = vunpack.c.l.b16 %v1651
          %v2296 = vunpack.c.h.b16 %v1651
          %v2297 = vunpack.c.l.b16 %v1652
          %v2298 = vunpack.c.h.b16 %v1652
          %v2299 = vunpack.c.l.b16 %v1653
          %v2300 = vunpack.c.h.b16 %v1653
          %v2301 = vunpack.c.l.b16 %v1654
          %v2302 = vunpack.c.h.b16 %v1654
          %v2303 = vunpack.c.l.b16 %v1655
          %v2304 = vunpack.c.h.b16 %v1655
          %v2305 = vunpack.c.l.b16 %v1656
          %v2306 = vunpack.c.h.b16 %v1656
          %v2307 = vunpack.c.l.b16 %v1657
          %v2308 = vunpack.c.h.b16 %v1657
          %v2309 = vunpack.c.l.b16 %v1658
          %v2310 = vunpack.c.h.b16 %v1658
          %v2311 = vunpack.c.l.b16 %v1659
          %v2312 = vunpack.c.h.b16 %v1659
          %v2313 = vunpack.c.l.b16 %v1660
          %v2314 = vunpack.c.h.b16 %v1660
          %v2315 = vunpack.c.l.b16 %v1661
          %v2316 = vunpack.c.h.b16 %v1661
          %v2317 = vunpack.c.l.b16 %v1662
          %v2318 = vunpack.c.h.b16 %v1662
          %v2319 = vunpack.c.l.b16 %v1663
          %v2320 = vunpack.c.h.b16 %v1663
          %v2321 = vunpack.c.l.b16 %v1664
          %v2322 = vunpack.c.h.b16 %v1664
          %v2323 = vunpack.c.l.b16 %v1665
          %v2324 = vunpack.c.h.b16 %v1665
          %v2325 = vunpack.c.l.b16 %v1666
          %v2326 = vunpack.c.h.b16 %v1666
          %v2327 = vunpack.c.l.b16 %v1667
          %v2328 = vunpack.c.h.b16 %v1667
          %v2329 = vunpack.c.l.b16 %v1668
          %v2330 = vunpack.c.h.b16 %v1668
          %v2331 = vunpack.c.l.b16 %v1669
          %v2332 = vunpack.c.h.b16 %v1669
          %v2333 = vunpack.c.l.b16 %v1670
          %v2334 = vunpack.c.h.b16 %v1670
          %v2335 = vunpack.c.l.b16 %v1671
          %v2336 = vunpack.c.h.b16 %v1671
          %v2337 = vunpack.c.l.b16 %v1672
          %v2338 = vunpack.c.h.b16 %v1672
          %v2339 = vunpack.c.l.b16 %v1673
          %v2340 = vunpack.c.h.b16 %v1673
          %v2341 = vunpack.c.l.b16 %v1674
          %v2342 = vunpack.c.h.b16 %v1674
          %v2343 = vunpack.c.l.b16 %v1675
          %v2344 = vunpack.c.h.b16 %v1675
          %v2345 = vunpack.c.l.b16 %v1676
          %v2346 = vunpack.c.h.b16 %v1676
          %v2347 = vunpack.c.l.b16 %v1677
          %v2348 = vunpack.c.h.b16 %v1677
          %v2349 = vunpack.c.l.b16 %v1678
          %v2350 = vunpack.c.h.b16 %v1678
          %v2351 = vunpack.c.l.b16 %v1679
          %v2352 = vunpack.c.h.b16 %v1679
          %v2353 = vunpack.c.l.b16 %v1680
          %v2354 = vunpack.c.h.b16 %v1680
          %v2355 = vunpack.c.l.b16 %v1681
          %v2356 = vunpack.c.h.b16 %v1681
          %v2357 = vunpack.c.l.b16 %v1682
          %v2358 = vunpack.c.h.b16 %v1682
          %v2359 = vunpack.c.l.b16 %v1683
          %v2360 = vunpack.c.h.b16 %v1683
          %v2361 = vunpack.c.l.b16 %v1684
          %v2362 = vunpack.c.h.b16 %v1684
          %v2363 = vunpack.c.l.b16 %v1685
          %v2364 = vunpack.c.h.b16 %v1685
          %v2365 = vunpack.c.l.b16 %v1686
          %v2366 = vunpack.c.h.b16 %v1686
          %v2367 = vunpack.c.l.b16 %v1687
          %v2368 = vunpack.c.h.b16 %v1687
          %v2369 = vunpack.c.l.b16 %v1688
          %v2370 = vunpack.c.h.b16 %v1688
          %v2371 = vunpack.c.l.b16 %v1689
          %v2372 = vunpack.c.h.b16 %v1689
          %v2373 = vunpack.c.l.b16 %v1690
          %v2374 = vunpack.c.h.b16 %v1690
          %v2375 = vunpack.c.l.b16 %v1691
          %v2376 = vunpack.c.h.b16 %v1691
          %v2377 = vunpack.c.l.b16 %v1692
          %v2378 = vunpack.c.h.b16 %v1692
          %v2379 = vunpack.c.l.b16 %v1693
          %v2380 = vunpack.c.h.b16 %v1693
          %v2381 = vunpack.c.l.b16 %v1694
          %v2382 = vunpack.c.h.b16 %v1694
          %v2383 = vunpack.c.l.b16 %v1695
          %v2384 = vunpack.c.h.b16 %v1695
          %v2385 = vunpack.c.l.b16 %v1696
          %v2386 = vunpack.c.h.b16 %v1696
          %v2387 = vunpack.c.l.b16 %v1697
          %v2388 = vunpack.c.h.b16 %v1697
          %v2389 = vunpack.c.l.b16 %v1698
          %v2390 = vunpack.c.h.b16 %v1698
          %v2391 = vunpack.c.l.b16 %v1699
          %v2392 = vunpack.c.h.b16 %v1699
          %v2393 = vunpack.c.l.b16 %v1700
          %v2394 = vunpack.c.h.b16 %v1700
          %v2395 = vunpack.c.l.b16 %v1701
          %v2396 = vunpack.c.h.b16 %v1701
          %v2397 = vunpack.c.l.b16 %v1702
          %v2398 = vunpack.c.h.b16 %v1702
          %v2399 = vunpack.c.l.b16 %v1703
          %v2400 = vunpack.c.h.b16 %v1703
          %v2401 = vunpack.c.l.b16 %v1704
          %v2402 = vunpack.c.h.b16 %v1704
          %v2403 = vunpack.c.l.b16 %v1705
          %v2404 = vunpack.c.h.b16 %v1705
          %v2405 = vunpack.c.l.b16 %v1706
          %v2406 = vunpack.c.h.b16 %v1706
          %v2407 = vunpack.c.l.b16 %v1707
          %v2408 = vunpack.c.h.b16 %v1707
          %v2409 = vunpack.c.l.b16 %v1708
          %v2410 = vunpack.c.h.b16 %v1708
          %v2411 = vunpack.c.l.b16 %v1709
          %v2412 = vunpack.c.h.b16 %v1709
          %v2413 = vunpack.c.l.b16 %v1710
          %v2414 = vunpack.c.h.b16 %v1710
          %v2415 = vunpack.c.l.b16 %v1711
          %v2416 = vunpack.c.h.b16 %v1711
          %v2417 = vunpack.c.l.b16 %v1712
          %v2418 = vunpack.c.h.b16 %v1712
          %v2419 = vunpack.c.l.b16 %v1713
          %v2420 = vunpack.c.h.b16 %v1713
          %v2421 = vunpack.c.l.b16 %v1714
          %v2422 = vunpack.c.h.b16 %v1714
          %v2423 = vunpack.c.l.b16 %v1715
          %v2424 = vunpack.c.h.b16 %v1715
          %v2425 = vunpack.c.l.b16 %v1716
          %v2426 = vunpack.c.h.b16 %v1716
          %v2427 = vunpack.c.l.b16 %v1717
          %v2428 = vunpack.c.h.b16 %v1717
          %v2429 = vunpack.c.l.b16 %v1718
          %v2430 = vunpack.c.h.b16 %v1718
          %v2431 = vunpack.c.l.b16 %v1719
          %v2432 = vunpack.c.h.b16 %v1719
          %v2433 = vunpack.c.l.b16 %v1720
          %v2434 = vunpack.c.h.b16 %v1720
          %v2435 = vunpack.c.l.b16 %v1721
          %v2436 = vunpack.c.h.b16 %v1721
          %v2437 = vunpack.c.l.b16 %v1722
          %v2438 = vunpack.c.h.b16 %v1722
          %v2439 = vunpack.c.l.b16 %v1723
          %v2440 = vunpack.c.h.b16 %v1723
          %v2441 = vunpack.c.l.b16 %v1724
          %v2442 = vunpack.c.h.b16 %v1724
          %v2443 = vunpack.c.l.b16 %v1725
          %v2444 = vunpack.c.h.b16 %v1725
          %v2445 = vunpack.c.l.b16 %v1726
          %v2446 = vunpack.c.h.b16 %v1726
          %v2447 = vunpack.c.l.b16 %v1727
          %v2448 = vunpack.c.h.b16 %v1727
          %v2449 = vunpack.c.l.b16 %v1728
          %v2450 = vunpack.c.h.b16 %v1728
          %v2451 = vunpack.c.l.b16 %v1729
          %v2452 = vunpack.c.h.b16 %v1729
          %v2453 = vunpack.c.l.b16 %v1730
          %v2454 = vunpack.c.h.b16 %v1730
          %v2455 = vunpack.c.l.b16 %v1731
          %v2456 = vunpack.c.h.b16 %v1731
          %v2457 = vunpack.c.l.b16 %v1732
          %v2458 = vunpack.c.h.b16 %v1732
          %v2459 = vunpack.c.l.b16 %v1733
          %v2460 = vunpack.c.h.b16 %v1733
          %v2461 = vunpack.c.l.b16 %v1734
          %v2462 = vunpack.c.h.b16 %v1734
          %v2463 = vunpack.c.l.b16 %v1735
          %v2464 = vunpack.c.h.b16 %v1735
          %v2465 = vunpack.c.l.b16 %v1736
          %v2466 = vunpack.c.h.b16 %v1736
          %v2467 = vunpack.c.l.b16 %v1737
          %v2468 = vunpack.c.h.b16 %v1737
          %v2469 = vunpack.c.l.b16 %v1738
          %v2470 = vunpack.c.h.b16 %v1738
          %v2471 = vunpack.c.l.b16 %v1739
          %v2472 = vunpack.c.h.b16 %v1739
          %v2473 = vunpack.c.l.b16 %v1740
          %v2474 = vunpack.c.h.b16 %v1740
          %v2475 = vunpack.c.l.b16 %v1741
          %v2476 = vunpack.c.h.b16 %v1741
          %v2477 = vunpack.c.l.b16 %v1742
          %v2478 = vunpack.c.h.b16 %v1742
          %v2479 = vunpack.c.l.b16 %v1743
          %v2480 = vunpack.c.h.b16 %v1743
          %v2481 = vunpack.c.l.b16 %v1744
          %v2482 = vunpack.c.h.b16 %v1744
          %v2483 = vunpack.c.l.b16 %v1745
          %v2484 = vunpack.c.h.b16 %v1745
          %v2485 = vunpack.c.l.b16 %v1746
          %v2486 = vunpack.c.h.b16 %v1746
          %v2487 = vunpack.c.l.b16 %v1747
          %v2488 = vunpack.c.h.b16 %v1747
          %v2489 = vunpack.c.l.b16 %v1748
          %v2490 = vunpack.c.h.b16 %v1748
          %v2491 = vunpack.c.l.b16 %v1749
          %v2492 = vunpack.c.h.b16 %v1749
          %v2493 = vunpack.c.l.b16 %v1750
          %v2494 = vunpack.c.h.b16 %v1750
          %v2495 = vunpack.c.l.b16 %v1751
          %v2496 = vunpack.c.h.b16 %v1751
          %v2497 = vunpack.c.l.b16 %v1752
          %v2498 = vunpack.c.h.b16 %v1752
          %v2499 = vunpack.c.l.b16 %v1753
          %v2500 = vunpack.c.h.b16 %v1753
          %v2501 = vunpack.c.l.b16 %v1754
          %v2502 = vunpack.c.h.b16 %v1754
          %v2503 = vunpack.c.l.b16 %v1755
          %v2504 = vunpack.c.h.b16 %v1755
          %v2505 = vunpack.c.l.b16 %v1756
          %v2506 = vunpack.c.h.b16 %v1756
          %v2507 = vunpack.c.l.b16 %v1757
          %v2508 = vunpack.c.h.b16 %v1757
          %v2509 = vunpack.c.l.b16 %v1758
          %v2510 = vunpack.c.h.b16 %v1758
          %v2511 = vunpack.c.l.b16 %v1759
          %v2512 = vunpack.c.h.b16 %v1759
          %v2513 = vunpack.c.l.b16 %v1760
          %v2514 = vunpack.c.h.b16 %v1760
          %v2515 = vunpack.c.l.b16 %v1761
          %v2516 = vunpack.c.h.b16 %v1761
          %v2517 = vunpack.c.l.b16 %v1762
          %v2518 = vunpack.c.h.b16 %v1762
          %v2519 = vunpack.c.l.b16 %v1763
          %v2520 = vunpack.c.h.b16 %v1763
          %v2521 = vunpack.c.l.b16 %v1764
          %v2522 = vunpack.c.h.b16 %v1764
          %v2523 = vunpack.c.l.b16 %v1765
          %v2524 = vunpack.c.h.b16 %v1765
          %v2525 = vunpack.c.l.b16 %v1766
          %v2526 = vunpack.c.h.b16 %v1766
          %v2527 = vunpack.c.l.b16 %v1767
          %v2528 = vunpack.c.h.b16 %v1767
          %v2529 = vunpack.c.l.b16 %v1768
          %v2530 = vunpack.c.h.b16 %v1768
          %v2531 = vunpack.c.l.b16 %v1769
          %v2532 = vunpack.c.h.b16 %v1769
          %v2533 = vunpack.c.l.b16 %v1770
          %v2534 = vunpack.c.h.b16 %v1770
          %v2535 = vunpack.c.l.b16 %v1771
          %v2536 = vunpack.c.h.b16 %v1771
          %v2537 = vunpack.c.l.b16 %v1772
          %v2538 = vunpack.c.h.b16 %v1772
          %v2539 = vunpack.c.l.b16 %v1773
          %v2540 = vunpack.c.h.b16 %v1773
          %v2541 = vunpack.c.l.b16 %v1774
          %v2542 = vunpack.c.h.b16 %v1774
          %v2543 = vunpack.c.l.b16 %v1775
          %v2544 = vunpack.c.h.b16 %v1775
          %v2545 = vpack.c.b16 %v2037, %v2033
          %v2546 = vpack.c.b16 %v2038, %v2034
          %v2547 = vpack.c.b16 %v2039, %v2035
          %v2548 = vpack.c.b16 %v2040, %v2036
          %v2549 = vpack.c.b16 %v2045, %v2041
          %v2550 = vpack.c.b16 %v2046, %v2042
          %v2551 = vpack.c.b16 %v2047, %v2043
          %v2552 = vpack.c.b16 %v2048, %v2044
          %v2553 = vpack.c.b16 %v2053, %v2049
          %v2554 = vpack.c.b16 %v2054, %v2050
          %v2555 = vpack.c.b16 %v2055, %v2051
          %v2556 = vpack.c.b16 %v2056, %v2052
          %v2557 = vpack.c.b16 %v2061, %v2057
          %v2558 = vpack.c.b16 %v2062, %v2058
          %v2559 = vpack.c.b16 %v2063, %v2059
          %v2560 = vpack.c.b16 %v2064, %v2060
          %v2561 = vpack.c.b16 %v2069, %v2065
          %v2562 = vpack.c.b16 %v2070, %v2066
          %v2563 = vpack.c.b16 %v2071, %v2067
          %v2564 = vpack.c.b16 %v2072, %v2068
          %v2565 = vpack.c.b16 %v2077, %v2073
          %v2566 = vpack.c.b16 %v2078, %v2074
          %v2567 = vpack.c.b16 %v2079, %v2075
          %v2568 = vpack.c.b16 %v2080, %v2076
          %v2569 = vpack.c.b16 %v2085, %v2081
          %v2570 = vpack.c.b16 %v2086, %v2082
          %v2571 = vpack.c.b16 %v2087, %v2083
          %v2572 = vpack.c.b16 %v2088, %v2084
          %v2573 = vpack.c.b16 %v2093, %v2089
          %v2574 = vpack.c.b16 %v2094, %v2090
          %v2575 = vpack.c.b16 %v2095, %v2091
          %v2576 = vpack.c.b16 %v2096, %v2092
          %v2577 = vpack.c.b16 %v2101, %v2097
          %v2578 = vpack.c.b16 %v2102, %v2098
          %v2579 = vpack.c.b16 %v2103, %v2099
          %v2580 = vpack.c.b16 %v2104, %v2100
          %v2581 = vpack.c.b16 %v2109, %v2105
          %v2582 = vpack.c.b16 %v2110, %v2106
          %v2583 = vpack.c.b16 %v2111, %v2107
          %v2584 = vpack.c.b16 %v2112, %v2108
          %v2585 = vpack.c.b16 %v2117, %v2113
          %v2586 = vpack.c.b16 %v2118, %v2114
          %v2587 = vpack.c.b16 %v2119, %v2115
          %v2588 = vpack.c.b16 %v2120, %v2116
          %v2589 = vpack.c.b16 %v2125, %v2121
          %v2590 = vpack.c.b16 %v2126, %v2122
          %v2591 = vpack.c.b16 %v2127, %v2123
          %v2592 = vpack.c.b16 %v2128, %v2124
          %v2593 = vpack.c.b16 %v2133, %v2129
          %v2594 = vpack.c.b16 %v2134, %v2130
          %v2595 = vpack.c.b16 %v2135, %v2131
          %v2596 = vpack.c.b16 %v2136, %v2132
          %v2597 = vpack.c.b16 %v2141, %v2137
          %v2598 = vpack.c.b16 %v2142, %v2138
          %v2599 = vpack.c.b16 %v2143, %v2139
          %v2600 = vpack.c.b16 %v2144, %v2140
          %v2601 = vpack.c.b16 %v2149, %v2145
          %v2602 = vpack.c.b16 %v2150, %v2146
          %v2603 = vpack.c.b16 %v2151, %v2147
          %v2604 = vpack.c.b16 %v2152, %v2148
          %v2605 = vpack.c.b16 %v2157, %v2153
          %v2606 = vpack.c.b16 %v2158, %v2154
          %v2607 = vpack.c.b16 %v2159, %v2155
          %v2608 = vpack.c.b16 %v2160, %v2156
          %v2609 = vpack.c.b16 %v2165, %v2161
          %v2610 = vpack.c.b16 %v2166, %v2162
          %v2611 = vpack.c.b16 %v2167, %v2163
          %v2612 = vpack.c.b16 %v2168, %v2164
          %v2613 = vpack.c.b16 %v2173, %v2169
          %v2614 = vpack.c.b16 %v2174, %v2170
          %v2615 = vpack.c.b16 %v2175, %v2171
          %v2616 = vpack.c.b16 %v2176, %v2172
          %v2617 = vpack.c.b16 %v2181, %v2177
          %v2618 = vpack.c.b16 %v2182, %v2178
          %v2619 = vpack.c.b16 %v2183, %v2179
          %v2620 = vpack.c.b16 %v2184, %v2180
          %v2621 = vpack.c.b16 %v2189, %v2185
          %v2622 = vpack.c.b16 %v2190, %v2186
          %v2623 = vpack.c.b16 %v2191, %v2187
          %v2624 = vpack.c.b16 %v2192, %v2188
          %v2625 = vpack.c.b16 %v2197, %v2193
          %v2626 = vpack.c.b16 %v2198, %v2194
          %v2627 = vpack.c.b16 %v2199, %v2195
          %v2628 = vpack.c.b16 %v2200, %v2196
          %v2629 = vpack.c.b16 %v2205, %v2201
          %v2630 = vpack.c.b16 %v2206, %v2202
          %v2631 = vpack.c.b16 %v2207, %v2203
          %v2632 = vpack.c.b16 %v2208, %v2204
          %v2633 = vpack.c.b16 %v2213, %v2209
          %v2634 = vpack.c.b16 %v2214, %v2210
          %v2635 = vpack.c.b16 %v2215, %v2211
          %v2636 = vpack.c.b16 %v2216, %v2212
          %v2637 = vpack.c.b16 %v2221, %v2217
          %v2638 = vpack.c.b16 %v2222, %v2218
          %v2639 = vpack.c.b16 %v2223, %v2219
          %v2640 = vpack.c.b16 %v2224, %v2220
          %v2641 = vpack.c.b16 %v2229, %v2225
          %v2642 = vpack.c.b16 %v2230, %v2226
          %v2643 = vpack.c.b16 %v2231, %v2227
          %v2644 = vpack.c.b16 %v2232, %v2228
          %v2645 = vpack.c.b16 %v2237, %v2233
          %v2646 = vpack.c.b16 %v2238, %v2234
          %v2647 = vpack.c.b16 %v2239, %v2235
          %v2648 = vpack.c.b16 %v2240, %v2236
          %v2649 = vpack.c.b16 %v2245, %v2241
          %v2650 = vpack.c.b16 %v2246, %v2242
          %v2651 = vpack.c.b16 %v2247, %v2243
          %v2652 = vpack.c.b16 %v2248, %v2244
          %v2653 = vpack.c.b16 %v2253, %v2249
          %v2654 = vpack.c.b16 %v2254, %v2250
          %v2655 = vpack.c.b16 %v2255, %v2251
          %v2656 = vpack.c.b16 %v2256, %v2252
          %v2657 = vpack.c.b16 %v2261, %v2257
          %v2658 = vpack.c.b16 %v2262, %v2258
          %v2659 = vpack.c.b16 %v2263, %v2259
          %v2660 = vpack.c.b16 %v2264, %v2260
          %v2661 = vpack.c.b16 %v2269, %v2265
          %v2662 = vpack.c.b16 %v2270, %v2266
          %v2663 = vpack.c.b16 %v2271, %v2267
          %v2664 = vpack.c.b16 %v2272, %v2268
          %v2665 = vpack.c.b16 %v2277, %v2273
          %v2666 = vpack.c.b16 %v2278, %v2274
          %v2667 = vpack.c.b16 %v2279, %v2275
          %v2668 = vpack.c.b16 %v2280, %v2276
          %v2669 = vpack.c.b16 %v2285, %v2281
          %v2670 = vpack.c.b16 %v2286, %v2282
          %v2671 = vpack.c.b16 %v2287, %v2283
          %v2672 = vpack.c.b16 %v2288, %v2284
          %v2673 = vpack.c.b16 %v2293, %v2289
          %v2674 = vpack.c.b16 %v2294, %v2290
          %v2675 = vpack.c.b16 %v2295, %v2291
          %v2676 = vpack.c.b16 %v2296, %v2292
          %v2677 = vpack.c.b16 %v2301, %v2297
          %v2678 = vpack.c.b16 %v2302, %v2298
          %v2679 = vpack.c.b16 %v2303, %v2299
          %v2680 = vpack.c.b16 %v2304, %v2300
          %v2681 = vpack.c.b16 %v2309, %v2305
          %v2682 = vpack.c.b16 %v2310, %v2306
          %v2683 = vpack.c.b16 %v2311, %v2307
          %v2684 = vpack.c.b16 %v2312, %v2308
          %v2685 = vpack.c.b16 %v2317, %v2313
          %v2686 = vpack.c.b16 %v2318, %v2314
          %v2687 = vpack.c.b16 %v2319, %v2315
          %v2688 = vpack.c.b16 %v2320, %v2316
          %v2689 = vpack.c.b16 %v2325, %v2321
          %v2690 = vpack.c.b16 %v2326, %v2322
          %v2691 = vpack.c.b16 %v2327, %v2323
          %v2692 = vpack.c.b16 %v2328, %v2324
          %v2693 = vpack.c.b16 %v2333, %v2329
          %v2694 = vpack.c.b16 %v2334, %v2330
          %v2695 = vpack.c.b16 %v2335, %v2331
          %v2696 = vpack.c.b16 %v2336, %v2332
          %v2697 = vpack.c.b16 %v2341, %v2337
          %v2698 = vpack.c.b16 %v2342, %v2338
          %v2699 = vpack.c.b16 %v2343, %v2339
          %v2700 = vpack.c.b16 %v2344, %v2340
          %v2701 = vpack.c.b16 %v2349, %v2345
          %v2702 = vpack.c.b16 %v2350, %v2346
          %v2703 = vpack.c.b16 %v2351, %v2347
          %v2704 = vpack.c.b16 %v2352, %v2348
          %v2705 = vpack.c.b16 %v2357, %v2353
          %v2706 = vpack.c.b16 %v2358, %v2354
          %v2707 = vpack.c.b16 %v2359, %v2355
          %v2708 = vpack.c.b16 %v2360, %v2356
          %v2709 = vpack.c.b16 %v2365, %v2361
          %v2710 = vpack.c.b16 %v2366, %v2362
          %v2711 = vpack.c.b16 %v2367, %v2363
          %v2712 = vpack.c.b16 %v2368, %v2364
          %v2713 = vpack.c.b16 %v2373, %v2369
          %v2714 = vpack.c.b16 %v2374, %v2370
          %v2715 = vpack.c.b16 %v2375, %v2371
          %v2716 = vpack.c.b16 %v2376, %v2372
          %v2717 = vpack.c.b16 %v2381, %v2377
          %v2718 = vpack.c.b16 %v2382, %v2378
          %v2719 = vpack.c.b16 %v2383, %v2379
          %v2720 = vpack.c.b16 %v2384, %v2380
          %v2721 = vpack.c.b16 %v2389, %v2385
          %v2722 = vpack.c.b16 %v2390, %v2386
          %v2723 = vpack.c.b16 %v2391, %v2387
          %v2724 = vpack.c.b16 %v2392, %v2388
          %v2725 = vpack.c.b16 %v2397, %v2393
          %v2726 = vpack.c.b16 %v2398, %v2394
          %v2727 = vpack.c.b16 %v2399, %v2395
          %v2728 = vpack.c.b16 %v2400, %v2396
          %v2729 = vpack.c.b16 %v2405, %v2401
          %v2730 = vpack.c.b16 %v2406, %v2402
          %v2731 = vpack.c.b16 %v2407, %v2403
          %v2732 = vpack.c.b16 %v2408, %v2404
          %v2733 = vpack.c.b16 %v2413, %v2409
          %v2734 = vpack.c.b16 %v2414, %v2410
          %v2735 = vpack.c.b16 %v2415, %v2411
          %v2736 = vpack.c.b16 %v2416, %v2412
          %v2737 = vpack.c.b16 %v2421, %v2417
          %v2738 = vpack.c.b16 %v2422, %v2418
          %v2739 = vpack.c.b16 %v2423, %v2419
          %v2740 = vpack.c.b16 %v2424, %v2420
          %v2741 = vpack.c.b16 %v2429, %v2425
          %v2742 = vpack.c.b16 %v2430, %v2426
          %v2743 = vpack.c.b16 %v2431, %v2427
          %v2744 = vpack.c.b16 %v2432, %v2428
          %v2745 = vpack.c.b16 %v2437, %v2433
          %v2746 = vpack.c.b16 %v2438, %v2434
          %v2747 = vpack.c.b16 %v2439, %v2435
          %v2748 = vpack.c.b16 %v2440, %v2436
          %v2749 = vpack.c.b16 %v2445, %v2441
          %v2750 = vpack.c.b16 %v2446, %v2442
          %v2751 = vpack.c.b16 %v2447, %v2443
          %v2752 = vpack.c.b16 %v2448, %v2444
          %v2753 = vpack.c.b16 %v2453, %v2449
          %v2754 = vpack.c.b16 %v2454, %v2450
          %v2755 = vpack.c.b16 %v2455, %v2451
          %v2756 = vpack.c.b16 %v2456, %v2452
          %v2757 = vpack.c.b16 %v2461, %v2457
          %v2758 = vpack.c.b16 %v2462, %v2458
          %v2759 = vpack.c.b16 %v2463, %v2459
          %v2760 = vpack.c.b16 %v2464, %v2460
          %v2761 = vpack.c.b16 %v2469, %v2465
          %v2762 = vpack.c.b16 %v2470, %v2466
          %v2763 = vpack.c.b16 %v2471, %v2467
          %v2764 = vpack.c.b16 %v2472, %v2468
          %v2765 = vpack.c.b16 %v2477, %v2473
          %v2766 = vpack.c.b16 %v2478, %v2474
          %v2767 = vpack.c.b16 %v2479, %v2475
          %v2768 = vpack.c.b16 %v2480, %v2476
          %v2769 = vpack.c.b16 %v2485, %v2481
          %v2770 = vpack.c.b16 %v2486, %v2482
          %v2771 = vpack.c.b16 %v2487, %v2483
          %v2772 = vpack.c.b16 %v2488, %v2484
          %v2773 = vpack.c.b16 %v2493, %v2489
          %v2774 = vpack.c.b16 %v2494, %v2490
          %v2775 = vpack.c.b16 %v2495, %v2491
          %v2776 = vpack.c.b16 %v2496, %v2492
          %v2777 = vpack.c.b16 %v2501, %v2497
          %v2778 = vpack.c.b16 %v2502, %v2498
          %v2779 = vpack.c.b16 %v2503, %v2499
          %v2780 = vpack.c.b16 %v2504, %v2500
          %v2781 = vpack.c.b16 %v2509, %v2505
          %v2782 = vpack.c.b16 %v2510, %v2506
          %v2783 = vpack.c.b16 %v2511, %v2507
          %v2784 = vpack.c.b16 %v2512, %v2508
          %v2785 = vpack.c.b16 %v2517, %v2513
          %v2786 = vpack.c.b16 %v2518, %v2514
          %v2787 = vpack.c.b16 %v2519, %v2515
          %v2788 = vpack.c.b16 %v2520, %v2516
          %v2789 = vpack.c.b16 %v2525, %v2521
          %v2790 = vpack.c.b16 %v2526, %v2522
          %v2791 = vpack.c.b16 %v2527, %v2523
          %v2792 = vpack.c.b16 %v2528, %v2524
          %v2793 = vpack.c.b16 %v2533, %v2529
          %v2794 = vpack.c.b16 %v2534, %v2530
          %v2795 = vpack.c.b16 %v2535, %v2531
          %v2796 = vpack.c.b16 %v2536, %v2532
          %v2797 = vpack.c.b16 %v2541, %v2537
          %v2798 = vpack.c.b16 %v2542, %v2538
          %v2799 = vpack.c.b16 %v2543, %v2539
          %v2800 = vpack.c.b16 %v2544, %v2540
          %v3058 = vlaneseq
          %v3059 = vshrl.u32 %v3058, 7
          %v3060 = vsub.s32 0, %v3059
          %v3061 = vrot.slane %v1776, %v3060
          %v3062 = vlaneseq
          %v3063 = vshrl.u32 %v3062, 7
          %v3064 = vsub.s32 1, %v3063
          %v3065 = vrot.slane %v1776, %v3064
          %v3066 = vlaneseq
          %v3067 = vshrl.u32 %v3066, 7
          %v3068 = vsub.s32 2, %v3067
          %v3069 = vrot.slane %v1776, %v3068
          %v3070 = vlaneseq
          %v3071 = vshrl.u32 %v3070, 7
          %v3072 = vsub.s32 3, %v3071
          %v3073 = vrot.slane %v1776, %v3072
          %3078 = vmatprep.subr.bf16.mxu0 %v2546
          %3079 = vmatpush1.bf16.msra.mxu0 %v2545
          %3080 = vmatprep.subr.bf16.mxu0 %v2550
          %3081 = vmatpush1.bf16.msra.mxu0 %v2549
          %3082 = vmatprep.subr.bf16.mxu0 %v2554
          %3083 = vmatpush1.bf16.msra.mxu0 %v2553
          %3084 = vmatprep.subr.bf16.mxu0 %v2558
          %3085 = vmatpush1.bf16.msra.mxu0 %v2557
          %3086 = vmatprep.subr.bf16.mxu0 %v2562
          %3087 = vmatpush1.bf16.msra.mxu0 %v2561
          %3088 = vmatprep.subr.bf16.mxu0 %v2566
          %3089 = vmatpush1.bf16.msra.mxu0 %v2565
          %3090 = vmatprep.subr.bf16.mxu0 %v2570
          %3091 = vmatpush1.bf16.msra.mxu0 %v2569
          %3092 = vmatprep.subr.bf16.mxu0 %v2574
          %3093 = vmatpush1.bf16.msra.mxu0 %v2573
          %3094 = vmatprep.subr.bf16.mxu0 %v2578
          %3095 = vmatpush1.bf16.msra.mxu0 %v2577
          %3096 = vmatprep.subr.bf16.mxu0 %v2582
          %3097 = vmatpush1.bf16.msra.mxu0 %v2581
          %3098 = vmatprep.subr.bf16.mxu0 %v2586
          %3099 = vmatpush1.bf16.msra.mxu0 %v2585
          %3100 = vmatprep.subr.bf16.mxu0 %v2590
          %3101 = vmatpush1.bf16.msra.mxu0 %v2589
          %3102 = vmatprep.subr.bf16.mxu0 %v2594
          %3103 = vmatpush1.bf16.msra.mxu0 %v2593
          %3104 = vmatprep.subr.bf16.mxu0 %v2598
          %3105 = vmatpush1.bf16.msra.mxu0 %v2597
          %3106 = vmatprep.subr.bf16.mxu0 %v2602
          %3107 = vmatpush1.bf16.msra.mxu0 %v2601
          %3108 = vmatprep.subr.bf16.mxu0 %v2606
          %3109 = vmatpush1.bf16.msra.mxu0 %v2605
          %3110 = vmatprep.mubr.bf16.mxu0 %v1513
          %3111 = vmatmul.mubr.bf16.gmra.mrb[0].mxu0 %v1512
          %v3112 = vpop.f32.mrb[0].mxu0
          %v3113 = vadd.f32 %v3061, %v3112
          %v3114 = vpop.f32.mrb[0].mxu0
          %v3115 = vadd.f32 %v3065, %v3114
          %v3116 = vpop.f32.mrb[0].mxu0
          %v3117 = vpop.f32.mrb[0].mxu0
          %3118 = vdwg.mxu0
          %3119 = vmatprep.subr.bf16.mxu0 %v2610
          %3120 = vmatpush1.bf16.msra.mxu0 %v2609
          %3121 = vmatprep.subr.bf16.mxu0 %v2614
          %3122 = vmatpush1.bf16.msra.mxu0 %v2613
          %3123 = vmatprep.subr.bf16.mxu0 %v2618
          %3124 = vmatpush1.bf16.msra.mxu0 %v2617
          %3125 = vmatprep.subr.bf16.mxu0 %v2622
          %3126 = vmatpush1.bf16.msra.mxu0 %v2621
          %3127 = vmatprep.subr.bf16.mxu0 %v2626
          %3128 = vmatpush1.bf16.msra.mxu0 %v2625
          %3129 = vmatprep.subr.bf16.mxu0 %v2630
          %3130 = vmatpush1.bf16.msra.mxu0 %v2629
          %3131 = vmatprep.subr.bf16.mxu0 %v2634
          %3132 = vmatpush1.bf16.msra.mxu0 %v2633
          %3133 = vmatprep.subr.bf16.mxu0 %v2638
          %3134 = vmatpush1.bf16.msra.mxu0 %v2637
          %3135 = vmatprep.subr.bf16.mxu0 %v2642
          %3136 = vmatpush1.bf16.msra.mxu0 %v2641
          %3137 = vmatprep.subr.bf16.mxu0 %v2646
          %3138 = vmatpush1.bf16.msra.mxu0 %v2645
          %3139 = vmatprep.subr.bf16.mxu0 %v2650
          %3140 = vmatpush1.bf16.msra.mxu0 %v2649
          %3141 = vmatprep.subr.bf16.mxu0 %v2654
          %3142 = vmatpush1.bf16.msra.mxu0 %v2653
          %3143 = vmatprep.subr.bf16.mxu0 %v2658
          %3144 = vmatpush1.bf16.msra.mxu0 %v2657
          %3145 = vmatprep.subr.bf16.mxu0 %v2662
          %3146 = vmatpush1.bf16.msra.mxu0 %v2661
          %3147 = vmatprep.subr.bf16.mxu0 %v2666
          %3148 = vmatpush1.bf16.msra.mxu0 %v2665
          %3149 = vmatprep.subr.bf16.mxu0 %v2670
          %3150 = vmatpush1.bf16.msra.mxu0 %v2669
          %3151 = vmatprep.mubr.bf16.mxu0 %v1515
          %3152 = vmatmul.mubr.bf16.gmra.mrb[0].mxu0 %v1514
          %v3153 = vpop.f32.mrb[0].mxu0
          %v3154 = vadd.f32 %v3113, %v3153
          %v3155 = vpop.f32.mrb[0].mxu0
          %v3156 = vadd.f32 %v3115, %v3155
          %v3157 = vpop.f32.mrb[0].mxu0
          %v3158 = vpop.f32.mrb[0].mxu0
          %3159 = vdwg.mxu0
          %3160 = vmatprep.subr.bf16.mxu0 %v2674
          %3161 = vmatpush1.bf16.msra.mxu0 %v2673
          %3162 = vmatprep.subr.bf16.mxu0 %v2678
          %3163 = vmatpush1.bf16.msra.mxu0 %v2677
          %3164 = vmatprep.subr.bf16.mxu0 %v2682
          %3165 = vmatpush1.bf16.msra.mxu0 %v2681
          %3166 = vmatprep.subr.bf16.mxu0 %v2686
          %3167 = vmatpush1.bf16.msra.mxu0 %v2685
          %3168 = vmatprep.subr.bf16.mxu0 %v2690
          %3169 = vmatpush1.bf16.msra.mxu0 %v2689
          %3170 = vmatprep.subr.bf16.mxu0 %v2694
          %3171 = vmatpush1.bf16.msra.mxu0 %v2693
          %3172 = vmatprep.subr.bf16.mxu0 %v2698
          %3173 = vmatpush1.bf16.msra.mxu0 %v2697
          %3174 = vmatprep.subr.bf16.mxu0 %v2702
          %3175 = vmatpush1.bf16.msra.mxu0 %v2701
          %3176 = vmatprep.subr.bf16.mxu0 %v2706
          %3177 = vmatpush1.bf16.msra.mxu0 %v2705
          %3178 = vmatprep.subr.bf16.mxu0 %v2710
          %3179 = vmatpush1.bf16.msra.mxu0 %v2709
          %3180 = vmatprep.subr.bf16.mxu0 %v2714
          %3181 = vmatpush1.bf16.msra.mxu0 %v2713
          %3182 = vmatprep.subr.bf16.mxu0 %v2718
          %3183 = vmatpush1.bf16.msra.mxu0 %v2717
          %3184 = vmatprep.subr.bf16.mxu0 %v2722
          %3185 = vmatpush1.bf16.msra.mxu0 %v2721
          %3186 = vmatprep.subr.bf16.mxu0 %v2726
          %3187 = vmatpush1.bf16.msra.mxu0 %v2725
          %3188 = vmatprep.subr.bf16.mxu0 %v2730
          %3189 = vmatpush1.bf16.msra.mxu0 %v2729
          %3190 = vmatprep.subr.bf16.mxu0 %v2734
          %3191 = vmatpush1.bf16.msra.mxu0 %v2733
          %3192 = vmatprep.mubr.bf16.mxu0 %v1517
          %3193 = vmatmul.mubr.bf16.gmra.mrb[0].mxu0 %v1516
          %v3194 = vpop.f32.mrb[0].mxu0
          %v3195 = vadd.f32 %v3154, %v3194
          %v3196 = vpop.f32.mrb[0].mxu0
          %v3197 = vadd.f32 %v3156, %v3196
          %v3198 = vpop.f32.mrb[0].mxu0
          %v3199 = vpop.f32.mrb[0].mxu0
          %3200 = vdwg.mxu0
          %3201 = vmatprep.subr.bf16.mxu0 %v2738
          %3202 = vmatpush1.bf16.msra.mxu0 %v2737
          %3203 = vmatprep.subr.bf16.mxu0 %v2742
          %3204 = vmatpush1.bf16.msra.mxu0 %v2741
          %3205 = vmatprep.subr.bf16.mxu0 %v2746
          %3206 = vmatpush1.bf16.msra.mxu0 %v2745
          %3207 = vmatprep.subr.bf16.mxu0 %v2750
          %3208 = vmatpush1.bf16.msra.mxu0 %v2749
          %3209 = vmatprep.subr.bf16.mxu0 %v2754
          %3210 = vmatpush1.bf16.msra.mxu0 %v2753
          %3211 = vmatprep.subr.bf16.mxu0 %v2758
          %3212 = vmatpush1.bf16.msra.mxu0 %v2757
          %3213 = vmatprep.subr.bf16.mxu0 %v2762
          %3214 = vmatpush1.bf16.msra.mxu0 %v2761
          %3215 = vmatprep.subr.bf16.mxu0 %v2766
          %3216 = vmatpush1.bf16.msra.mxu0 %v2765
          %3217 = vmatprep.subr.bf16.mxu0 %v2770
          %3218 = vmatpush1.bf16.msra.mxu0 %v2769
          %3219 = vmatprep.subr.bf16.mxu0 %v2774
          %3220 = vmatpush1.bf16.msra.mxu0 %v2773
          %3221 = vmatprep.subr.bf16.mxu0 %v2778
          %3222 = vmatpush1.bf16.msra.mxu0 %v2777
          %3223 = vmatprep.subr.bf16.mxu0 %v2782
          %3224 = vmatpush1.bf16.msra.mxu0 %v2781
          %3225 = vmatprep.subr.bf16.mxu0 %v2786
          %3226 = vmatpush1.bf16.msra.mxu0 %v2785
          %3227 = vmatprep.subr.bf16.mxu0 %v2790
          %3228 = vmatpush1.bf16.msra.mxu0 %v2789
          %3229 = vmatprep.subr.bf16.mxu0 %v2794
          %3230 = vmatpush1.bf16.msra.mxu0 %v2793
          %3231 = vmatprep.subr.bf16.mxu0 %v2798
          %3232 = vmatpush1.bf16.msra.mxu0 %v2797
          %3233 = vmatprep.mubr.bf16.mxu0 %v1519
          %3234 = vmatmul.mubr.bf16.gmra.mrb[0].mxu0 %v1518
          %v3235 = vpop.f32.mrb[0].mxu0
          %v3236 = vadd.f32 %v3195, %v3235
          %v3237 = vpop.f32.mrb[0].mxu0
          %v3238 = vadd.f32 %v3197, %v3237
          %v3239 = vpop.f32.mrb[0].mxu0
          %v3240 = vpop.f32.mrb[0].mxu0
          %3241 = vdwg.mxu0
          %3242 = vmatprep.subr.bf16.mxu0 %v2548
          %3243 = vmatpush1.bf16.msra.mxu0 %v2547
          %3244 = vmatprep.subr.bf16.mxu0 %v2552
          %3245 = vmatpush1.bf16.msra.mxu0 %v2551
          %3246 = vmatprep.subr.bf16.mxu0 %v2556
          %3247 = vmatpush1.bf16.msra.mxu0 %v2555
          %3248 = vmatprep.subr.bf16.mxu0 %v2560
          %3249 = vmatpush1.bf16.msra.mxu0 %v2559
          %3250 = vmatprep.subr.bf16.mxu0 %v2564
          %3251 = vmatpush1.bf16.msra.mxu0 %v2563
          %3252 = vmatprep.subr.bf16.mxu0 %v2568
          %3253 = vmatpush1.bf16.msra.mxu0 %v2567
          %3254 = vmatprep.subr.bf16.mxu0 %v2572
          %3255 = vmatpush1.bf16.msra.mxu0 %v2571
          %3256 = vmatprep.subr.bf16.mxu0 %v2576
          %3257 = vmatpush1.bf16.msra.mxu0 %v2575
          %3258 = vmatprep.subr.bf16.mxu0 %v2580
          %3259 = vmatpush1.bf16.msra.mxu0 %v2579
          %3260 = vmatprep.subr.bf16.mxu0 %v2584
          %3261 = vmatpush1.bf16.msra.mxu0 %v2583
          %3262 = vmatprep.subr.bf16.mxu0 %v2588
          %3263 = vmatpush1.bf16.msra.mxu0 %v2587
          %3264 = vmatprep.subr.bf16.mxu0 %v2592
          %3265 = vmatpush1.bf16.msra.mxu0 %v2591
          %3266 = vmatprep.subr.bf16.mxu0 %v2596
          %3267 = vmatpush1.bf16.msra.mxu0 %v2595
          %3268 = vmatprep.subr.bf16.mxu0 %v2600
          %3269 = vmatpush1.bf16.msra.mxu0 %v2599
          %3270 = vmatprep.subr.bf16.mxu0 %v2604
          %3271 = vmatpush1.bf16.msra.mxu0 %v2603
          %3272 = vmatprep.subr.bf16.mxu0 %v2608
          %3273 = vmatpush1.bf16.msra.mxu0 %v2607
          %3274 = vmatprep.mubr.bf16.mxu0 %v1513
          %3275 = vmatmul.mubr.bf16.gmra.mrb[0].mxu0 %v1512
          %v3276 = vpop.f32.mrb[0].mxu0
          %v3277 = vadd.f32 %v3069, %v3276
          %v3278 = vpop.f32.mrb[0].mxu0
          %v3279 = vadd.f32 %v3073, %v3278
          %v3280 = vpop.f32.mrb[0].mxu0
          %v3281 = vpop.f32.mrb[0].mxu0
          %3282 = vdwg.mxu0
          %3283 = vmatprep.subr.bf16.mxu0 %v2612
          %3284 = vmatpush1.bf16.msra.mxu0 %v2611
          %3285 = vmatprep.subr.bf16.mxu0 %v2616
          %3286 = vmatpush1.bf16.msra.mxu0 %v2615
          %3287 = vmatprep.subr.bf16.mxu0 %v2620
          %3288 = vmatpush1.bf16.msra.mxu0 %v2619
          %3289 = vmatprep.subr.bf16.mxu0 %v2624
          %3290 = vmatpush1.bf16.msra.mxu0 %v2623
          %3291 = vmatprep.subr.bf16.mxu0 %v2628
          %3292 = vmatpush1.bf16.msra.mxu0 %v2627
          %3293 = vmatprep.subr.bf16.mxu0 %v2632
          %3294 = vmatpush1.bf16.msra.mxu0 %v2631
          %3295 = vmatprep.subr.bf16.mxu0 %v2636
          %3296 = vmatpush1.bf16.msra.mxu0 %v2635
          %3297 = vmatprep.subr.bf16.mxu0 %v2640
          %3298 = vmatpush1.bf16.msra.mxu0 %v2639
          %3299 = vmatprep.subr.bf16.mxu0 %v2644
          %3300 = vmatpush1.bf16.msra.mxu0 %v2643
          %3301 = vmatprep.subr.bf16.mxu0 %v2648
          %3302 = vmatpush1.bf16.msra.mxu0 %v2647
          %3303 = vmatprep.subr.bf16.mxu0 %v2652
          %3304 = vmatpush1.bf16.msra.mxu0 %v2651
          %3305 = vmatprep.subr.bf16.mxu0 %v2656
          %3306 = vmatpush1.bf16.msra.mxu0 %v2655
          %3307 = vmatprep.subr.bf16.mxu0 %v2660
          %3308 = vmatpush1.bf16.msra.mxu0 %v2659
          %3309 = vmatprep.subr.bf16.mxu0 %v2664
          %3310 = vmatpush1.bf16.msra.mxu0 %v2663
          %3311 = vmatprep.subr.bf16.mxu0 %v2668
          %3312 = vmatpush1.bf16.msra.mxu0 %v2667
          %3313 = vmatprep.subr.bf16.mxu0 %v2672
          %3314 = vmatpush1.bf16.msra.mxu0 %v2671
          %3315 = vmatprep.mubr.bf16.mxu0 %v1515
          %3316 = vmatmul.mubr.bf16.gmra.mrb[0].mxu0 %v1514
          %v3317 = vpop.f32.mrb[0].mxu0
          %v3318 = vadd.f32 %v3277, %v3317
          %v3319 = vpop.f32.mrb[0].mxu0
          %v3320 = vadd.f32 %v3279, %v3319
          %v3321 = vpop.f32.mrb[0].mxu0
          %v3322 = vpop.f32.mrb[0].mxu0
          %3323 = vdwg.mxu0
          %3324 = vmatprep.subr.bf16.mxu0 %v2676
          %3325 = vmatpush1.bf16.msra.mxu0 %v2675
          %3326 = vmatprep.subr.bf16.mxu0 %v2680
          %3327 = vmatpush1.bf16.msra.mxu0 %v2679
          %3328 = vmatprep.subr.bf16.mxu0 %v2684
          %3329 = vmatpush1.bf16.msra.mxu0 %v2683
          %3330 = vmatprep.subr.bf16.mxu0 %v2688
          %3331 = vmatpush1.bf16.msra.mxu0 %v2687
          %3332 = vmatprep.subr.bf16.mxu0 %v2692
          %3333 = vmatpush1.bf16.msra.mxu0 %v2691
          %3334 = vmatprep.subr.bf16.mxu0 %v2696
          %3335 = vmatpush1.bf16.msra.mxu0 %v2695
          %3336 = vmatprep.subr.bf16.mxu0 %v2700
          %3337 = vmatpush1.bf16.msra.mxu0 %v2699
          %3338 = vmatprep.subr.bf16.mxu0 %v2704
          %3339 = vmatpush1.bf16.msra.mxu0 %v2703
          %3340 = vmatprep.subr.bf16.mxu0 %v2708
          %3341 = vmatpush1.bf16.msra.mxu0 %v2707
          %3342 = vmatprep.subr.bf16.mxu0 %v2712
          %3343 = vmatpush1.bf16.msra.mxu0 %v2711
          %3344 = vmatprep.subr.bf16.mxu0 %v2716
          %3345 = vmatpush1.bf16.msra.mxu0 %v2715
          %3346 = vmatprep.subr.bf16.mxu0 %v2720
          %3347 = vmatpush1.bf16.msra.mxu0 %v2719
          %3348 = vmatprep.subr.bf16.mxu0 %v2724
          %3349 = vmatpush1.bf16.msra.mxu0 %v2723
          %3350 = vmatprep.subr.bf16.mxu0 %v2728
          %3351 = vmatpush1.bf16.msra.mxu0 %v2727
          %3352 = vmatprep.subr.bf16.mxu0 %v2732
          %3353 = vmatpush1.bf16.msra.mxu0 %v2731
          %3354 = vmatprep.subr.bf16.mxu0 %v2736
          %3355 = vmatpush1.bf16.msra.mxu0 %v2735
          %3356 = vmatprep.mubr.bf16.mxu0 %v1517
          %3357 = vmatmul.mubr.bf16.gmra.mrb[0].mxu0 %v1516
          %v3358 = vpop.f32.mrb[0].mxu0
          %v3359 = vadd.f32 %v3318, %v3358
          %v3360 = vpop.f32.mrb[0].mxu0
          %v3361 = vadd.f32 %v3320, %v3360
          %v3362 = vpop.f32.mrb[0].mxu0
          %v3363 = vpop.f32.mrb[0].mxu0
          %3364 = vdwg.mxu0
          %3365 = vmatprep.subr.bf16.mxu0 %v2740
          %3366 = vmatpush1.bf16.msra.mxu0 %v2739
          %3367 = vmatprep.subr.bf16.mxu0 %v2744
          %3368 = vmatpush1.bf16.msra.mxu0 %v2743
          %3369 = vmatprep.subr.bf16.mxu0 %v2748
          %3370 = vmatpush1.bf16.msra.mxu0 %v2747
          %3371 = vmatprep.subr.bf16.mxu0 %v2752
          %3372 = vmatpush1.bf16.msra.mxu0 %v2751
          %3373 = vmatprep.subr.bf16.mxu0 %v2756
          %3374 = vmatpush1.bf16.msra.mxu0 %v2755
          %3375 = vmatprep.subr.bf16.mxu0 %v2760
          %3376 = vmatpush1.bf16.msra.mxu0 %v2759
          %3377 = vmatprep.subr.bf16.mxu0 %v2764
          %3378 = vmatpush1.bf16.msra.mxu0 %v2763
          %3379 = vmatprep.subr.bf16.mxu0 %v2768
          %3380 = vmatpush1.bf16.msra.mxu0 %v2767
          %3381 = vmatprep.subr.bf16.mxu0 %v2772
          %3382 = vmatpush1.bf16.msra.mxu0 %v2771
          %3383 = vmatprep.subr.bf16.mxu0 %v2776
          %3384 = vmatpush1.bf16.msra.mxu0 %v2775
          %3385 = vmatprep.subr.bf16.mxu0 %v2780
          %3386 = vmatpush1.bf16.msra.mxu0 %v2779
          %3387 = vmatprep.subr.bf16.mxu0 %v2784
          %3388 = vmatpush1.bf16.msra.mxu0 %v2783
          %3389 = vmatprep.subr.bf16.mxu0 %v2788
          %3390 = vmatpush1.bf16.msra.mxu0 %v2787
          %3391 = vmatprep.subr.bf16.mxu0 %v2792
          %3392 = vmatpush1.bf16.msra.mxu0 %v2791
          %3393 = vmatprep.subr.bf16.mxu0 %v2796
          %3394 = vmatpush1.bf16.msra.mxu0 %v2795
          %3395 = vmatprep.subr.bf16.mxu0 %v2800
          %3396 = vmatpush1.bf16.msra.mxu0 %v2799
          %3397 = vmatprep.mubr.bf16.mxu0 %v1519
          %3398 = vmatmul.mubr.bf16.gmra.mrb[0].mxu0 %v1518
          %v3399 = vpop.f32.mrb[0].mxu0
          %v3400 = vadd.f32 %v3359, %v3399
          %v3401 = vpop.f32.mrb[0].mxu0
          %v3402 = vadd.f32 %v3361, %v3401
          %v3403 = vpop.f32.mrb[0].mxu0
          %v3404 = vpop.f32.mrb[0].mxu0
          %3405 = vdwg.mxu0
          %v3406 = vmax.f32 %v3236, 0.0
          %v3407 = vmax.f32 %v3238, 0.0
          %v3408 = vmax.f32 %v3400, 0.0
          %v3409 = vmax.f32 %v3402, 0.0
          %v3410 = vpack.c.bf16 %v3406, %v3406
          %v3411 = vpack.c.bf16 %v3407, %v3407
          %v3412 = vpack.c.bf16 %v3408, %v3408
          %v3413 = vpack.c.bf16 %v3409, %v3409
          %v3414 = vld [vmem:[%s9] sm:$0xff]
          %v3415 = vld [vmem:[%s9 + $0x8] sm:$0xff]
          %v3416 = vld [vmem:[%s9 + $0x10] sm:$0xff]
          %v3417 = vld [vmem:[%s9 + $0x18] sm:$0xff]
          %v3418 = vld [vmem:[%s9 + $0x20] sm:$0xff]
          %v3419 = vld [vmem:[%s9 + $0x28] sm:$0xff]
          %v3420 = vld [vmem:[%s9 + $0x30] sm:$0xff]
          %v3421 = vld [vmem:[%s9 + $0x38] sm:$0xff]
          %v3422 = vld [vmem:[%s9 + $0x40] sm:$0xff]
          %v3423 = vld [vmem:[%s9 + $0x48] sm:$0xff]
          %v3424 = vld [vmem:[%s9 + $0x50] sm:$0xff]
          %v3425 = vld [vmem:[%s9 + $0x58] sm:$0xff]
          %v3426 = vld [vmem:[%s9 + $0x60] sm:$0xff]
          %v3427 = vld [vmem:[%s9 + $0x68] sm:$0xff]
          %v3428 = vld [vmem:[%s9 + $0x70] sm:$0xff]
          %v3429 = vld [vmem:[%s9 + $0x78] sm:$0xff]
          %v3430 = vld [vmem:[%s9 + $0x80] sm:$0xff]
          %v3431 = vld [vmem:[%s9 + $0x88] sm:$0xff]
          %v3432 = vld [vmem:[%s9 + $0x90] sm:$0xff]
          %v3433 = vld [vmem:[%s9 + $0x98] sm:$0xff]
          %v3434 = vld [vmem:[%s9 + $0xa0] sm:$0xff]
          %v3435 = vld [vmem:[%s9 + $0xa8] sm:$0xff]
          %v3436 = vld [vmem:[%s9 + $0xb0] sm:$0xff]
          %v3437 = vld [vmem:[%s9 + $0xb8] sm:$0xff]
          %v3438 = vld [vmem:[%s9 + $0xc0] sm:$0xff]
          %v3439 = vld [vmem:[%s9 + $0xc8] sm:$0xff]
          %v3440 = vld [vmem:[%s9 + $0xd0] sm:$0xff]
          %v3441 = vld [vmem:[%s9 + $0xd8] sm:$0xff]
          %v3442 = vld [vmem:[%s9 + $0xe0] sm:$0xff]
          %v3443 = vld [vmem:[%s9 + $0xe8] sm:$0xff]
          %v3444 = vld [vmem:[%s9 + $0xf0] sm:$0xff]
          %v3445 = vld [vmem:[%s9 + $0xf8] sm:$0xff]
          %v3446 = vld [vmem:[%s9 + $0x100] sm:$0xff]
          %v3447 = vld [vmem:[%s9 + $0x108] sm:$0xff]
          %v3448 = vld [vmem:[%s9 + $0x110] sm:$0xff]
          %v3449 = vld [vmem:[%s9 + $0x118] sm:$0xff]
          %v3450 = vld [vmem:[%s9 + $0x120] sm:$0xff]
          %v3451 = vld [vmem:[%s9 + $0x128] sm:$0xff]
          %v3452 = vld [vmem:[%s9 + $0x130] sm:$0xff]
          %v3453 = vld [vmem:[%s9 + $0x138] sm:$0xff]
          %v3454 = vld [vmem:[%s9 + $0x140] sm:$0xff]
          %v3455 = vld [vmem:[%s9 + $0x148] sm:$0xff]
          %v3456 = vld [vmem:[%s9 + $0x150] sm:$0xff]
          %v3457 = vld [vmem:[%s9 + $0x158] sm:$0xff]
          %v3458 = vld [vmem:[%s9 + $0x160] sm:$0xff]
          %v3459 = vld [vmem:[%s9 + $0x168] sm:$0xff]
          %v3460 = vld [vmem:[%s9 + $0x170] sm:$0xff]
          %v3461 = vld [vmem:[%s9 + $0x178] sm:$0xff]
          %v3462 = vld [vmem:[%s9 + $0x180] sm:$0xff]
          %v3463 = vld [vmem:[%s9 + $0x188] sm:$0xff]
          %v3464 = vld [vmem:[%s9 + $0x190] sm:$0xff]
          %v3465 = vld [vmem:[%s9 + $0x198] sm:$0xff]
          %v3466 = vld [vmem:[%s9 + $0x1a0] sm:$0xff]
          %v3467 = vld [vmem:[%s9 + $0x1a8] sm:$0xff]
          %v3468 = vld [vmem:[%s9 + $0x1b0] sm:$0xff]
          %v3469 = vld [vmem:[%s9 + $0x1b8] sm:$0xff]
          %v3470 = vld [vmem:[%s9 + $0x1c0] sm:$0xff]
          %v3471 = vld [vmem:[%s9 + $0x1c8] sm:$0xff]
          %v3472 = vld [vmem:[%s9 + $0x1d0] sm:$0xff]
          %v3473 = vld [vmem:[%s9 + $0x1d8] sm:$0xff]
          %v3474 = vld [vmem:[%s9 + $0x1e0] sm:$0xff]
          %v3475 = vld [vmem:[%s9 + $0x1e8] sm:$0xff]
          %v3476 = vld [vmem:[%s9 + $0x1f0] sm:$0xff]
          %v3477 = vld [vmem:[%s9 + $0x1f8] sm:$0xff]
          %v3478 = vld [vmem:[%s10] sm:$0x3]
          %v3543 = vunpack.c.l.b16 %v3414
          %v3544 = vunpack.c.h.b16 %v3414
          %v3545 = vunpack.c.l.b16 %v3415
          %v3546 = vunpack.c.h.b16 %v3415
          %v3547 = vunpack.c.l.b16 %v3416
          %v3548 = vunpack.c.h.b16 %v3416
          %v3549 = vunpack.c.l.b16 %v3417
          %v3550 = vunpack.c.h.b16 %v3417
          %v3551 = vunpack.c.l.b16 %v3418
          %v3552 = vunpack.c.h.b16 %v3418
          %v3553 = vunpack.c.l.b16 %v3419
          %v3554 = vunpack.c.h.b16 %v3419
          %v3555 = vunpack.c.l.b16 %v3420
          %v3556 = vunpack.c.h.b16 %v3420
          %v3557 = vunpack.c.l.b16 %v3421
          %v3558 = vunpack.c.h.b16 %v3421
          %v3559 = vunpack.c.l.b16 %v3422
          %v3560 = vunpack.c.h.b16 %v3422
          %v3561 = vunpack.c.l.b16 %v3423
          %v3562 = vunpack.c.h.b16 %v3423
          %v3563 = vunpack.c.l.b16 %v3424
          %v3564 = vunpack.c.h.b16 %v3424
          %v3565 = vunpack.c.l.b16 %v3425
          %v3566 = vunpack.c.h.b16 %v3425
          %v3567 = vunpack.c.l.b16 %v3426
          %v3568 = vunpack.c.h.b16 %v3426
          %v3569 = vunpack.c.l.b16 %v3427
          %v3570 = vunpack.c.h.b16 %v3427
          %v3571 = vunpack.c.l.b16 %v3428
          %v3572 = vunpack.c.h.b16 %v3428
          %v3573 = vunpack.c.l.b16 %v3429
          %v3574 = vunpack.c.h.b16 %v3429
          %v3575 = vunpack.c.l.b16 %v3430
          %v3576 = vunpack.c.h.b16 %v3430
          %v3577 = vunpack.c.l.b16 %v3431
          %v3578 = vunpack.c.h.b16 %v3431
          %v3579 = vunpack.c.l.b16 %v3432
          %v3580 = vunpack.c.h.b16 %v3432
          %v3581 = vunpack.c.l.b16 %v3433
          %v3582 = vunpack.c.h.b16 %v3433
          %v3583 = vunpack.c.l.b16 %v3434
          %v3584 = vunpack.c.h.b16 %v3434
          %v3585 = vunpack.c.l.b16 %v3435
          %v3586 = vunpack.c.h.b16 %v3435
          %v3587 = vunpack.c.l.b16 %v3436
          %v3588 = vunpack.c.h.b16 %v3436
          %v3589 = vunpack.c.l.b16 %v3437
          %v3590 = vunpack.c.h.b16 %v3437
          %v3591 = vunpack.c.l.b16 %v3438
          %v3592 = vunpack.c.h.b16 %v3438
          %v3593 = vunpack.c.l.b16 %v3439
          %v3594 = vunpack.c.h.b16 %v3439
          %v3595 = vunpack.c.l.b16 %v3440
          %v3596 = vunpack.c.h.b16 %v3440
          %v3597 = vunpack.c.l.b16 %v3441
          %v3598 = vunpack.c.h.b16 %v3441
          %v3599 = vunpack.c.l.b16 %v3442
          %v3600 = vunpack.c.h.b16 %v3442
          %v3601 = vunpack.c.l.b16 %v3443
          %v3602 = vunpack.c.h.b16 %v3443
          %v3603 = vunpack.c.l.b16 %v3444
          %v3604 = vunpack.c.h.b16 %v3444
          %v3605 = vunpack.c.l.b16 %v3445
          %v3606 = vunpack.c.h.b16 %v3445
          %v3607 = vunpack.c.l.b16 %v3446
          %v3608 = vunpack.c.h.b16 %v3446
          %v3609 = vunpack.c.l.b16 %v3447
          %v3610 = vunpack.c.h.b16 %v3447
          %v3611 = vunpack.c.l.b16 %v3448
          %v3612 = vunpack.c.h.b16 %v3448
          %v3613 = vunpack.c.l.b16 %v3449
          %v3614 = vunpack.c.h.b16 %v3449
          %v3615 = vunpack.c.l.b16 %v3450
          %v3616 = vunpack.c.h.b16 %v3450
          %v3617 = vunpack.c.l.b16 %v3451
          %v3618 = vunpack.c.h.b16 %v3451
          %v3619 = vunpack.c.l.b16 %v3452
          %v3620 = vunpack.c.h.b16 %v3452
          %v3621 = vunpack.c.l.b16 %v3453
          %v3622 = vunpack.c.h.b16 %v3453
          %v3623 = vunpack.c.l.b16 %v3454
          %v3624 = vunpack.c.h.b16 %v3454
          %v3625 = vunpack.c.l.b16 %v3455
          %v3626 = vunpack.c.h.b16 %v3455
          %v3627 = vunpack.c.l.b16 %v3456
          %v3628 = vunpack.c.h.b16 %v3456
          %v3629 = vunpack.c.l.b16 %v3457
          %v3630 = vunpack.c.h.b16 %v3457
          %v3631 = vunpack.c.l.b16 %v3458
          %v3632 = vunpack.c.h.b16 %v3458
          %v3633 = vunpack.c.l.b16 %v3459
          %v3634 = vunpack.c.h.b16 %v3459
          %v3635 = vunpack.c.l.b16 %v3460
          %v3636 = vunpack.c.h.b16 %v3460
          %v3637 = vunpack.c.l.b16 %v3461
          %v3638 = vunpack.c.h.b16 %v3461
          %v3639 = vunpack.c.l.b16 %v3462
          %v3640 = vunpack.c.h.b16 %v3462
          %v3641 = vunpack.c.l.b16 %v3463
          %v3642 = vunpack.c.h.b16 %v3463
          %v3643 = vunpack.c.l.b16 %v3464
          %v3644 = vunpack.c.h.b16 %v3464
          %v3645 = vunpack.c.l.b16 %v3465
          %v3646 = vunpack.c.h.b16 %v3465
          %v3647 = vunpack.c.l.b16 %v3466
          %v3648 = vunpack.c.h.b16 %v3466
          %v3649 = vunpack.c.l.b16 %v3467
          %v3650 = vunpack.c.h.b16 %v3467
          %v3651 = vunpack.c.l.b16 %v3468
          %v3652 = vunpack.c.h.b16 %v3468
          %v3653 = vunpack.c.l.b16 %v3469
          %v3654 = vunpack.c.h.b16 %v3469
          %v3655 = vunpack.c.l.b16 %v3470
          %v3656 = vunpack.c.h.b16 %v3470
          %v3657 = vunpack.c.l.b16 %v3471
          %v3658 = vunpack.c.h.b16 %v3471
          %v3659 = vunpack.c.l.b16 %v3472
          %v3660 = vunpack.c.h.b16 %v3472
          %v3661 = vunpack.c.l.b16 %v3473
          %v3662 = vunpack.c.h.b16 %v3473
          %v3663 = vunpack.c.l.b16 %v3474
          %v3664 = vunpack.c.h.b16 %v3474
          %v3665 = vunpack.c.l.b16 %v3475
          %v3666 = vunpack.c.h.b16 %v3475
          %v3667 = vunpack.c.l.b16 %v3476
          %v3668 = vunpack.c.h.b16 %v3476
          %v3669 = vunpack.c.l.b16 %v3477
          %v3670 = vunpack.c.h.b16 %v3477
          %v3671 = vpack.c.b16 %v3545, %v3543
          %v3672 = vpack.c.b16 %v3546, %v3544
          %v3673 = vpack.c.b16 %v3549, %v3547
          %v3674 = vpack.c.b16 %v3550, %v3548
          %v3675 = vpack.c.b16 %v3553, %v3551
          %v3676 = vpack.c.b16 %v3554, %v3552
          %v3677 = vpack.c.b16 %v3557, %v3555
          %v3678 = vpack.c.b16 %v3558, %v3556
          %v3679 = vpack.c.b16 %v3561, %v3559
          %v3680 = vpack.c.b16 %v3562, %v3560
          %v3681 = vpack.c.b16 %v3565, %v3563
          %v3682 = vpack.c.b16 %v3566, %v3564
          %v3683 = vpack.c.b16 %v3569, %v3567
          %v3684 = vpack.c.b16 %v3570, %v3568
          %v3685 = vpack.c.b16 %v3573, %v3571
          %v3686 = vpack.c.b16 %v3574, %v3572
          %v3687 = vpack.c.b16 %v3577, %v3575
          %v3688 = vpack.c.b16 %v3578, %v3576
          %v3689 = vpack.c.b16 %v3581, %v3579
          %v3690 = vpack.c.b16 %v3582, %v3580
          %v3691 = vpack.c.b16 %v3585, %v3583
          %v3692 = vpack.c.b16 %v3586, %v3584
          %v3693 = vpack.c.b16 %v3589, %v3587
          %v3694 = vpack.c.b16 %v3590, %v3588
          %v3695 = vpack.c.b16 %v3593, %v3591
          %v3696 = vpack.c.b16 %v3594, %v3592
          %v3697 = vpack.c.b16 %v3597, %v3595
          %v3698 = vpack.c.b16 %v3598, %v3596
          %v3699 = vpack.c.b16 %v3601, %v3599
          %v3700 = vpack.c.b16 %v3602, %v3600
          %v3701 = vpack.c.b16 %v3605, %v3603
          %v3702 = vpack.c.b16 %v3606, %v3604
          %v3703 = vpack.c.b16 %v3609, %v3607
          %v3704 = vpack.c.b16 %v3610, %v3608
          %v3705 = vpack.c.b16 %v3613, %v3611
          %v3706 = vpack.c.b16 %v3614, %v3612
          %v3707 = vpack.c.b16 %v3617, %v3615
          %v3708 = vpack.c.b16 %v3618, %v3616
          %v3709 = vpack.c.b16 %v3621, %v3619
          %v3710 = vpack.c.b16 %v3622, %v3620
          %v3711 = vpack.c.b16 %v3625, %v3623
          %v3712 = vpack.c.b16 %v3626, %v3624
          %v3713 = vpack.c.b16 %v3629, %v3627
          %v3714 = vpack.c.b16 %v3630, %v3628
          %v3715 = vpack.c.b16 %v3633, %v3631
          %v3716 = vpack.c.b16 %v3634, %v3632
          %v3717 = vpack.c.b16 %v3637, %v3635
          %v3718 = vpack.c.b16 %v3638, %v3636
          %v3719 = vpack.c.b16 %v3641, %v3639
          %v3720 = vpack.c.b16 %v3642, %v3640
          %v3721 = vpack.c.b16 %v3645, %v3643
          %v3722 = vpack.c.b16 %v3646, %v3644
          %v3723 = vpack.c.b16 %v3649, %v3647
          %v3724 = vpack.c.b16 %v3650, %v3648
          %v3725 = vpack.c.b16 %v3653, %v3651
          %v3726 = vpack.c.b16 %v3654, %v3652
          %v3727 = vpack.c.b16 %v3657, %v3655
          %v3728 = vpack.c.b16 %v3658, %v3656
          %v3729 = vpack.c.b16 %v3661, %v3659
          %v3730 = vpack.c.b16 %v3662, %v3660
          %v3731 = vpack.c.b16 %v3665, %v3663
          %v3732 = vpack.c.b16 %v3666, %v3664
          %v3733 = vpack.c.b16 %v3669, %v3667
          %v3734 = vpack.c.b16 %v3670, %v3668
          %v3800 = vlaneseq
          %v3801 = vshrl.u32 %v3800, 7
          %v3802 = vsub.s32 0, %v3801
          %v3803 = vrot.slane %v3478, %v3802
          %v3804 = vlaneseq
          %v3805 = vshrl.u32 %v3804, 7
          %v3806 = vsub.s32 1, %v3805
          %v3807 = vrot.slane %v3478, %v3806
          %3810 = vmatprep.subr.bf16.mxu0 %v3672
          %3811 = vmatpush1.bf16.msra.mxu0 %v3671
          %3812 = vmatprep.subr.bf16.mxu0 %v3674
          %3813 = vmatpush1.bf16.msra.mxu0 %v3673
          %3814 = vmatprep.subr.bf16.mxu0 %v3676
          %3815 = vmatpush1.bf16.msra.mxu0 %v3675
          %3816 = vmatprep.subr.bf16.mxu0 %v3678
          %3817 = vmatpush1.bf16.msra.mxu0 %v3677
          %3818 = vmatprep.subr.bf16.mxu0 %v3680
          %3819 = vmatpush1.bf16.msra.mxu0 %v3679
          %3820 = vmatprep.subr.bf16.mxu0 %v3682
          %3821 = vmatpush1.bf16.msra.mxu0 %v3681
          %3822 = vmatprep.subr.bf16.mxu0 %v3684
          %3823 = vmatpush1.bf16.msra.mxu0 %v3683
          %3824 = vmatprep.subr.bf16.mxu0 %v3686
          %3825 = vmatpush1.bf16.msra.mxu0 %v3685
          %3826 = vmatprep.subr.bf16.mxu0 %v3688
          %3827 = vmatpush1.bf16.msra.mxu0 %v3687
          %3828 = vmatprep.subr.bf16.mxu0 %v3690
          %3829 = vmatpush1.bf16.msra.mxu0 %v3689
          %3830 = vmatprep.subr.bf16.mxu0 %v3692
          %3831 = vmatpush1.bf16.msra.mxu0 %v3691
          %3832 = vmatprep.subr.bf16.mxu0 %v3694
          %3833 = vmatpush1.bf16.msra.mxu0 %v3693
          %3834 = vmatprep.subr.bf16.mxu0 %v3696
          %3835 = vmatpush1.bf16.msra.mxu0 %v3695
          %3836 = vmatprep.subr.bf16.mxu0 %v3698
          %3837 = vmatpush1.bf16.msra.mxu0 %v3697
          %3838 = vmatprep.subr.bf16.mxu0 %v3700
          %3839 = vmatpush1.bf16.msra.mxu0 %v3699
          %3840 = vmatprep.subr.bf16.mxu0 %v3702
          %3841 = vmatpush1.bf16.msra.mxu0 %v3701
          %3842 = vmatprep.mubr.bf16.mxu0 %v3411
          %3843 = vmatmul.mubr.bf16.gmra.mrb[0].mxu0 %v3410
          %v3844 = vpop.f32.mrb[0].mxu0
          %v3845 = vadd.f32 %v3803, %v3844
          %v3846 = vpop.f32.mrb[0].mxu0
          %v3847 = vadd.f32 %v3807, %v3846
          %v3848 = vpop.f32.mrb[0].mxu0
          %v3849 = vpop.f32.mrb[0].mxu0
          %3850 = vdwg.mxu0
          %3851 = vmatprep.subr.bf16.mxu0 %v3704
          %3852 = vmatpush1.bf16.msra.mxu0 %v3703
          %3853 = vmatprep.subr.bf16.mxu0 %v3706
          %3854 = vmatpush1.bf16.msra.mxu0 %v3705
          %3855 = vmatprep.subr.bf16.mxu0 %v3708
          %3856 = vmatpush1.bf16.msra.mxu0 %v3707
          %3857 = vmatprep.subr.bf16.mxu0 %v3710
          %3858 = vmatpush1.bf16.msra.mxu0 %v3709
          %3859 = vmatprep.subr.bf16.mxu0 %v3712
          %3860 = vmatpush1.bf16.msra.mxu0 %v3711
          %3861 = vmatprep.subr.bf16.mxu0 %v3714
          %3862 = vmatpush1.bf16.msra.mxu0 %v3713
          %3863 = vmatprep.subr.bf16.mxu0 %v3716
          %3864 = vmatpush1.bf16.msra.mxu0 %v3715
          %3865 = vmatprep.subr.bf16.mxu0 %v3718
          %3866 = vmatpush1.bf16.msra.mxu0 %v3717
          %3867 = vmatprep.subr.bf16.mxu0 %v3720
          %3868 = vmatpush1.bf16.msra.mxu0 %v3719
          %3869 = vmatprep.subr.bf16.mxu0 %v3722
          %3870 = vmatpush1.bf16.msra.mxu0 %v3721
          %3871 = vmatprep.subr.bf16.mxu0 %v3724
          %3872 = vmatpush1.bf16.msra.mxu0 %v3723
          %3873 = vmatprep.subr.bf16.mxu0 %v3726
          %3874 = vmatpush1.bf16.msra.mxu0 %v3725
          %3875 = vmatprep.subr.bf16.mxu0 %v3728
          %3876 = vmatpush1.bf16.msra.mxu0 %v3727
          %3877 = vmatprep.subr.bf16.mxu0 %v3730
          %3878 = vmatpush1.bf16.msra.mxu0 %v3729
          %3879 = vmatprep.subr.bf16.mxu0 %v3732
          %3880 = vmatpush1.bf16.msra.mxu0 %v3731
          %3881 = vmatprep.subr.bf16.mxu0 %v3734
          %3882 = vmatpush1.bf16.msra.mxu0 %v3733
          %3883 = vmatprep.mubr.bf16.mxu0 %v3413
          %3884 = vmatmul.mubr.bf16.gmra.mrb[0].mxu0 %v3412
          %v3885 = vpop.f32.mrb[0].mxu0
          %v3886 = vadd.f32 %v3845, %v3885
          %v3887 = vpop.f32.mrb[0].mxu0
          %v3888 = vadd.f32 %v3847, %v3887
          %v3889 = vpop.f32.mrb[0].mxu0
          %v3890 = vpop.f32.mrb[0].mxu0
          %3891 = vdwg.mxu0
          %v3892 = vmax.f32 %v3886, 0.0
          %v3893 = vmax.f32 %v3888, 0.0
          %v3894 = vpack.c.bf16 %v3892, %v3892
          %v3895 = vpack.c.bf16 %v3893, %v3893
          %v3896 = vld [vmem:[%s11] sm:$0xf]
          %v3897 = vld [vmem:[%s11 + $0x4] sm:$0xf]
          %v3898 = vld [vmem:[%s11 + $0x8] sm:$0xf]
          %v3899 = vld [vmem:[%s11 + $0xc] sm:$0xf]
          %v3900 = vld [vmem:[%s11 + $0x10] sm:$0xf]
          %v3901 = vld [vmem:[%s11 + $0x14] sm:$0xf]
          %v3902 = vld [vmem:[%s11 + $0x18] sm:$0xf]
          %v3903 = vld [vmem:[%s11 + $0x1c] sm:$0xf]
          %v3904 = vld [vmem:[%s11 + $0x20] sm:$0xf]
          %v3905 = vld [vmem:[%s11 + $0x24] sm:$0xf]
          %v3906 = vld [vmem:[%s11 + $0x28] sm:$0xf]
          %v3907 = vld [vmem:[%s11 + $0x2c] sm:$0xf]
          %v3908 = vld [vmem:[%s11 + $0x30] sm:$0xf]
          %v3909 = vld [vmem:[%s11 + $0x34] sm:$0xf]
          %v3910 = vld [vmem:[%s11 + $0x38] sm:$0xf]
          %v3911 = vld [vmem:[%s11 + $0x3c] sm:$0xf]
          %v3912 = vld [vmem:[%s11 + $0x40] sm:$0xf]
          %v3913 = vld [vmem:[%s11 + $0x44] sm:$0xf]
          %v3914 = vld [vmem:[%s11 + $0x48] sm:$0xf]
          %v3915 = vld [vmem:[%s11 + $0x4c] sm:$0xf]
          %v3916 = vld [vmem:[%s11 + $0x50] sm:$0xf]
          %v3917 = vld [vmem:[%s11 + $0x54] sm:$0xf]
          %v3918 = vld [vmem:[%s11 + $0x58] sm:$0xf]
          %v3919 = vld [vmem:[%s11 + $0x5c] sm:$0xf]
          %v3920 = vld [vmem:[%s11 + $0x60] sm:$0xf]
          %v3921 = vld [vmem:[%s11 + $0x64] sm:$0xf]
          %v3922 = vld [vmem:[%s11 + $0x68] sm:$0xf]
          %v3923 = vld [vmem:[%s11 + $0x6c] sm:$0xf]
          %v3924 = vld [vmem:[%s11 + $0x70] sm:$0xf]
          %v3925 = vld [vmem:[%s11 + $0x74] sm:$0xf]
          %v3926 = vld [vmem:[%s11 + $0x78] sm:$0xf]
          %v3927 = vld [vmem:[%s11 + $0x7c] sm:$0xf]
          %v3928 = vld [vmem:[%s12] sm:$0x1]
          %v3961 = vunpack.c.l.b16 %v3896
          %v3962 = vunpack.c.l.b16 %v3897
          %v3963 = vunpack.c.l.b16 %v3898
          %v3964 = vunpack.c.l.b16 %v3899
          %v3965 = vunpack.c.l.b16 %v3900
          %v3966 = vunpack.c.l.b16 %v3901
          %v3967 = vunpack.c.l.b16 %v3902
          %v3968 = vunpack.c.l.b16 %v3903
          %v3969 = vunpack.c.l.b16 %v3904
          %v3970 = vunpack.c.l.b16 %v3905
          %v3971 = vunpack.c.l.b16 %v3906
          %v3972 = vunpack.c.l.b16 %v3907
          %v3973 = vunpack.c.l.b16 %v3908
          %v3974 = vunpack.c.l.b16 %v3909
          %v3975 = vunpack.c.l.b16 %v3910
          %v3976 = vunpack.c.l.b16 %v3911
          %v3977 = vunpack.c.l.b16 %v3912
          %v3978 = vunpack.c.l.b16 %v3913
          %v3979 = vunpack.c.l.b16 %v3914
          %v3980 = vunpack.c.l.b16 %v3915
          %v3981 = vunpack.c.l.b16 %v3916
          %v3982 = vunpack.c.l.b16 %v3917
          %v3983 = vunpack.c.l.b16 %v3918
          %v3984 = vunpack.c.l.b16 %v3919
          %v3985 = vunpack.c.l.b16 %v3920
          %v3986 = vunpack.c.l.b16 %v3921
          %v3987 = vunpack.c.l.b16 %v3922
          %v3988 = vunpack.c.l.b16 %v3923
          %v3989 = vunpack.c.l.b16 %v3924
          %v3990 = vunpack.c.l.b16 %v3925
          %v3991 = vunpack.c.l.b16 %v3926
          %v3992 = vunpack.c.l.b16 %v3927
          %v3993 = vpack.c.b16 %v3962, %v3961
          %v3994 = vpack.c.b16 %v3964, %v3963
          %v3995 = vpack.c.b16 %v3966, %v3965
          %v3996 = vpack.c.b16 %v3968, %v3967
          %v3997 = vpack.c.b16 %v3970, %v3969
          %v3998 = vpack.c.b16 %v3972, %v3971
          %v3999 = vpack.c.b16 %v3974, %v3973
          %v4000 = vpack.c.b16 %v3976, %v3975
          %v4001 = vpack.c.b16 %v3978, %v3977
          %v4002 = vpack.c.b16 %v3980, %v3979
          %v4003 = vpack.c.b16 %v3982, %v3981
          %v4004 = vpack.c.b16 %v3984, %v3983
          %v4005 = vpack.c.b16 %v3986, %v3985
          %v4006 = vpack.c.b16 %v3988, %v3987
          %v4007 = vpack.c.b16 %v3990, %v3989
          %v4008 = vpack.c.b16 %v3992, %v3991
          %4025 = vmatprep.subr.bf16.mxu0 0
          %4026 = vmatpush1.bf16.msra.mxu0 %v3993
          %4027 = vmatprep.subr.bf16.mxu0 0
          %4028 = vmatpush1.bf16.msra.mxu0 %v3994
          %4029 = vmatprep.subr.bf16.mxu0 0
          %4030 = vmatpush1.bf16.msra.mxu0 %v3995
          %4031 = vmatprep.subr.bf16.mxu0 0
          %4032 = vmatpush1.bf16.msra.mxu0 %v3996
          %4033 = vmatprep.subr.bf16.mxu0 0
          %4034 = vmatpush1.bf16.msra.mxu0 %v3997
          %4035 = vmatprep.subr.bf16.mxu0 0
          %4036 = vmatpush1.bf16.msra.mxu0 %v3998
          %4037 = vmatprep.subr.bf16.mxu0 0
          %4038 = vmatpush1.bf16.msra.mxu0 %v3999
          %4039 = vmatprep.subr.bf16.mxu0 0
          %4040 = vmatpush1.bf16.msra.mxu0 %v4000
          %4041 = vmatprep.subr.bf16.mxu0 0
          %4042 = vmatpush1.bf16.msra.mxu0 %v4001
          %4043 = vmatprep.subr.bf16.mxu0 0
          %4044 = vmatpush1.bf16.msra.mxu0 %v4002
          %4045 = vmatprep.subr.bf16.mxu0 0
          %4046 = vmatpush1.bf16.msra.mxu0 %v4003
          %4047 = vmatprep.subr.bf16.mxu0 0
          %4048 = vmatpush1.bf16.msra.mxu0 %v4004
          %4049 = vmatprep.subr.bf16.mxu0 0
          %4050 = vmatpush1.bf16.msra.mxu0 %v4005
          %4051 = vmatprep.subr.bf16.mxu0 0
          %4052 = vmatpush1.bf16.msra.mxu0 %v4006
          %4053 = vmatprep.subr.bf16.mxu0 0
          %4054 = vmatpush1.bf16.msra.mxu0 %v4007
          %4055 = vmatprep.subr.bf16.mxu0 0
          %4056 = vmatpush1.bf16.msra.mxu0 %v4008
          %4057 = vmatprep.mubr.bf16.mxu0 %v3895
          %4058 = vmatmul.mubr.bf16.gmra.mrb[0].mxu0 %v3894
          %v4059 = vpop.f32.mrb[0].mxu0
          %v4060 = vadd.f32 %v3928, %v4059
          %v4061 = vpop.f32.mrb[0].mxu0
          %v4062 = vpop.f32.mrb[0].mxu0
          %v4063 = vpop.f32.mrb[0].mxu0
          %4064 = vdwg.mxu0
          %v4065 = vlaneseq
          %v4066 = vand.u32 %v4065, 127
          %vm4067 = vcmp.lt.s32.totalorder %v4066, 10
          %v4068 = vsel %vm4067, %v4060, -1e+30
          %vm4069 = vcmask 1040384
          %v4070 = vsel %vm4069, %v4068, -inf
          %4071 = vmax.xlane.f32.xlu0 %v4070
          %v4072 = vpop.xlane.xlu0 %4071
          %v4073 = vsub.f32 %v4068, %v4072
          %v4074 = vmul.f32 %v4073, 1.442695
          %v4075 = vpow.pop %v4074
          %v4076 = vsel %vm4067, %v4075, 0.0
          %v4077 = vsel %vm4069, %v4076, 0.0
          %4078 = vadd.xlane.f32.xlu0 %v4077
          %v4079 = vpop.xlane.xlu0 %4078
          %v4080 = vlog2.pop %v4079
          %v4081 = vmul.f32 %v4080, 0.6931472
          %v4082 = vsub.f32 %v4073, %v4081
          %4083 = vst [vmem:[%s450] sm:$0x1] %v4082
        $region84: #{_lambda_.1} parent=71 // pred_fallthru
          _
        %s4084 = sand.u32 %s327, 1
        %s4085 = scalar_lea.sflag [#allocation4], %s4084
        %s4086 = sand.u32 %s327, 1
        %s4087 = scalar_lea.vmem [#allocation3], %s4086
        // Predicated region
        $region85: #{_lambda_.1} parent=71 // pred_check
          %p4088 = pneg %p337
        $region86: #{_lambda_.1} parent=71 // pred_check_branch
          %4090 = sbr.rel (%p4088) target = $region88
        $region87: #{_lambda_.1} parent=71 // pred_region
          %s4092 = ssub.s32 16, 16
          %4093 = vsyncadd %s4085, %s4092
          %s4094 = smul.addr %s31, 16
          %s4095 = scalar_lea.hbm %s13, %s4094
          %s4097 = sshll.u32 %s4087, 4
          %s4098 = int_to_ptr.vmem [resolvable:$true] %s4097
          %4100 = dma.vmem_to_hbm [thread:$0]  %s4098, 16, %s4095, %s4085
        $region88: #{_lambda_.1} parent=71 // pred_fallthru
          _
      $region72: #{_lambda_.1} parent=5 // pred_fallthru
        _
      %p4101 = scmp.le.s32.totalorder 2, %s22
      // Predicated region
      $region89: #{_lambda_.1} parent=5 // pred_check
        %p4102 = pneg %p4101
      $region90: #{_lambda_.1} parent=5 // pred_check_branch
        %4104 = sbr.rel (%p4102) target = $region92
      $region91: #{_lambda_.1} parent=5 // pred_region
        %s4105 = ssub.s32 %s22, 2
        // Predicated region
        $region93: #{_lambda_.1} parent=91 // pred_check
          %p4106 = pneg %p343
        $region94: #{_lambda_.1} parent=91 // pred_check_branch
          %4108 = sbr.rel (%p4106) target = $region96
        $region95: #{_lambda_.1} parent=91 // pred_region
          %s4109 = sand.u32 %s328, 1
          %s4110 = scalar_lea.sflag [#allocation4], %s4109
          %s4111 = sand.u32 %s328, 1
          %s4112 = scalar_lea.vmem [#allocation3], %s4111
          %4113 = dma.done %s4110, 16
        $region96: #{_lambda_.1} parent=91 // pred_fallthru
          _
      $region92: #{_lambda_.1} parent=5 // pred_fallthru
        _
    $region6: #{_lambda_.1} parent=1 // loop_footer
      %s26 = sadd.s32 1, %s22
    $region7: #{_lambda_.1} parent=1 // loop_footer_branch
      %21 = sbr.rel target = $region3
    $region8: #{_lambda_.1} parent=1 // loop_exit
      _
    %4114 = vsyncpa [#allocation4], 1
    %s4115 = scalar_lea.sflag [#allocation4], 1
    %4116 = vsyncpa %s4115, 1

</llo_original>
